<compile_context>
chip_gen: v5e
topology: v5e:2x2
jax: 0.10.0
libtpu: 0.0.40
codegen_flags: <defaults>
</compile_context>

<pallas_src>
import math

import numpy as np
import jax
import jax.numpy as jnp
from jax.experimental import pallas as pl
from jax.experimental.pallas import tpu as pltpu


# Static geometry implied by the PyTorch module (fc1.in_features == 1024).
_IN_H = _IN_W = 28        # input spatial size
_C1H = _C1W = 24          # conv1 output spatial (28 - 5 + 1)
_P1H = _P1W = 12          # after 2x2/stride-2 pool
_C2H = _C2W = 8           # conv2 output spatial (12 - 5 + 1)
_P2H = _P2W = 4           # after 2x2/stride-2 pool
_K = 5                    # conv kernel size
_C1 = 32                  # conv1 output channels
_C2 = 64                  # conv2 output channels

_N1 = _P1H * _P1W         # 144 pooled-1 positions per image
_N2 = _P2H * _P2W         # 16  pooled-2 positions per image
_PAD1 = 200               # >= 144 + 4*12 + 4 (max conv2 tap shift), mult of 8
_PAD2 = 160               # >= 144 + 13     (max pool2 shift),       mult of 8


# ---------------------------------------------------------------------------
# Fused kernel: conv1+relu -> pool1 -> bn1 -> conv2+relu -> pool2 -> bn2 -> fc1
# One grid step == one image.
# ---------------------------------------------------------------------------
def _fused_cnn_kernel(p1_ref, w1_ref, b1_ref, s1_ref, t1_ref,
                      w2_ref, b2_ref, s2_ref, t2_ref,
                      sel_ref, fcw_ref, fcb_ref,
                      o_ref,
                      a1_ref, y2_ref, a2_ref):
    f32 = jnp.float32

    # ---- conv1 + ReLU: single (576,25)@(25,32) MXU matmul ------------------
    y1 = jnp.dot(p1_ref[0], w1_ref[...], preferred_element_type=f32)
    y1 = jnp.maximum(y1 + b1_ref[...], 0.0)                       # (576, 32)

    # ---- 2x2 max-pool (rows are parity-grouped blocks of 144) + bn1 --------
    z1 = jnp.maximum(jnp.maximum(y1[0:_N1], y1[_N1:2 * _N1]),
                     jnp.maximum(y1[2 * _N1:3 * _N1], y1[3 * _N1:4 * _N1]))
    a1_ref[0:_N1, :] = z1 * s1_ref[...] + t1_ref[...]             # (144, 32)
    a1_ref[_N1:_PAD1, :] = jnp.zeros((_PAD1 - _N1, _C1), f32)     # zero pad

    # ---- conv2 + ReLU: implicit GEMM, 25 row-shifted matmuls ---------------
    # output row r = oi*12 + oj; tap (dh,dw) reads row r + dh*12 + dw.
    acc = jnp.zeros((_N1, _C2), f32)
    for dh in range(_K):
        for dw in range(_K):
            off = dh * _P1W + dw
            acc = acc + jnp.dot(a1_ref[pl.ds(off, _N1), :],
                                w2_ref[dh * _K + dw],
                                preferred_element_type=f32)
    y2_ref[0:_N1, :] = jnp.maximum(acc + b2_ref[...], 0.0)        # valid: oi,oj<8
    y2_ref[_N1:_PAD2, :] = jnp.zeros((_PAD2 - _N1, _C2), f32)     # zero pad

    # ---- 2x2 max-pool: 4 shifted views + 0/1 selection matmul, then bn2 ----
    m4 = jnp.maximum(
        jnp.maximum(y2_ref[pl.ds(0, _N1), :], y2_ref[pl.ds(1, _N1), :]),
        jnp.maximum(y2_ref[pl.ds(_P1W, _N1), :], y2_ref[pl.ds(_P1W + 1, _N1), :]))
    pooled = jnp.dot(sel_ref[...], m4, preferred_element_type=f32)  # (16, 64)
    a2_ref[...] = pooled * s2_ref[...] + t2_ref[...]

    # ---- fc1: NCHW flatten order folded into fcw's row permutation ---------
    out = fcb_ref[...]                                            # (1, out_dim)
    for p in range(_N2):
        out = out + jnp.dot(a2_ref[pl.ds(p, 1), :], fcw_ref[p],
                            preferred_element_type=f32)
    o_ref[0] = out.astype(o_ref.dtype)


# ---------------------------------------------------------------------------
# Wrapper-side helpers (tiny, trace-time / constant-folded under jit).
# ---------------------------------------------------------------------------
def _build_conv1_patches(x):
    """(n,28,28) -> (n, 576, 25) conv1 patch matrix, pooling-parity-grouped.

    Per-image row ((ph*2+pw)*144 + io*12 + jo) holds the 5x5 patch for conv1
    output pixel (2*io+ph, 2*jo+pw); the 2x2/stride-2 max-pool in the kernel
    is then a max over the 4 contiguous 144-row blocks.
    """
    n = x.shape[0]
    cols = [x[:, dh:dh + _C1H, dw:dw + _C1W]                 # (n, 24, 24)
            for dh in range(_K) for dw in range(_K)]
    p = jnp.stack(cols, axis=-1)                             # (n, 24, 24, 25)
    p = p.reshape(n, _P1H, 2, _P1W, 2, _K * _K)
    p = jnp.transpose(p, (0, 2, 4, 1, 3, 5))                 # (n,ph,pw,io,jo,25)
    return p.reshape(n, 4 * _N1, _K * _K)


def _pool2_selection():
    """(16, 144) 0/1 matrix: picks row 2*io*12 + 2*jo of the conv2 map."""
    sel = np.zeros((_N2, _N1), np.float32)
    for io in range(_P2H):
        for jo in range(_P2W):
            sel[io * _P2W + jo, (2 * io) * _P1W + 2 * jo] = 1.0
    return jnp.asarray(sel)


@jax.jit
def image_model_forward(x_nchw, params):
    n, cin, h, w = x_nchw.shape
    assert (cin, h, w) == (1, _IN_H, _IN_W), "MNIST_Image_CNN expects 1x28x28"
    out_dim = params["fc1_b"].shape[0]

    p1 = _build_conv1_patches(x_nchw.reshape(n, _IN_H, _IN_W))
    sel = _pool2_selection()

    const2 = lambda b: (0, 0)
    const3 = lambda b: (0, 0, 0)

    out = pl.pallas_call(
        _fused_cnn_kernel,
        out_shape=jax.ShapeDtypeStruct((n, 1, out_dim), jnp.float32),
        grid_spec=pltpu.PrefetchScalarGridSpec(
            num_scalar_prefetch=0,
            grid=(n,),
            in_specs=[
                pl.BlockSpec((1, 4 * _N1, _K * _K), lambda b: (b, 0, 0)),  # patches
                pl.BlockSpec((_K * _K, _C1), const2),            # conv1 weight
                pl.BlockSpec((1, _C1), const2),                  # conv1 bias
                pl.BlockSpec((1, _C1), const2),                  # bn1 scale
                pl.BlockSpec((1, _C1), const2),                  # bn1 shift
                pl.BlockSpec((_K * _K, _C1, _C2), const3),       # conv2 weight
                pl.BlockSpec((1, _C2), const2),                  # conv2 bias
                pl.BlockSpec((1, _C2), const2),                  # bn2 scale
                pl.BlockSpec((1, _C2), const2),                  # bn2 shift
                pl.BlockSpec((_N2, _N1), const2),                # pool2 selection
                pl.BlockSpec((_N2, _C2, out_dim), const3),       # fc1 weight (perm)
                pl.BlockSpec((1, out_dim), const2),              # fc1 bias
            ],
            out_specs=pl.BlockSpec((1, 1, out_dim), lambda b: (b, 0, 0)),
            scratch_shapes=[
                pltpu.VMEM((_PAD1, _C1), jnp.float32),   # padded pooled-1 map
                pltpu.VMEM((_PAD2, _C2), jnp.float32),   # padded conv2 output
                pltpu.VMEM((_N2, _C2), jnp.float32),     # pooled-2 activations
            ],
        ),
        compiler_params=pltpu.CompilerParams(
            dimension_semantics=("parallel",)),
    )(
        p1,
        params["conv1_w"], params["conv1_b"].reshape(1, _C1),
        params["bn1_scale"].reshape(1, _C1), params["bn1_shift"].reshape(1, _C1),
        params["conv2_w"], params["conv2_b"].reshape(1, _C2),
        params["bn2_scale"].reshape(1, _C2), params["bn2_shift"].reshape(1, _C2),
        sel,
        params["fc1_w"], params["fc1_b"].reshape(1, out_dim),
    )
    return out.reshape(n, out_dim)


# ---------------------------------------------------------------------------
# Parameters: PyTorch-default init, converted once to the kernel's layouts.
# Loading real PyTorch weights requires the same conversions:
#   conv W (cout,cin,kh,kw) -> transpose(2,3,1,0) -> reshape(kh*kw[, cin], cout)
#   fc1  W (out, 1024)      -> .T -> reshape(64, 16, out) -> transpose(1, 0, 2)
# ---------------------------------------------------------------------------
def init_params(output_dim, key):
    k1, k2, k3, k4, k5, k6 = jax.random.split(key, 6)

    def uniform(k, shape, fan_in):
        bound = 1.0 / math.sqrt(fan_in)
        return jax.random.uniform(k, shape, jnp.float32, -bound, bound)

    # conv1: PyTorch (32, 1, 5, 5) -> (25, 32)
    w1_pt = uniform(k1, (_C1, 1, _K, _K), 1 * _K * _K)
    b1 = uniform(k2, (_C1,), 1 * _K * _K)
    conv1_w = jnp.transpose(w1_pt, (2, 3, 1, 0)).reshape(_K * _K, _C1)

    # conv2: PyTorch (64, 32, 5, 5) -> (25, 32, 64)
    w2_pt = uniform(k3, (_C2, _C1, _K, _K), _C1 * _K * _K)
    b2 = uniform(k4, (_C2,), _C1 * _K * _K)
    conv2_w = jnp.transpose(w2_pt, (2, 3, 1, 0)).reshape(_K * _K, _C1, _C2)

    # fc1: PyTorch (output_dim, 1024) with flatten index f = c*16 + p.
    # Permute rows to (p, c) so the kernel consumes pooled (p, c) activations
    # directly (no runtime NHWC->NCHW transpose).
    wf_pt = uniform(k5, (output_dim, _C2 * _N2), _C2 * _N2)
    bf = uniform(k6, (output_dim,), _C2 * _N2)
    fc1_w = jnp.transpose(wf_pt).reshape(_C2, _N2, output_dim)
    fc1_w = jnp.transpose(fc1_w, (1, 0, 2))                  # (16, 64, output_dim)

    # BatchNorm (inference): fold running stats (mean=0, var=1, gamma=1,
    # beta=0) into per-channel scale/shift.
    eps = 1e-5
    def bn(c):
        gamma = jnp.ones((c,), jnp.float32)
        beta = jnp.zeros((c,), jnp.float32)
        mean = jnp.zeros((c,), jnp.float32)
        var = jnp.ones((c,), jnp.float32)
        scale = gamma * jax.lax.rsqrt(var + eps)
        return scale, beta - mean * scale

    bn1_scale, bn1_shift = bn(_C1)
    bn2_scale, bn2_shift = bn(_C2)

    params = dict(conv1_w=conv1_w, conv1_b=b1,
                  bn1_scale=bn1_scale, bn1_shift=bn1_shift,
                  conv2_w=conv2_w, conv2_b=b2,
                  bn2_scale=bn2_scale, bn2_shift=bn2_shift,
                  fc1_w=fc1_w, fc1_b=bf)
    # PyTorch-layout copies, used only for the pure-JAX reference check.
    pt = dict(w1=w1_pt, b1=b1, w2=w2_pt, b2=b2, wf=wf_pt, bf=bf)
    return params, pt


# ---------------------------------------------------------------------------
# Pure-JAX reference (PyTorch-layout weights) for a correctness check.
# ---------------------------------------------------------------------------
def _reference_forward(x, pt, params):
    def conv(h, w, b):
        y = jax.lax.conv_general_dilated(
            h, w, (1, 1), "VALID", dimension_numbers=("NCHW", "OIHW", "NCHW"))
        return y + b.reshape(1, -1, 1, 1)

    def pool(h):
        return jax.lax.reduce_window(h, -jnp.inf, jax.lax.max,
                                     (1, 1, 2, 2), (1, 1, 2, 2), "VALID")

    def bn(h, scale, shift):
        return h * scale.reshape(1, -1, 1, 1) + shift.reshape(1, -1, 1, 1)

    h = bn(pool(jax.nn.relu(conv(x, pt["w1"], pt["b1"]))),
           params["bn1_scale"], params["bn1_shift"])
    h = bn(pool(jax.nn.relu(conv(h, pt["w2"], pt["b2"]))),
           params["bn2_scale"], params["bn2_shift"])
    h = h.reshape(x.shape[0], -1)
    return h @ pt["wf"].T + pt["bf"]


if __name__ == "__main__":
    key = jax.random.PRNGKey(0)
    pkey, xkey = jax.random.split(key)

    batch, output_dim = 2, 64
    # 28x28x1 MNIST images are implied by fc1's in_features = 1024 (= 64*4*4).
    x = jax.random.normal(xkey, (batch, 1, _IN_H, _IN_W), jnp.float32)
    params, pt = init_params(output_dim, pkey)

    out = jax.block_until_ready(image_model_forward(x, params))

    assert out.shape == (batch, output_dim), out.shape
    assert bool(jnp.all(jnp.isfinite(out)))

    ref = _reference_forward(x, pt, params)
    assert bool(jnp.allclose(out, ref, rtol=2e-3, atol=2e-3)), (
        float(jnp.max(jnp.abs(out - ref))))

    print("KERNEL_OK")
</pallas_src>

<mosaic_0001>
module attributes {stable_mosaic.version = 11 : i64} {
  func.func @_fused_cnn_kernel(%arg0: i32, %arg1: memref<1x576x25xf32, #tpu.memory_space<vmem>>, %arg2: memref<25x32xf32, #tpu.memory_space<vmem>>, %arg3: memref<1x32xf32, #tpu.memory_space<vmem>>, %arg4: memref<1x32xf32, #tpu.memory_space<vmem>>, %arg5: memref<1x32xf32, #tpu.memory_space<vmem>>, %arg6: memref<25x32x64xf32, #tpu.memory_space<vmem>>, %arg7: memref<1x64xf32, #tpu.memory_space<vmem>>, %arg8: memref<1x64xf32, #tpu.memory_space<vmem>>, %arg9: memref<1x64xf32, #tpu.memory_space<vmem>>, %arg10: memref<16x144xf32, #tpu.memory_space<vmem>>, %arg11: memref<16x64x64xf32, #tpu.memory_space<vmem>>, %arg12: memref<1x64xf32, #tpu.memory_space<vmem>>, %arg13: memref<1x1x64xf32, #tpu.memory_space<vmem>>, %arg14: memref<200x32xf32, #tpu.memory_space<vmem>>, %arg15: memref<160x64xf32, #tpu.memory_space<vmem>>, %arg16: memref<16x64xf32, #tpu.memory_space<vmem>>) attributes {dimension_semantics = [#tpu.dimension_semantics<parallel>], iteration_bounds = array<i64: 2>, scalar_prefetch = 0 : i64, scratch_operands = 3 : i64, tpu.core_type = #tpu.core_type<tc>, window_params = [{transform_indices = @transform_0, window_bounds = array<i64: 1, 576, 25>}, {pipeline_mode = #tpu.pipeline_mode<synchronous>, transform_indices = @transform_1, window_bounds = array<i64: 25, 32>}, {pipeline_mode = #tpu.pipeline_mode<synchronous>, transform_indices = @transform_2, window_bounds = array<i64: 1, 32>}, {pipeline_mode = #tpu.pipeline_mode<synchronous>, transform_indices = @transform_3, window_bounds = array<i64: 1, 32>}, {pipeline_mode = #tpu.pipeline_mode<synchronous>, transform_indices = @transform_4, window_bounds = array<i64: 1, 32>}, {pipeline_mode = #tpu.pipeline_mode<synchronous>, transform_indices = @transform_5, window_bounds = array<i64: 25, 32, 64>}, {pipeline_mode = #tpu.pipeline_mode<synchronous>, transform_indices = @transform_6, window_bounds = array<i64: 1, 64>}, {pipeline_mode = #tpu.pipeline_mode<synchronous>, transform_indices = @transform_7, window_bounds = array<i64: 1, 64>}, {pipeline_mode = #tpu.pipeline_mode<synchronous>, transform_indices = @transform_8, window_bounds = array<i64: 1, 64>}, {pipeline_mode = #tpu.pipeline_mode<synchronous>, transform_indices = @transform_9, window_bounds = array<i64: 16, 144>}, {pipeline_mode = #tpu.pipeline_mode<synchronous>, transform_indices = @transform_10, window_bounds = array<i64: 16, 64, 64>}, {pipeline_mode = #tpu.pipeline_mode<synchronous>, transform_indices = @transform_11, window_bounds = array<i64: 1, 64>}, {transform_indices = @transform_12, window_bounds = array<i64: 1, 1, 64>}]} {
    %c0 = arith.constant 0 : index
    %c0_0 = arith.constant 0 : index
    %c0_1 = arith.constant 0 : index
    %0 = vector.load %arg1[%c0, %c0_0, %c0_1] : memref<1x576x25xf32, #tpu.memory_space<vmem>>, vector<1x576x25xf32>
    %1 = vector.shape_cast %0 : vector<1x576x25xf32> to vector<576x25xf32>
    %c0_2 = arith.constant 0 : index
    %c0_3 = arith.constant 0 : index
    %2 = vector.load %arg2[%c0_2, %c0_3] : memref<25x32xf32, #tpu.memory_space<vmem>>, vector<25x32xf32>
    %cst = arith.constant dense<0.000000e+00> : vector<576x32xf32>
    %3 = tpu.matmul %1, %2, %cst {dimension_numbers = #tpu.dot_dimension_numbers<[1], [0], [0], [1], [0, 0, 1, 1], [], []>} : vector<576x25xf32>, vector<25x32xf32>, vector<576x32xf32> -> vector<576x32xf32>
    %c0_4 = arith.constant 0 : index
    %c0_5 = arith.constant 0 : index
    %4 = vector.load %arg3[%c0_4, %c0_5] : memref<1x32xf32, #tpu.memory_space<vmem>>, vector<1x32xf32>
    %5 = vector.broadcast %4 : vector<1x32xf32> to vector<576x32xf32>
    %6 = arith.addf %3, %5 : vector<576x32xf32>
    %cst_6 = arith.constant 0.000000e+00 : f32
    %7 = vector.broadcast %cst_6 : f32 to vector<576x32xf32>
    %8 = arith.maximumf %6, %7 : vector<576x32xf32>
    %9 = vector.extract_strided_slice %8 {offsets = [0, 0], sizes = [144, 32], strides = [1, 1]} : vector<576x32xf32> to vector<144x32xf32>
    %10 = vector.extract_strided_slice %8 {offsets = [144, 0], sizes = [144, 32], strides = [1, 1]} : vector<576x32xf32> to vector<144x32xf32>
    %11 = arith.maximumf %9, %10 : vector<144x32xf32>
    %12 = vector.extract_strided_slice %8 {offsets = [288, 0], sizes = [144, 32], strides = [1, 1]} : vector<576x32xf32> to vector<144x32xf32>
    %13 = vector.extract_strided_slice %8 {offsets = [432, 0], sizes = [144, 32], strides = [1, 1]} : vector<576x32xf32> to vector<144x32xf32>
    %14 = arith.maximumf %12, %13 : vector<144x32xf32>
    %15 = arith.maximumf %11, %14 : vector<144x32xf32>
    %c0_7 = arith.constant 0 : index
    %c0_8 = arith.constant 0 : index
    %16 = vector.load %arg4[%c0_7, %c0_8] : memref<1x32xf32, #tpu.memory_space<vmem>>, vector<1x32xf32>
    %17 = vector.broadcast %16 : vector<1x32xf32> to vector<144x32xf32>
    %18 = arith.mulf %15, %17 : vector<144x32xf32>
    %c0_9 = arith.constant 0 : index
    %c0_10 = arith.constant 0 : index
    %19 = vector.load %arg5[%c0_9, %c0_10] : memref<1x32xf32, #tpu.memory_space<vmem>>, vector<1x32xf32>
    %20 = vector.broadcast %19 : vector<1x32xf32> to vector<144x32xf32>
    %21 = arith.addf %18, %20 : vector<144x32xf32>
    %c0_11 = arith.constant 0 : index
    %c0_12 = arith.constant 0 : index
    %22 = vector.load %arg14[%c0_11, %c0_12] : memref<200x32xf32, #tpu.memory_space<vmem>>, vector<144x32xf32>
    tpu.vector_store %arg14[%c0_11, %c0_12], %21 {strides = array<i32>} : memref<200x32xf32, #tpu.memory_space<vmem>>, vector<144x32xf32>,
    %cst_13 = arith.constant 0.000000e+00 : f32
    %23 = vector.broadcast %cst_13 : f32 to vector<56x32xf32>
    %c144 = arith.constant 144 : index
    %c0_14 = arith.constant 0 : index
    %24 = vector.load %arg14[%c144, %c0_14] : memref<200x32xf32, #tpu.memory_space<vmem>>, vector<56x32xf32>
    tpu.vector_store %arg14[%c144, %c0_14], %23 {strides = array<i32>} : memref<200x32xf32, #tpu.memory_space<vmem>>, vector<56x32xf32>,
    %cst_15 = arith.constant 0.000000e+00 : f32
    %25 = vector.broadcast %cst_15 : f32 to vector<144x64xf32>
    %c0_16 = arith.constant 0 : index
    %c0_17 = arith.constant 0 : index
    %26 = vector.load %arg14[%c0_16, %c0_17] : memref<200x32xf32, #tpu.memory_space<vmem>>, vector<144x32xf32>
    %c0_18 = arith.constant 0 : index
    %c0_19 = arith.constant 0 : index
    %c0_20 = arith.constant 0 : index
    %27 = vector.load %arg6[%c0_18, %c0_19, %c0_20] : memref<25x32x64xf32, #tpu.memory_space<vmem>>, vector<1x32x64xf32>
    %28 = vector.shape_cast %27 : vector<1x32x64xf32> to vector<32x64xf32>
    %cst_21 = arith.constant dense<0.000000e+00> : vector<144x64xf32>
    %29 = tpu.matmul %26, %28, %cst_21 {dimension_numbers = #tpu.dot_dimension_numbers<[1], [0], [0], [1], [0, 0, 1, 1], [], []>} : vector<144x32xf32>, vector<32x64xf32>, vector<144x64xf32> -> vector<144x64xf32>
    %30 = arith.addf %25, %29 : vector<144x64xf32>
    %c1 = arith.constant 1 : index
    %c0_22 = arith.constant 0 : index
    %31 = vector.load %arg14[%c1, %c0_22] : memref<200x32xf32, #tpu.memory_space<vmem>>, vector<144x32xf32>
    %c1_23 = arith.constant 1 : index
    %c0_24 = arith.constant 0 : index
    %c0_25 = arith.constant 0 : index
    %32 = vector.load %arg6[%c1_23, %c0_24, %c0_25] : memref<25x32x64xf32, #tpu.memory_space<vmem>>, vector<1x32x64xf32>
    %33 = vector.shape_cast %32 : vector<1x32x64xf32> to vector<32x64xf32>
    %cst_26 = arith.constant dense<0.000000e+00> : vector<144x64xf32>
    %34 = tpu.matmul %31, %33, %cst_26 {dimension_numbers = #tpu.dot_dimension_numbers<[1], [0], [0], [1], [0, 0, 1, 1], [], []>} : vector<144x32xf32>, vector<32x64xf32>, vector<144x64xf32> -> vector<144x64xf32>
    %35 = arith.addf %30, %34 : vector<144x64xf32>
    %c2 = arith.constant 2 : index
    %c0_27 = arith.constant 0 : index
    %36 = vector.load %arg14[%c2, %c0_27] : memref<200x32xf32, #tpu.memory_space<vmem>>, vector<144x32xf32>
    %c2_28 = arith.constant 2 : index
    %c0_29 = arith.constant 0 : index
    %c0_30 = arith.constant 0 : index
    %37 = vector.load %arg6[%c2_28, %c0_29, %c0_30] : memref<25x32x64xf32, #tpu.memory_space<vmem>>, vector<1x32x64xf32>
    %38 = vector.shape_cast %37 : vector<1x32x64xf32> to vector<32x64xf32>
    %cst_31 = arith.constant dense<0.000000e+00> : vector<144x64xf32>
    %39 = tpu.matmul %36, %38, %cst_31 {dimension_numbers = #tpu.dot_dimension_numbers<[1], [0], [0], [1], [0, 0, 1, 1], [], []>} : vector<144x32xf32>, vector<32x64xf32>, vector<144x64xf32> -> vector<144x64xf32>
    %40 = arith.addf %35, %39 : vector<144x64xf32>
    %c3 = arith.constant 3 : index
    %c0_32 = arith.constant 0 : index
    %41 = vector.load %arg14[%c3, %c0_32] : memref<200x32xf32, #tpu.memory_space<vmem>>, vector<144x32xf32>
    %c3_33 = arith.constant 3 : index
    %c0_34 = arith.constant 0 : index
    %c0_35 = arith.constant 0 : index
    %42 = vector.load %arg6[%c3_33, %c0_34, %c0_35] : memref<25x32x64xf32, #tpu.memory_space<vmem>>, vector<1x32x64xf32>
    %43 = vector.shape_cast %42 : vector<1x32x64xf32> to vector<32x64xf32>
    %cst_36 = arith.constant dense<0.000000e+00> : vector<144x64xf32>
    %44 = tpu.matmul %41, %43, %cst_36 {dimension_numbers = #tpu.dot_dimension_numbers<[1], [0], [0], [1], [0, 0, 1, 1], [], []>} : vector<144x32xf32>, vector<32x64xf32>, vector<144x64xf32> -> vector<144x64xf32>
    %45 = arith.addf %40, %44 : vector<144x64xf32>
    %c4 = arith.constant 4 : index
    %c0_37 = arith.constant 0 : index
    %46 = vector.load %arg14[%c4, %c0_37] : memref<200x32xf32, #tpu.memory_space<vmem>>, vector<144x32xf32>
    %c4_38 = arith.constant 4 : index
    %c0_39 = arith.constant 0 : index
    %c0_40 = arith.constant 0 : index
    %47 = vector.load %arg6[%c4_38, %c0_39, %c0_40] : memref<25x32x64xf32, #tpu.memory_space<vmem>>, vector<1x32x64xf32>
    %48 = vector.shape_cast %47 : vector<1x32x64xf32> to vector<32x64xf32>
    %cst_41 = arith.constant dense<0.000000e+00> : vector<144x64xf32>
    %49 = tpu.matmul %46, %48, %cst_41 {dimension_numbers = #tpu.dot_dimension_numbers<[1], [0], [0], [1], [0, 0, 1, 1], [], []>} : vector<144x32xf32>, vector<32x64xf32>, vector<144x64xf32> -> vector<144x64xf32>
    %50 = arith.addf %45, %49 : vector<144x64xf32>
    %c12 = arith.constant 12 : index
    %c0_42 = arith.constant 0 : index
    %51 = vector.load %arg14[%c12, %c0_42] : memref<200x32xf32, #tpu.memory_space<vmem>>, vector<144x32xf32>
    %c5 = arith.constant 5 : index
    %c0_43 = arith.constant 0 : index
    %c0_44 = arith.constant 0 : index
    %52 = vector.load %arg6[%c5, %c0_43, %c0_44] : memref<25x32x64xf32, #tpu.memory_space<vmem>>, vector<1x32x64xf32>
    %53 = vector.shape_cast %52 : vector<1x32x64xf32> to vector<32x64xf32>
    %cst_45 = arith.constant dense<0.000000e+00> : vector<144x64xf32>
    %54 = tpu.matmul %51, %53, %cst_45 {dimension_numbers = #tpu.dot_dimension_numbers<[1], [0], [0], [1], [0, 0, 1, 1], [], []>} : vector<144x32xf32>, vector<32x64xf32>, vector<144x64xf32> -> vector<144x64xf32>
    %55 = arith.addf %50, %54 : vector<144x64xf32>
    %c13 = arith.constant 13 : index
    %c0_46 = arith.constant 0 : index
    %56 = vector.load %arg14[%c13, %c0_46] : memref<200x32xf32, #tpu.memory_space<vmem>>, vector<144x32xf32>
    %c6 = arith.constant 6 : index
    %c0_47 = arith.constant 0 : index
    %c0_48 = arith.constant 0 : index
    %57 = vector.load %arg6[%c6, %c0_47, %c0_48] : memref<25x32x64xf32, #tpu.memory_space<vmem>>, vector<1x32x64xf32>
    %58 = vector.shape_cast %57 : vector<1x32x64xf32> to vector<32x64xf32>
    %cst_49 = arith.constant dense<0.000000e+00> : vector<144x64xf32>
    %59 = tpu.matmul %56, %58, %cst_49 {dimension_numbers = #tpu.dot_dimension_numbers<[1], [0], [0], [1], [0, 0, 1, 1], [], []>} : vector<144x32xf32>, vector<32x64xf32>, vector<144x64xf32> -> vector<144x64xf32>
    %60 = arith.addf %55, %59 : vector<144x64xf32>
    %c14 = arith.constant 14 : index
    %c0_50 = arith.constant 0 : index
    %61 = vector.load %arg14[%c14, %c0_50] : memref<200x32xf32, #tpu.memory_space<vmem>>, vector<144x32xf32>
    %c7 = arith.constant 7 : index
    %c0_51 = arith.constant 0 : index
    %c0_52 = arith.constant 0 : index
    %62 = vector.load %arg6[%c7, %c0_51, %c0_52] : memref<25x32x64xf32, #tpu.memory_space<vmem>>, vector<1x32x64xf32>
    %63 = vector.shape_cast %62 : vector<1x32x64xf32> to vector<32x64xf32>
    %cst_53 = arith.constant dense<0.000000e+00> : vector<144x64xf32>
    %64 = tpu.matmul %61, %63, %cst_53 {dimension_numbers = #tpu.dot_dimension_numbers<[1], [0], [0], [1], [0, 0, 1, 1], [], []>} : vector<144x32xf32>, vector<32x64xf32>, vector<144x64xf32> -> vector<144x64xf32>
    %65 = arith.addf %60, %64 : vector<144x64xf32>
    %c15 = arith.constant 15 : index
    %c0_54 = arith.constant 0 : index
    %66 = vector.load %arg14[%c15, %c0_54] : memref<200x32xf32, #tpu.memory_space<vmem>>, vector<144x32xf32>
    %c8 = arith.constant 8 : index
    %c0_55 = arith.constant 0 : index
    %c0_56 = arith.constant 0 : index
    %67 = vector.load %arg6[%c8, %c0_55, %c0_56] : memref<25x32x64xf32, #tpu.memory_space<vmem>>, vector<1x32x64xf32>
    %68 = vector.shape_cast %67 : vector<1x32x64xf32> to vector<32x64xf32>
    %cst_57 = arith.constant dense<0.000000e+00> : vector<144x64xf32>
    %69 = tpu.matmul %66, %68, %cst_57 {dimension_numbers = #tpu.dot_dimension_numbers<[1], [0], [0], [1], [0, 0, 1, 1], [], []>} : vector<144x32xf32>, vector<32x64xf32>, vector<144x64xf32> -> vector<144x64xf32>
    %70 = arith.addf %65, %69 : vector<144x64xf32>
    %c16 = arith.constant 16 : index
    %c0_58 = arith.constant 0 : index
    %71 = vector.load %arg14[%c16, %c0_58] : memref<200x32xf32, #tpu.memory_space<vmem>>, vector<144x32xf32>
    %c9 = arith.constant 9 : index
    %c0_59 = arith.constant 0 : index
    %c0_60 = arith.constant 0 : index
    %72 = vector.load %arg6[%c9, %c0_59, %c0_60] : memref<25x32x64xf32, #tpu.memory_space<vmem>>, vector<1x32x64xf32>
    %73 = vector.shape_cast %72 : vector<1x32x64xf32> to vector<32x64xf32>
    %cst_61 = arith.constant dense<0.000000e+00> : vector<144x64xf32>
    %74 = tpu.matmul %71, %73, %cst_61 {dimension_numbers = #tpu.dot_dimension_numbers<[1], [0], [0], [1], [0, 0, 1, 1], [], []>} : vector<144x32xf32>, vector<32x64xf32>, vector<144x64xf32> -> vector<144x64xf32>
    %75 = arith.addf %70, %74 : vector<144x64xf32>
    %c24 = arith.constant 24 : index
    %c0_62 = arith.constant 0 : index
    %76 = vector.load %arg14[%c24, %c0_62] : memref<200x32xf32, #tpu.memory_space<vmem>>, vector<144x32xf32>
    %c10 = arith.constant 10 : index
    %c0_63 = arith.constant 0 : index
    %c0_64 = arith.constant 0 : index
    %77 = vector.load %arg6[%c10, %c0_63, %c0_64] : memref<25x32x64xf32, #tpu.memory_space<vmem>>, vector<1x32x64xf32>
    %78 = vector.shape_cast %77 : vector<1x32x64xf32> to vector<32x64xf32>
    %cst_65 = arith.constant dense<0.000000e+00> : vector<144x64xf32>
    %79 = tpu.matmul %76, %78, %cst_65 {dimension_numbers = #tpu.dot_dimension_numbers<[1], [0], [0], [1], [0, 0, 1, 1], [], []>} : vector<144x32xf32>, vector<32x64xf32>, vector<144x64xf32> -> vector<144x64xf32>
    %80 = arith.addf %75, %79 : vector<144x64xf32>
    %c25 = arith.constant 25 : index
    %c0_66 = arith.constant 0 : index
    %81 = vector.load %arg14[%c25, %c0_66] : memref<200x32xf32, #tpu.memory_space<vmem>>, vector<144x32xf32>
    %c11 = arith.constant 11 : index
    %c0_67 = arith.constant 0 : index
    %c0_68 = arith.constant 0 : index
    %82 = vector.load %arg6[%c11, %c0_67, %c0_68] : memref<25x32x64xf32, #tpu.memory_space<vmem>>, vector<1x32x64xf32>
    %83 = vector.shape_cast %82 : vector<1x32x64xf32> to vector<32x64xf32>
    %cst_69 = arith.constant dense<0.000000e+00> : vector<144x64xf32>
    %84 = tpu.matmul %81, %83, %cst_69 {dimension_numbers = #tpu.dot_dimension_numbers<[1], [0], [0], [1], [0, 0, 1, 1], [], []>} : vector<144x32xf32>, vector<32x64xf32>, vector<144x64xf32> -> vector<144x64xf32>
    %85 = arith.addf %80, %84 : vector<144x64xf32>
    %c26 = arith.constant 26 : index
    %c0_70 = arith.constant 0 : index
    %86 = vector.load %arg14[%c26, %c0_70] : memref<200x32xf32, #tpu.memory_space<vmem>>, vector<144x32xf32>
    %c12_71 = arith.constant 12 : index
    %c0_72 = arith.constant 0 : index
    %c0_73 = arith.constant 0 : index
    %87 = vector.load %arg6[%c12_71, %c0_72, %c0_73] : memref<25x32x64xf32, #tpu.memory_space<vmem>>, vector<1x32x64xf32>
    %88 = vector.shape_cast %87 : vector<1x32x64xf32> to vector<32x64xf32>
    %cst_74 = arith.constant dense<0.000000e+00> : vector<144x64xf32>
    %89 = tpu.matmul %86, %88, %cst_74 {dimension_numbers = #tpu.dot_dimension_numbers<[1], [0], [0], [1], [0, 0, 1, 1], [], []>} : vector<144x32xf32>, vector<32x64xf32>, vector<144x64xf32> -> vector<144x64xf32>
    %90 = arith.addf %85, %89 : vector<144x64xf32>
    %c27 = arith.constant 27 : index
    %c0_75 = arith.constant 0 : index
    %91 = vector.load %arg14[%c27, %c0_75] : memref<200x32xf32, #tpu.memory_space<vmem>>, vector<144x32xf32>
    %c13_76 = arith.constant 13 : index
    %c0_77 = arith.constant 0 : index
    %c0_78 = arith.constant 0 : index
    %92 = vector.load %arg6[%c13_76, %c0_77, %c0_78] : memref<25x32x64xf32, #tpu.memory_space<vmem>>, vector<1x32x64xf32>
    %93 = vector.shape_cast %92 : vector<1x32x64xf32> to vector<32x64xf32>
    %cst_79 = arith.constant dense<0.000000e+00> : vector<144x64xf32>
    %94 = tpu.matmul %91, %93, %cst_79 {dimension_numbers = #tpu.dot_dimension_numbers<[1], [0], [0], [1], [0, 0, 1, 1], [], []>} : vector<144x32xf32>, vector<32x64xf32>, vector<144x64xf32> -> vector<144x64xf32>
    %95 = arith.addf %90, %94 : vector<144x64xf32>
    %c28 = arith.constant 28 : index
    %c0_80 = arith.constant 0 : index
    %96 = vector.load %arg14[%c28, %c0_80] : memref<200x32xf32, #tpu.memory_space<vmem>>, vector<144x32xf32>
    %c14_81 = arith.constant 14 : index
    %c0_82 = arith.constant 0 : index
    %c0_83 = arith.constant 0 : index
    %97 = vector.load %arg6[%c14_81, %c0_82, %c0_83] : memref<25x32x64xf32, #tpu.memory_space<vmem>>, vector<1x32x64xf32>
    %98 = vector.shape_cast %97 : vector<1x32x64xf32> to vector<32x64xf32>
    %cst_84 = arith.constant dense<0.000000e+00> : vector<144x64xf32>
    %99 = tpu.matmul %96, %98, %cst_84 {dimension_numbers = #tpu.dot_dimension_numbers<[1], [0], [0], [1], [0, 0, 1, 1], [], []>} : vector<144x32xf32>, vector<32x64xf32>, vector<144x64xf32> -> vector<144x64xf32>
    %100 = arith.addf %95, %99 : vector<144x64xf32>
    %c36 = arith.constant 36 : index
    %c0_85 = arith.constant 0 : index
    %101 = vector.load %arg14[%c36, %c0_85] : memref<200x32xf32, #tpu.memory_space<vmem>>, vector<144x32xf32>
    %c15_86 = arith.constant 15 : index
    %c0_87 = arith.constant 0 : index
    %c0_88 = arith.constant 0 : index
    %102 = vector.load %arg6[%c15_86, %c0_87, %c0_88] : memref<25x32x64xf32, #tpu.memory_space<vmem>>, vector<1x32x64xf32>
    %103 = vector.shape_cast %102 : vector<1x32x64xf32> to vector<32x64xf32>
    %cst_89 = arith.constant dense<0.000000e+00> : vector<144x64xf32>
    %104 = tpu.matmul %101, %103, %cst_89 {dimension_numbers = #tpu.dot_dimension_numbers<[1], [0], [0], [1], [0, 0, 1, 1], [], []>} : vector<144x32xf32>, vector<32x64xf32>, vector<144x64xf32> -> vector<144x64xf32>
    %105 = arith.addf %100, %104 : vector<144x64xf32>
    %c37 = arith.constant 37 : index
    %c0_90 = arith.constant 0 : index
    %106 = vector.load %arg14[%c37, %c0_90] : memref<200x32xf32, #tpu.memory_space<vmem>>, vector<144x32xf32>
    %c16_91 = arith.constant 16 : index
    %c0_92 = arith.constant 0 : index
    %c0_93 = arith.constant 0 : index
    %107 = vector.load %arg6[%c16_91, %c0_92, %c0_93] : memref<25x32x64xf32, #tpu.memory_space<vmem>>, vector<1x32x64xf32>
    %108 = vector.shape_cast %107 : vector<1x32x64xf32> to vector<32x64xf32>
    %cst_94 = arith.constant dense<0.000000e+00> : vector<144x64xf32>
    %109 = tpu.matmul %106, %108, %cst_94 {dimension_numbers = #tpu.dot_dimension_numbers<[1], [0], [0], [1], [0, 0, 1, 1], [], []>} : vector<144x32xf32>, vector<32x64xf32>, vector<144x64xf32> -> vector<144x64xf32>
    %110 = arith.addf %105, %109 : vector<144x64xf32>
    %c38 = arith.constant 38 : index
    %c0_95 = arith.constant 0 : index
    %111 = vector.load %arg14[%c38, %c0_95] : memref<200x32xf32, #tpu.memory_space<vmem>>, vector<144x32xf32>
    %c17 = arith.constant 17 : index
    %c0_96 = arith.constant 0 : index
    %c0_97 = arith.constant 0 : index
    %112 = vector.load %arg6[%c17, %c0_96, %c0_97] : memref<25x32x64xf32, #tpu.memory_space<vmem>>, vector<1x32x64xf32>
    %113 = vector.shape_cast %112 : vector<1x32x64xf32> to vector<32x64xf32>
    %cst_98 = arith.constant dense<0.000000e+00> : vector<144x64xf32>
    %114 = tpu.matmul %111, %113, %cst_98 {dimension_numbers = #tpu.dot_dimension_numbers<[1], [0], [0], [1], [0, 0, 1, 1], [], []>} : vector<144x32xf32>, vector<32x64xf32>, vector<144x64xf32> -> vector<144x64xf32>
    %115 = arith.addf %110, %114 : vector<144x64xf32>
    %c39 = arith.constant 39 : index
    %c0_99 = arith.constant 0 : index
    %116 = vector.load %arg14[%c39, %c0_99] : memref<200x32xf32, #tpu.memory_space<vmem>>, vector<144x32xf32>
    %c18 = arith.constant 18 : index
    %c0_100 = arith.constant 0 : index
    %c0_101 = arith.constant 0 : index
    %117 = vector.load %arg6[%c18, %c0_100, %c0_101] : memref<25x32x64xf32, #tpu.memory_space<vmem>>, vector<1x32x64xf32>
    %118 = vector.shape_cast %117 : vector<1x32x64xf32> to vector<32x64xf32>
    %cst_102 = arith.constant dense<0.000000e+00> : vector<144x64xf32>
    %119 = tpu.matmul %116, %118, %cst_102 {dimension_numbers = #tpu.dot_dimension_numbers<[1], [0], [0], [1], [0, 0, 1, 1], [], []>} : vector<144x32xf32>, vector<32x64xf32>, vector<144x64xf32> -> vector<144x64xf32>
    %120 = arith.addf %115, %119 : vector<144x64xf32>
    %c40 = arith.constant 40 : index
    %c0_103 = arith.constant 0 : index
    %121 = vector.load %arg14[%c40, %c0_103] : memref<200x32xf32, #tpu.memory_space<vmem>>, vector<144x32xf32>
    %c19 = arith.constant 19 : index
    %c0_104 = arith.constant 0 : index
    %c0_105 = arith.constant 0 : index
    %122 = vector.load %arg6[%c19, %c0_104, %c0_105] : memref<25x32x64xf32, #tpu.memory_space<vmem>>, vector<1x32x64xf32>
    %123 = vector.shape_cast %122 : vector<1x32x64xf32> to vector<32x64xf32>
    %cst_106 = arith.constant dense<0.000000e+00> : vector<144x64xf32>
    %124 = tpu.matmul %121, %123, %cst_106 {dimension_numbers = #tpu.dot_dimension_numbers<[1], [0], [0], [1], [0, 0, 1, 1], [], []>} : vector<144x32xf32>, vector<32x64xf32>, vector<144x64xf32> -> vector<144x64xf32>
    %125 = arith.addf %120, %124 : vector<144x64xf32>
    %c48 = arith.constant 48 : index
    %c0_107 = arith.constant 0 : index
    %126 = vector.load %arg14[%c48, %c0_107] : memref<200x32xf32, #tpu.memory_space<vmem>>, vector<144x32xf32>
    %c20 = arith.constant 20 : index
    %c0_108 = arith.constant 0 : index
    %c0_109 = arith.constant 0 : index
    %127 = vector.load %arg6[%c20, %c0_108, %c0_109] : memref<25x32x64xf32, #tpu.memory_space<vmem>>, vector<1x32x64xf32>
    %128 = vector.shape_cast %127 : vector<1x32x64xf32> to vector<32x64xf32>
    %cst_110 = arith.constant dense<0.000000e+00> : vector<144x64xf32>
    %129 = tpu.matmul %126, %128, %cst_110 {dimension_numbers = #tpu.dot_dimension_numbers<[1], [0], [0], [1], [0, 0, 1, 1], [], []>} : vector<144x32xf32>, vector<32x64xf32>, vector<144x64xf32> -> vector<144x64xf32>
    %130 = arith.addf %125, %129 : vector<144x64xf32>
    %c49 = arith.constant 49 : index
    %c0_111 = arith.constant 0 : index
    %131 = vector.load %arg14[%c49, %c0_111] : memref<200x32xf32, #tpu.memory_space<vmem>>, vector<144x32xf32>
    %c21 = arith.constant 21 : index
    %c0_112 = arith.constant 0 : index
    %c0_113 = arith.constant 0 : index
    %132 = vector.load %arg6[%c21, %c0_112, %c0_113] : memref<25x32x64xf32, #tpu.memory_space<vmem>>, vector<1x32x64xf32>
    %133 = vector.shape_cast %132 : vector<1x32x64xf32> to vector<32x64xf32>
    %cst_114 = arith.constant dense<0.000000e+00> : vector<144x64xf32>
    %134 = tpu.matmul %131, %133, %cst_114 {dimension_numbers = #tpu.dot_dimension_numbers<[1], [0], [0], [1], [0, 0, 1, 1], [], []>} : vector<144x32xf32>, vector<32x64xf32>, vector<144x64xf32> -> vector<144x64xf32>
    %135 = arith.addf %130, %134 : vector<144x64xf32>
    %c50 = arith.constant 50 : index
    %c0_115 = arith.constant 0 : index
    %136 = vector.load %arg14[%c50, %c0_115] : memref<200x32xf32, #tpu.memory_space<vmem>>, vector<144x32xf32>
    %c22 = arith.constant 22 : index
    %c0_116 = arith.constant 0 : index
    %c0_117 = arith.constant 0 : index
    %137 = vector.load %arg6[%c22, %c0_116, %c0_117] : memref<25x32x64xf32, #tpu.memory_space<vmem>>, vector<1x32x64xf32>
    %138 = vector.shape_cast %137 : vector<1x32x64xf32> to vector<32x64xf32>
    %cst_118 = arith.constant dense<0.000000e+00> : vector<144x64xf32>
    %139 = tpu.matmul %136, %138, %cst_118 {dimension_numbers = #tpu.dot_dimension_numbers<[1], [0], [0], [1], [0, 0, 1, 1], [], []>} : vector<144x32xf32>, vector<32x64xf32>, vector<144x64xf32> -> vector<144x64xf32>
    %140 = arith.addf %135, %139 : vector<144x64xf32>
    %c51 = arith.constant 51 : index
    %c0_119 = arith.constant 0 : index
    %141 = vector.load %arg14[%c51, %c0_119] : memref<200x32xf32, #tpu.memory_space<vmem>>, vector<144x32xf32>
    %c23 = arith.constant 23 : index
    %c0_120 = arith.constant 0 : index
    %c0_121 = arith.constant 0 : index
    %142 = vector.load %arg6[%c23, %c0_120, %c0_121] : memref<25x32x64xf32, #tpu.memory_space<vmem>>, vector<1x32x64xf32>
    %143 = vector.shape_cast %142 : vector<1x32x64xf32> to vector<32x64xf32>
    %cst_122 = arith.constant dense<0.000000e+00> : vector<144x64xf32>
    %144 = tpu.matmul %141, %143, %cst_122 {dimension_numbers = #tpu.dot_dimension_numbers<[1], [0], [0], [1], [0, 0, 1, 1], [], []>} : vector<144x32xf32>, vector<32x64xf32>, vector<144x64xf32> -> vector<144x64xf32>
    %145 = arith.addf %140, %144 : vector<144x64xf32>
    %c52 = arith.constant 52 : index
    %c0_123 = arith.constant 0 : index
    %146 = vector.load %arg14[%c52, %c0_123] : memref<200x32xf32, #tpu.memory_space<vmem>>, vector<144x32xf32>
    %c24_124 = arith.constant 24 : index
    %c0_125 = arith.constant 0 : index
    %c0_126 = arith.constant 0 : index
    %147 = vector.load %arg6[%c24_124, %c0_125, %c0_126] : memref<25x32x64xf32, #tpu.memory_space<vmem>>, vector<1x32x64xf32>
    %148 = vector.shape_cast %147 : vector<1x32x64xf32> to vector<32x64xf32>
    %cst_127 = arith.constant dense<0.000000e+00> : vector<144x64xf32>
    %149 = tpu.matmul %146, %148, %cst_127 {dimension_numbers = #tpu.dot_dimension_numbers<[1], [0], [0], [1], [0, 0, 1, 1], [], []>} : vector<144x32xf32>, vector<32x64xf32>, vector<144x64xf32> -> vector<144x64xf32>
    %150 = arith.addf %145, %149 : vector<144x64xf32>
    %c0_128 = arith.constant 0 : index
    %c0_129 = arith.constant 0 : index
    %151 = vector.load %arg7[%c0_128, %c0_129] : memref<1x64xf32, #tpu.memory_space<vmem>>, vector<1x64xf32>
    %152 = vector.broadcast %151 : vector<1x64xf32> to vector<144x64xf32>
    %153 = arith.addf %150, %152 : vector<144x64xf32>
    %cst_130 = arith.constant 0.000000e+00 : f32
    %154 = vector.broadcast %cst_130 : f32 to vector<144x64xf32>
    %155 = arith.maximumf %153, %154 : vector<144x64xf32>
    %c0_131 = arith.constant 0 : index
    %c0_132 = arith.constant 0 : index
    %156 = vector.load %arg15[%c0_131, %c0_132] : memref<160x64xf32, #tpu.memory_space<vmem>>, vector<144x64xf32>
    tpu.vector_store %arg15[%c0_131, %c0_132], %155 {strides = array<i32>} : memref<160x64xf32, #tpu.memory_space<vmem>>, vector<144x64xf32>,
    %cst_133 = arith.constant 0.000000e+00 : f32
    %157 = vector.broadcast %cst_133 : f32 to vector<16x64xf32>
    %c144_134 = arith.constant 144 : index
    %c0_135 = arith.constant 0 : index
    %158 = vector.load %arg15[%c144_134, %c0_135] : memref<160x64xf32, #tpu.memory_space<vmem>>, vector<16x64xf32>
    tpu.vector_store %arg15[%c144_134, %c0_135], %157 {strides = array<i32>} : memref<160x64xf32, #tpu.memory_space<vmem>>, vector<16x64xf32>,
    %c0_136 = arith.constant 0 : index
    %c0_137 = arith.constant 0 : index
    %159 = vector.load %arg15[%c0_136, %c0_137] : memref<160x64xf32, #tpu.memory_space<vmem>>, vector<144x64xf32>
    %c1_138 = arith.constant 1 : index
    %c0_139 = arith.constant 0 : index
    %160 = vector.load %arg15[%c1_138, %c0_139] : memref<160x64xf32, #tpu.memory_space<vmem>>, vector<144x64xf32>
    %161 = arith.maximumf %159, %160 : vector<144x64xf32>
    %c12_140 = arith.constant 12 : index
    %c0_141 = arith.constant 0 : index
    %162 = vector.load %arg15[%c12_140, %c0_141] : memref<160x64xf32, #tpu.memory_space<vmem>>, vector<144x64xf32>
    %c13_142 = arith.constant 13 : index
    %c0_143 = arith.constant 0 : index
    %163 = vector.load %arg15[%c13_142, %c0_143] : memref<160x64xf32, #tpu.memory_space<vmem>>, vector<144x64xf32>
    %164 = arith.maximumf %162, %163 : vector<144x64xf32>
    %165 = arith.maximumf %161, %164 : vector<144x64xf32>
    %c0_144 = arith.constant 0 : index
    %c0_145 = arith.constant 0 : index
    %166 = vector.load %arg10[%c0_144, %c0_145] : memref<16x144xf32, #tpu.memory_space<vmem>>, vector<16x144xf32>
    %cst_146 = arith.constant dense<0.000000e+00> : vector<16x64xf32>
    %167 = tpu.matmul %166, %165, %cst_146 {dimension_numbers = #tpu.dot_dimension_numbers<[1], [0], [0], [1], [0, 0, 1, 1], [], []>} : vector<16x144xf32>, vector<144x64xf32>, vector<16x64xf32> -> vector<16x64xf32>
    %c0_147 = arith.constant 0 : index
    %c0_148 = arith.constant 0 : index
    %168 = vector.load %arg8[%c0_147, %c0_148] : memref<1x64xf32, #tpu.memory_space<vmem>>, vector<1x64xf32>
    %169 = vector.broadcast %168 : vector<1x64xf32> to vector<16x64xf32>
    %170 = arith.mulf %167, %169 : vector<16x64xf32>
    %c0_149 = arith.constant 0 : index
    %c0_150 = arith.constant 0 : index
    %171 = vector.load %arg9[%c0_149, %c0_150] : memref<1x64xf32, #tpu.memory_space<vmem>>, vector<1x64xf32>
    %172 = vector.broadcast %171 : vector<1x64xf32> to vector<16x64xf32>
    %173 = arith.addf %170, %172 : vector<16x64xf32>
    %c0_151 = arith.constant 0 : index
    %c0_152 = arith.constant 0 : index
    %174 = vector.load %arg16[%c0_151, %c0_152] : memref<16x64xf32, #tpu.memory_space<vmem>>, vector<16x64xf32>
    tpu.vector_store %arg16[%c0_151, %c0_152], %173 {strides = array<i32>} : memref<16x64xf32, #tpu.memory_space<vmem>>, vector<16x64xf32>,
    %c0_153 = arith.constant 0 : index
    %c0_154 = arith.constant 0 : index
    %175 = vector.load %arg12[%c0_153, %c0_154] : memref<1x64xf32, #tpu.memory_space<vmem>>, vector<1x64xf32>
    %c0_155 = arith.constant 0 : index
    %c0_156 = arith.constant 0 : index
    %176 = vector.load %arg16[%c0_155, %c0_156] : memref<16x64xf32, #tpu.memory_space<vmem>>, vector<1x64xf32>
    %c0_157 = arith.constant 0 : index
    %c0_158 = arith.constant 0 : index
    %c0_159 = arith.constant 0 : index
    %177 = vector.load %arg11[%c0_157, %c0_158, %c0_159] : memref<16x64x64xf32, #tpu.memory_space<vmem>>, vector<1x64x64xf32>
    %178 = vector.shape_cast %177 : vector<1x64x64xf32> to vector<64x64xf32>
    %cst_160 = arith.constant dense<0.000000e+00> : vector<1x64xf32>
    %179 = tpu.matmul %176, %178, %cst_160 {dimension_numbers = #tpu.dot_dimension_numbers<[1], [0], [0], [1], [0, 0, 1, 1], [], []>} : vector<1x64xf32>, vector<64x64xf32>, vector<1x64xf32> -> vector<1x64xf32>
    %180 = arith.addf %175, %179 : vector<1x64xf32>
    %c1_161 = arith.constant 1 : index
    %c0_162 = arith.constant 0 : index
    %181 = vector.load %arg16[%c1_161, %c0_162] : memref<16x64xf32, #tpu.memory_space<vmem>>, vector<1x64xf32>
    %c1_163 = arith.constant 1 : index
    %c0_164 = arith.constant 0 : index
    %c0_165 = arith.constant 0 : index
    %182 = vector.load %arg11[%c1_163, %c0_164, %c0_165] : memref<16x64x64xf32, #tpu.memory_space<vmem>>, vector<1x64x64xf32>
    %183 = vector.shape_cast %182 : vector<1x64x64xf32> to vector<64x64xf32>
    %cst_166 = arith.constant dense<0.000000e+00> : vector<1x64xf32>
    %184 = tpu.matmul %181, %183, %cst_166 {dimension_numbers = #tpu.dot_dimension_numbers<[1], [0], [0], [1], [0, 0, 1, 1], [], []>} : vector<1x64xf32>, vector<64x64xf32>, vector<1x64xf32> -> vector<1x64xf32>
    %185 = arith.addf %180, %184 : vector<1x64xf32>
    %c2_167 = arith.constant 2 : index
    %c0_168 = arith.constant 0 : index
    %186 = vector.load %arg16[%c2_167, %c0_168] : memref<16x64xf32, #tpu.memory_space<vmem>>, vector<1x64xf32>
    %c2_169 = arith.constant 2 : index
    %c0_170 = arith.constant 0 : index
    %c0_171 = arith.constant 0 : index
    %187 = vector.load %arg11[%c2_169, %c0_170, %c0_171] : memref<16x64x64xf32, #tpu.memory_space<vmem>>, vector<1x64x64xf32>
    %188 = vector.shape_cast %187 : vector<1x64x64xf32> to vector<64x64xf32>
    %cst_172 = arith.constant dense<0.000000e+00> : vector<1x64xf32>
    %189 = tpu.matmul %186, %188, %cst_172 {dimension_numbers = #tpu.dot_dimension_numbers<[1], [0], [0], [1], [0, 0, 1, 1], [], []>} : vector<1x64xf32>, vector<64x64xf32>, vector<1x64xf32> -> vector<1x64xf32>
    %190 = arith.addf %185, %189 : vector<1x64xf32>
    %c3_173 = arith.constant 3 : index
    %c0_174 = arith.constant 0 : index
    %191 = vector.load %arg16[%c3_173, %c0_174] : memref<16x64xf32, #tpu.memory_space<vmem>>, vector<1x64xf32>
    %c3_175 = arith.constant 3 : index
    %c0_176 = arith.constant 0 : index
    %c0_177 = arith.constant 0 : index
    %192 = vector.load %arg11[%c3_175, %c0_176, %c0_177] : memref<16x64x64xf32, #tpu.memory_space<vmem>>, vector<1x64x64xf32>
    %193 = vector.shape_cast %192 : vector<1x64x64xf32> to vector<64x64xf32>
    %cst_178 = arith.constant dense<0.000000e+00> : vector<1x64xf32>
    %194 = tpu.matmul %191, %193, %cst_178 {dimension_numbers = #tpu.dot_dimension_numbers<[1], [0], [0], [1], [0, 0, 1, 1], [], []>} : vector<1x64xf32>, vector<64x64xf32>, vector<1x64xf32> -> vector<1x64xf32>
    %195 = arith.addf %190, %194 : vector<1x64xf32>
    %c4_179 = arith.constant 4 : index
    %c0_180 = arith.constant 0 : index
    %196 = vector.load %arg16[%c4_179, %c0_180] : memref<16x64xf32, #tpu.memory_space<vmem>>, vector<1x64xf32>
    %c4_181 = arith.constant 4 : index
    %c0_182 = arith.constant 0 : index
    %c0_183 = arith.constant 0 : index
    %197 = vector.load %arg11[%c4_181, %c0_182, %c0_183] : memref<16x64x64xf32, #tpu.memory_space<vmem>>, vector<1x64x64xf32>
    %198 = vector.shape_cast %197 : vector<1x64x64xf32> to vector<64x64xf32>
    %cst_184 = arith.constant dense<0.000000e+00> : vector<1x64xf32>
    %199 = tpu.matmul %196, %198, %cst_184 {dimension_numbers = #tpu.dot_dimension_numbers<[1], [0], [0], [1], [0, 0, 1, 1], [], []>} : vector<1x64xf32>, vector<64x64xf32>, vector<1x64xf32> -> vector<1x64xf32>
    %200 = arith.addf %195, %199 : vector<1x64xf32>
    %c5_185 = arith.constant 5 : index
    %c0_186 = arith.constant 0 : index
    %201 = vector.load %arg16[%c5_185, %c0_186] : memref<16x64xf32, #tpu.memory_space<vmem>>, vector<1x64xf32>
    %c5_187 = arith.constant 5 : index
    %c0_188 = arith.constant 0 : index
    %c0_189 = arith.constant 0 : index
    %202 = vector.load %arg11[%c5_187, %c0_188, %c0_189] : memref<16x64x64xf32, #tpu.memory_space<vmem>>, vector<1x64x64xf32>
    %203 = vector.shape_cast %202 : vector<1x64x64xf32> to vector<64x64xf32>
    %cst_190 = arith.constant dense<0.000000e+00> : vector<1x64xf32>
    %204 = tpu.matmul %201, %203, %cst_190 {dimension_numbers = #tpu.dot_dimension_numbers<[1], [0], [0], [1], [0, 0, 1, 1], [], []>} : vector<1x64xf32>, vector<64x64xf32>, vector<1x64xf32> -> vector<1x64xf32>
    %205 = arith.addf %200, %204 : vector<1x64xf32>
    %c6_191 = arith.constant 6 : index
    %c0_192 = arith.constant 0 : index
    %206 = vector.load %arg16[%c6_191, %c0_192] : memref<16x64xf32, #tpu.memory_space<vmem>>, vector<1x64xf32>
    %c6_193 = arith.constant 6 : index
    %c0_194 = arith.constant 0 : index
    %c0_195 = arith.constant 0 : index
    %207 = vector.load %arg11[%c6_193, %c0_194, %c0_195] : memref<16x64x64xf32, #tpu.memory_space<vmem>>, vector<1x64x64xf32>
    %208 = vector.shape_cast %207 : vector<1x64x64xf32> to vector<64x64xf32>
    %cst_196 = arith.constant dense<0.000000e+00> : vector<1x64xf32>
    %209 = tpu.matmul %206, %208, %cst_196 {dimension_numbers = #tpu.dot_dimension_numbers<[1], [0], [0], [1], [0, 0, 1, 1], [], []>} : vector<1x64xf32>, vector<64x64xf32>, vector<1x64xf32> -> vector<1x64xf32>
    %210 = arith.addf %205, %209 : vector<1x64xf32>
    %c7_197 = arith.constant 7 : index
    %c0_198 = arith.constant 0 : index
    %211 = vector.load %arg16[%c7_197, %c0_198] : memref<16x64xf32, #tpu.memory_space<vmem>>, vector<1x64xf32>
    %c7_199 = arith.constant 7 : index
    %c0_200 = arith.constant 0 : index
    %c0_201 = arith.constant 0 : index
    %212 = vector.load %arg11[%c7_199, %c0_200, %c0_201] : memref<16x64x64xf32, #tpu.memory_space<vmem>>, vector<1x64x64xf32>
    %213 = vector.shape_cast %212 : vector<1x64x64xf32> to vector<64x64xf32>
    %cst_202 = arith.constant dense<0.000000e+00> : vector<1x64xf32>
    %214 = tpu.matmul %211, %213, %cst_202 {dimension_numbers = #tpu.dot_dimension_numbers<[1], [0], [0], [1], [0, 0, 1, 1], [], []>} : vector<1x64xf32>, vector<64x64xf32>, vector<1x64xf32> -> vector<1x64xf32>
    %215 = arith.addf %210, %214 : vector<1x64xf32>
    %c8_203 = arith.constant 8 : index
    %c0_204 = arith.constant 0 : index
    %216 = vector.load %arg16[%c8_203, %c0_204] : memref<16x64xf32, #tpu.memory_space<vmem>>, vector<1x64xf32>
    %c8_205 = arith.constant 8 : index
    %c0_206 = arith.constant 0 : index
    %c0_207 = arith.constant 0 : index
    %217 = vector.load %arg11[%c8_205, %c0_206, %c0_207] : memref<16x64x64xf32, #tpu.memory_space<vmem>>, vector<1x64x64xf32>
    %218 = vector.shape_cast %217 : vector<1x64x64xf32> to vector<64x64xf32>
    %cst_208 = arith.constant dense<0.000000e+00> : vector<1x64xf32>
    %219 = tpu.matmul %216, %218, %cst_208 {dimension_numbers = #tpu.dot_dimension_numbers<[1], [0], [0], [1], [0, 0, 1, 1], [], []>} : vector<1x64xf32>, vector<64x64xf32>, vector<1x64xf32> -> vector<1x64xf32>
    %220 = arith.addf %215, %219 : vector<1x64xf32>
    %c9_209 = arith.constant 9 : index
    %c0_210 = arith.constant 0 : index
    %221 = vector.load %arg16[%c9_209, %c0_210] : memref<16x64xf32, #tpu.memory_space<vmem>>, vector<1x64xf32>
    %c9_211 = arith.constant 9 : index
    %c0_212 = arith.constant 0 : index
    %c0_213 = arith.constant 0 : index
    %222 = vector.load %arg11[%c9_211, %c0_212, %c0_213] : memref<16x64x64xf32, #tpu.memory_space<vmem>>, vector<1x64x64xf32>
    %223 = vector.shape_cast %222 : vector<1x64x64xf32> to vector<64x64xf32>
    %cst_214 = arith.constant dense<0.000000e+00> : vector<1x64xf32>
    %224 = tpu.matmul %221, %223, %cst_214 {dimension_numbers = #tpu.dot_dimension_numbers<[1], [0], [0], [1], [0, 0, 1, 1], [], []>} : vector<1x64xf32>, vector<64x64xf32>, vector<1x64xf32> -> vector<1x64xf32>
    %225 = arith.addf %220, %224 : vector<1x64xf32>
    %c10_215 = arith.constant 10 : index
    %c0_216 = arith.constant 0 : index
    %226 = vector.load %arg16[%c10_215, %c0_216] : memref<16x64xf32, #tpu.memory_space<vmem>>, vector<1x64xf32>
    %c10_217 = arith.constant 10 : index
    %c0_218 = arith.constant 0 : index
    %c0_219 = arith.constant 0 : index
    %227 = vector.load %arg11[%c10_217, %c0_218, %c0_219] : memref<16x64x64xf32, #tpu.memory_space<vmem>>, vector<1x64x64xf32>
    %228 = vector.shape_cast %227 : vector<1x64x64xf32> to vector<64x64xf32>
    %cst_220 = arith.constant dense<0.000000e+00> : vector<1x64xf32>
    %229 = tpu.matmul %226, %228, %cst_220 {dimension_numbers = #tpu.dot_dimension_numbers<[1], [0], [0], [1], [0, 0, 1, 1], [], []>} : vector<1x64xf32>, vector<64x64xf32>, vector<1x64xf32> -> vector<1x64xf32>
    %230 = arith.addf %225, %229 : vector<1x64xf32>
    %c11_221 = arith.constant 11 : index
    %c0_222 = arith.constant 0 : index
    %231 = vector.load %arg16[%c11_221, %c0_222] : memref<16x64xf32, #tpu.memory_space<vmem>>, vector<1x64xf32>
    %c11_223 = arith.constant 11 : index
    %c0_224 = arith.constant 0 : index
    %c0_225 = arith.constant 0 : index
    %232 = vector.load %arg11[%c11_223, %c0_224, %c0_225] : memref<16x64x64xf32, #tpu.memory_space<vmem>>, vector<1x64x64xf32>
    %233 = vector.shape_cast %232 : vector<1x64x64xf32> to vector<64x64xf32>
    %cst_226 = arith.constant dense<0.000000e+00> : vector<1x64xf32>
    %234 = tpu.matmul %231, %233, %cst_226 {dimension_numbers = #tpu.dot_dimension_numbers<[1], [0], [0], [1], [0, 0, 1, 1], [], []>} : vector<1x64xf32>, vector<64x64xf32>, vector<1x64xf32> -> vector<1x64xf32>
    %235 = arith.addf %230, %234 : vector<1x64xf32>
    %c12_227 = arith.constant 12 : index
    %c0_228 = arith.constant 0 : index
    %236 = vector.load %arg16[%c12_227, %c0_228] : memref<16x64xf32, #tpu.memory_space<vmem>>, vector<1x64xf32>
    %c12_229 = arith.constant 12 : index
    %c0_230 = arith.constant 0 : index
    %c0_231 = arith.constant 0 : index
    %237 = vector.load %arg11[%c12_229, %c0_230, %c0_231] : memref<16x64x64xf32, #tpu.memory_space<vmem>>, vector<1x64x64xf32>
    %238 = vector.shape_cast %237 : vector<1x64x64xf32> to vector<64x64xf32>
    %cst_232 = arith.constant dense<0.000000e+00> : vector<1x64xf32>
    %239 = tpu.matmul %236, %238, %cst_232 {dimension_numbers = #tpu.dot_dimension_numbers<[1], [0], [0], [1], [0, 0, 1, 1], [], []>} : vector<1x64xf32>, vector<64x64xf32>, vector<1x64xf32> -> vector<1x64xf32>
    %240 = arith.addf %235, %239 : vector<1x64xf32>
    %c13_233 = arith.constant 13 : index
    %c0_234 = arith.constant 0 : index
    %241 = vector.load %arg16[%c13_233, %c0_234] : memref<16x64xf32, #tpu.memory_space<vmem>>, vector<1x64xf32>
    %c13_235 = arith.constant 13 : index
    %c0_236 = arith.constant 0 : index
    %c0_237 = arith.constant 0 : index
    %242 = vector.load %arg11[%c13_235, %c0_236, %c0_237] : memref<16x64x64xf32, #tpu.memory_space<vmem>>, vector<1x64x64xf32>
    %243 = vector.shape_cast %242 : vector<1x64x64xf32> to vector<64x64xf32>
    %cst_238 = arith.constant dense<0.000000e+00> : vector<1x64xf32>
    %244 = tpu.matmul %241, %243, %cst_238 {dimension_numbers = #tpu.dot_dimension_numbers<[1], [0], [0], [1], [0, 0, 1, 1], [], []>} : vector<1x64xf32>, vector<64x64xf32>, vector<1x64xf32> -> vector<1x64xf32>
    %245 = arith.addf %240, %244 : vector<1x64xf32>
    %c14_239 = arith.constant 14 : index
    %c0_240 = arith.constant 0 : index
    %246 = vector.load %arg16[%c14_239, %c0_240] : memref<16x64xf32, #tpu.memory_space<vmem>>, vector<1x64xf32>
    %c14_241 = arith.constant 14 : index
    %c0_242 = arith.constant 0 : index
    %c0_243 = arith.constant 0 : index
    %247 = vector.load %arg11[%c14_241, %c0_242, %c0_243] : memref<16x64x64xf32, #tpu.memory_space<vmem>>, vector<1x64x64xf32>
    %248 = vector.shape_cast %247 : vector<1x64x64xf32> to vector<64x64xf32>
    %cst_244 = arith.constant dense<0.000000e+00> : vector<1x64xf32>
    %249 = tpu.matmul %246, %248, %cst_244 {dimension_numbers = #tpu.dot_dimension_numbers<[1], [0], [0], [1], [0, 0, 1, 1], [], []>} : vector<1x64xf32>, vector<64x64xf32>, vector<1x64xf32> -> vector<1x64xf32>
    %250 = arith.addf %245, %249 : vector<1x64xf32>
    %c15_245 = arith.constant 15 : index
    %c0_246 = arith.constant 0 : index
    %251 = vector.load %arg16[%c15_245, %c0_246] : memref<16x64xf32, #tpu.memory_space<vmem>>, vector<1x64xf32>
    %c15_247 = arith.constant 15 : index
    %c0_248 = arith.constant 0 : index
    %c0_249 = arith.constant 0 : index
    %252 = vector.load %arg11[%c15_247, %c0_248, %c0_249] : memref<16x64x64xf32, #tpu.memory_space<vmem>>, vector<1x64x64xf32>
    %253 = vector.shape_cast %252 : vector<1x64x64xf32> to vector<64x64xf32>
    %cst_250 = arith.constant dense<0.000000e+00> : vector<1x64xf32>
    %254 = tpu.matmul %251, %253, %cst_250 {dimension_numbers = #tpu.dot_dimension_numbers<[1], [0], [0], [1], [0, 0, 1, 1], [], []>} : vector<1x64xf32>, vector<64x64xf32>, vector<1x64xf32> -> vector<1x64xf32>
    %255 = arith.addf %250, %254 : vector<1x64xf32>
    %c0_251 = arith.constant 0 : index
    %c0_252 = arith.constant 0 : index
    %c0_253 = arith.constant 0 : index
    %256 = vector.load %arg13[%c0_251, %c0_252, %c0_253] : memref<1x1x64xf32, #tpu.memory_space<vmem>>, vector<1x1x64xf32>
    %257 = vector.shape_cast %256 : vector<1x1x64xf32> to vector<1x64xf32>
    %258 = vector.shape_cast %255 : vector<1x64xf32> to vector<1x1x64xf32>
    tpu.vector_store %arg13[%c0_251, %c0_252, %c0_253], %258 {strides = array<i32>} : memref<1x1x64xf32, #tpu.memory_space<vmem>>, vector<1x1x64xf32>,
    return
  }
  func.func @transform_0(%arg0: i32) -> (i32, i32, i32) {
    %c0_i32 = arith.constant 0 : i32
    %c0_i32_0 = arith.constant 0 : i32
    %c0_i32_1 = arith.constant 0 : i32
    return %arg0, %c0_i32, %c0_i32_0 : i32, i32, i32
  }
  func.func @transform_1(%arg0: i32) -> (i32, i32) {
    %c0_i32 = arith.constant 0 : i32
    %c0_i32_0 = arith.constant 0 : i32
    %c0_i32_1 = arith.constant 0 : i32
    return %c0_i32, %c0_i32_0 : i32, i32
  }
  func.func @transform_2(%arg0: i32) -> (i32, i32) {
    %c0_i32 = arith.constant 0 : i32
    %c0_i32_0 = arith.constant 0 : i32
    %c0_i32_1 = arith.constant 0 : i32
    return %c0_i32, %c0_i32_0 : i32, i32
  }
  func.func @transform_3(%arg0: i32) -> (i32, i32) {
    %c0_i32 = arith.constant 0 : i32
    %c0_i32_0 = arith.constant 0 : i32
    %c0_i32_1 = arith.constant 0 : i32
    return %c0_i32, %c0_i32_0 : i32, i32
  }
  func.func @transform_4(%arg0: i32) -> (i32, i32) {
    %c0_i32 = arith.constant 0 : i32
    %c0_i32_0 = arith.constant 0 : i32
    %c0_i32_1 = arith.constant 0 : i32
    return %c0_i32, %c0_i32_0 : i32, i32
  }
  func.func @transform_5(%arg0: i32) -> (i32, i32, i32) {
    %c0_i32 = arith.constant 0 : i32
    %c0_i32_0 = arith.constant 0 : i32
    %c0_i32_1 = arith.constant 0 : i32
    %c0_i32_2 = arith.constant 0 : i32
    return %c0_i32, %c0_i32_0, %c0_i32_1 : i32, i32, i32
  }
  func.func @transform_6(%arg0: i32) -> (i32, i32) {
    %c0_i32 = arith.constant 0 : i32
    %c0_i32_0 = arith.constant 0 : i32
    %c0_i32_1 = arith.constant 0 : i32
    return %c0_i32, %c0_i32_0 : i32, i32
  }
  func.func @transform_7(%arg0: i32) -> (i32, i32) {
    %c0_i32 = arith.constant 0 : i32
    %c0_i32_0 = arith.constant 0 : i32
    %c0_i32_1 = arith.constant 0 : i32
    return %c0_i32, %c0_i32_0 : i32, i32
  }
  func.func @transform_8(%arg0: i32) -> (i32, i32) {
    %c0_i32 = arith.constant 0 : i32
    %c0_i32_0 = arith.constant 0 : i32
    %c0_i32_1 = arith.constant 0 : i32
    return %c0_i32, %c0_i32_0 : i32, i32
  }
  func.func @transform_9(%arg0: i32) -> (i32, i32) {
    %c0_i32 = arith.constant 0 : i32
    %c0_i32_0 = arith.constant 0 : i32
    %c0_i32_1 = arith.constant 0 : i32
    return %c0_i32, %c0_i32_0 : i32, i32
  }
  func.func @transform_10(%arg0: i32) -> (i32, i32, i32) {
    %c0_i32 = arith.constant 0 : i32
    %c0_i32_0 = arith.constant 0 : i32
    %c0_i32_1 = arith.constant 0 : i32
    %c0_i32_2 = arith.constant 0 : i32
    return %c0_i32, %c0_i32_0, %c0_i32_1 : i32, i32, i32
  }
  func.func @transform_11(%arg0: i32) -> (i32, i32) {
    %c0_i32 = arith.constant 0 : i32
    %c0_i32_0 = arith.constant 0 : i32
    %c0_i32_1 = arith.constant 0 : i32
    return %c0_i32, %c0_i32_0 : i32, i32
  }
  func.func @transform_12(%arg0: i32) -> (i32, i32, i32) {
    %c0_i32 = arith.constant 0 : i32
    %c0_i32_0 = arith.constant 0 : i32
    %c0_i32_1 = arith.constant 0 : i32
    return %arg0, %c0_i32, %c0_i32_0 : i32, i32, i32
  }
}

</mosaic_0001>

<llo_original>
// kernel: image_model_forward.1
$region0: #{image_model_forward.1}
  #allocation0 [shape = 'u32[]', space=smem, size = 0x4, offset = 0x4, fixed_abs, tag = 'smem constant byte address 0x4 - core index']
  #allocation1 [shape = 'u32[72,128]{1,0:T(1,128)}', space=vmem, size = 0x9000, scoped, tag = 'internal scratch']
  #allocation2 [shape = 'f32[200,32]{1,0:T(8,128)}', space=vmem, size = 0x19000, scoped, tag = 'scratch operand']
  #allocation3 [shape = 'f32[160,64]{1,0:T(8,128)}', space=vmem, size = 0x14000, scoped, tag = 'scratch operand']
  #allocation4 [shape = 'f32[16,64]{1,0:T(8,128)}', space=vmem, size = 0x2000, scoped, tag = 'scratch operand']
  %s0 = inlined_call_operand.vmem [shape: f32[2,576,25], index: 0, kind: input, shape index: {}]
  %s1 = inlined_call_operand.vmem [shape: f32[25,32], index: 1, kind: input, shape index: {}]
  %s2 = inlined_call_operand.vmem [shape: f32[1,32], index: 2, kind: input, shape index: {}]
  %s3 = inlined_call_operand.vmem [shape: f32[1,32], index: 3, kind: input, shape index: {}]
  %s4 = inlined_call_operand.vmem [shape: f32[1,32], index: 4, kind: input, shape index: {}]
  %s5 = inlined_call_operand.vmem [shape: f32[25,32,64], index: 5, kind: input, shape index: {}]
  %s6 = inlined_call_operand.vmem [shape: f32[1,64], index: 6, kind: input, shape index: {}]
  %s7 = inlined_call_operand.vmem [shape: f32[1,64], index: 7, kind: input, shape index: {}]
  %s8 = inlined_call_operand.vmem [shape: f32[1,64], index: 8, kind: input, shape index: {}]
  %s9 = inlined_call_operand.vmem [shape: f32[16,144], index: 9, kind: input, shape index: {}]
  %s10 = inlined_call_operand.vmem [shape: f32[16,64,64], index: 10, kind: input, shape index: {}]
  %s11 = inlined_call_operand.vmem [shape: f32[1,64], index: 11, kind: input, shape index: {}]
  %s12 = inlined_call_operand.hbm [shape: f32[2,1,64], index: 12, kind: output, shape index: {}]
  %s13 = sld [smem:[#allocation0]]
  $region81: #{image_model_forward.1} parent=0
    _
  %s15 = ssub.s32 1, %s13
  %s16 = scalar_select 0, %s15, %s13
  $region1: #{image_model_forward.1} parent=0
    #allocation5 [shape = 'u8[1024]{0}', space=vmem, size = 0x400, scoped, tag = 'output window, operand 0']
    #allocation6 [shape = 's32[2]{0}', space=sflag, size = 0x8, scoped, tag = 'scoped memory for image_model_forward.1']
    %17 = vsyncpa [#allocation6], 0
    %s18 = scalar_lea.sflag [#allocation6], 1
    %19 = vsyncpa %s18, 0
    loop: start=0, step=1, limit=4
    $region2: #{image_model_forward.1} parent=1 // loop_pre_header
      _
    $region3: #{image_model_forward.1} parent=1 // loop_header
      %s21 = sphi 0, %s25
      %p22 = scmp.ge.s32.totalorder %s21, 4
      %s31 = sphi 0, %s33
      %s34 = sphi 0, %s31
      %s35 = sphi 0, %s34
      %s51 = sphi 0, %s35
      %s55 = sphi 0, %s55
      %s57 = sphi 0, %s55
      %s58 = sphi 0, %s57
      %s72 = sphi 0, %s58
      %s76 = sphi 0, %s76
      %s78 = sphi 0, %s76
      %s79 = sphi 0, %s78
      %s93 = sphi 0, %s79
      %s97 = sphi 0, %s97
      %s99 = sphi 0, %s97
      %s100 = sphi 0, %s99
      %s114 = sphi 0, %s100
      %s118 = sphi 0, %s118
      %s120 = sphi 0, %s118
      %s121 = sphi 0, %s120
      %s135 = sphi 0, %s121
      %s139 = sphi 0, %s139
      %s141 = sphi 0, %s139
      %s142 = sphi 0, %s141
      %s156 = sphi 0, %s142
      %s160 = sphi 0, %s160
      %s162 = sphi 0, %s160
      %s163 = sphi 0, %s162
      %s177 = sphi 0, %s163
      %s181 = sphi 0, %s181
      %s183 = sphi 0, %s181
      %s184 = sphi 0, %s183
      %s198 = sphi 0, %s184
      %s202 = sphi 0, %s202
      %s204 = sphi 0, %s202
      %s205 = sphi 0, %s204
      %s219 = sphi 0, %s205
      %s223 = sphi 0, %s223
      %s225 = sphi 0, %s223
      %s226 = sphi 0, %s225
      %s240 = sphi 0, %s226
      %s244 = sphi 0, %s244
      %s246 = sphi 0, %s244
      %s247 = sphi 0, %s246
      %s261 = sphi 0, %s247
      %s265 = sphi 0, %s265
      %s267 = sphi 0, %s265
      %s268 = sphi 0, %s267
      %s282 = sphi 0, %s268
      %s288 = sphi 0, %s290
      %s291 = sphi 0, %s288
      %s292 = sphi 0, %s291
      %s308 = sphi 0, %s292
    $region4: #{image_model_forward.1} parent=1 // loop_header_branch
      %24 = sbr.rel (%p22) target = $region8
    $region5: #{image_model_forward.1} parent=1 // loop_body
      %s26 = ssub.s32 %s21, 1
      %s27 = ssub.s32 %s21, 2
      %s28 = sadd.s32 %s21, 1
      %s29 = ssub.s32 %s21, %s28
      %p30 = scmp.eq.s32.totalorder %s29, 0
      %s32 = sadd.s32 %s31, 1
      %s33 = scalar_select %p30, %s31, %s32
      %p36 = pneg %p30
      %p37 = scmp.eq.s32.totalorder %s21, 1
      %p38 = por %p36, %p37
      %p39 = scmp.ne.s32.totalorder %s31, %s34
      %p40 = scmp.eq.s32.totalorder %s21, 0
      %p41 = por %p39, %p40
      %p42 = scmp.ne.s32.totalorder %s31, %s34
      %p43 = scmp.eq.s32.totalorder %s26, 1
      %p44 = por %p42, %p43
      %p45 = scmp.ne.s32.totalorder %s34, %s35
      %p46 = scmp.eq.s32.totalorder %s26, 0
      %p47 = por %p45, %p46
      %p48 = scmp.ne.s32.totalorder %s34, %s35
      %p49 = scmp.eq.s32.totalorder %s27, 1
      %p50 = por %p48, %p49
      %p52 = scmp.ne.s32.totalorder %s35, %s51
      %p53 = scmp.eq.s32.totalorder %s27, 0
      %p54 = por %p52, %p53
      %s56 = sadd.s32 %s55, 1
      %p59 = scmp.eq.s32.totalorder %s21, 1
      %p60 = scmp.ne.s32.totalorder %s55, %s57
      %p61 = scmp.eq.s32.totalorder %s21, 0
      %p62 = por %p60, %p61
      %p63 = scmp.ne.s32.totalorder %s55, %s57
      %p64 = scmp.eq.s32.totalorder %s26, 1
      %p65 = por %p63, %p64
      %p66 = scmp.ne.s32.totalorder %s57, %s58
      %p67 = scmp.eq.s32.totalorder %s26, 0
      %p68 = por %p66, %p67
      %p69 = scmp.ne.s32.totalorder %s57, %s58
      %p70 = scmp.eq.s32.totalorder %s27, 1
      %p71 = por %p69, %p70
      %p73 = scmp.ne.s32.totalorder %s58, %s72
      %p74 = scmp.eq.s32.totalorder %s27, 0
      %p75 = por %p73, %p74
      %s77 = sadd.s32 %s76, 1
      %p80 = scmp.eq.s32.totalorder %s21, 1
      %p81 = scmp.ne.s32.totalorder %s76, %s78
      %p82 = scmp.eq.s32.totalorder %s21, 0
      %p83 = por %p81, %p82
      %p84 = scmp.ne.s32.totalorder %s76, %s78
      %p85 = scmp.eq.s32.totalorder %s26, 1
      %p86 = por %p84, %p85
      %p87 = scmp.ne.s32.totalorder %s78, %s79
      %p88 = scmp.eq.s32.totalorder %s26, 0
      %p89 = por %p87, %p88
      %p90 = scmp.ne.s32.totalorder %s78, %s79
      %p91 = scmp.eq.s32.totalorder %s27, 1
      %p92 = por %p90, %p91
      %p94 = scmp.ne.s32.totalorder %s79, %s93
      %p95 = scmp.eq.s32.totalorder %s27, 0
      %p96 = por %p94, %p95
      %s98 = sadd.s32 %s97, 1
      %p101 = scmp.eq.s32.totalorder %s21, 1
      %p102 = scmp.ne.s32.totalorder %s97, %s99
      %p103 = scmp.eq.s32.totalorder %s21, 0
      %p104 = por %p102, %p103
      %p105 = scmp.ne.s32.totalorder %s97, %s99
      %p106 = scmp.eq.s32.totalorder %s26, 1
      %p107 = por %p105, %p106
      %p108 = scmp.ne.s32.totalorder %s99, %s100
      %p109 = scmp.eq.s32.totalorder %s26, 0
      %p110 = por %p108, %p109
      %p111 = scmp.ne.s32.totalorder %s99, %s100
      %p112 = scmp.eq.s32.totalorder %s27, 1
      %p113 = por %p111, %p112
      %p115 = scmp.ne.s32.totalorder %s100, %s114
      %p116 = scmp.eq.s32.totalorder %s27, 0
      %p117 = por %p115, %p116
      %s119 = sadd.s32 %s118, 1
      %p122 = scmp.eq.s32.totalorder %s21, 1
      %p123 = scmp.ne.s32.totalorder %s118, %s120
      %p124 = scmp.eq.s32.totalorder %s21, 0
      %p125 = por %p123, %p124
      %p126 = scmp.ne.s32.totalorder %s118, %s120
      %p127 = scmp.eq.s32.totalorder %s26, 1
      %p128 = por %p126, %p127
      %p129 = scmp.ne.s32.totalorder %s120, %s121
      %p130 = scmp.eq.s32.totalorder %s26, 0
      %p131 = por %p129, %p130
      %p132 = scmp.ne.s32.totalorder %s120, %s121
      %p133 = scmp.eq.s32.totalorder %s27, 1
      %p134 = por %p132, %p133
      %p136 = scmp.ne.s32.totalorder %s121, %s135
      %p137 = scmp.eq.s32.totalorder %s27, 0
      %p138 = por %p136, %p137
      %s140 = sadd.s32 %s139, 1
      %p143 = scmp.eq.s32.totalorder %s21, 1
      %p144 = scmp.ne.s32.totalorder %s139, %s141
      %p145 = scmp.eq.s32.totalorder %s21, 0
      %p146 = por %p144, %p145
      %p147 = scmp.ne.s32.totalorder %s139, %s141
      %p148 = scmp.eq.s32.totalorder %s26, 1
      %p149 = por %p147, %p148
      %p150 = scmp.ne.s32.totalorder %s141, %s142
      %p151 = scmp.eq.s32.totalorder %s26, 0
      %p152 = por %p150, %p151
      %p153 = scmp.ne.s32.totalorder %s141, %s142
      %p154 = scmp.eq.s32.totalorder %s27, 1
      %p155 = por %p153, %p154
      %p157 = scmp.ne.s32.totalorder %s142, %s156
      %p158 = scmp.eq.s32.totalorder %s27, 0
      %p159 = por %p157, %p158
      %s161 = sadd.s32 %s160, 1
      %p164 = scmp.eq.s32.totalorder %s21, 1
      %p165 = scmp.ne.s32.totalorder %s160, %s162
      %p166 = scmp.eq.s32.totalorder %s21, 0
      %p167 = por %p165, %p166
      %p168 = scmp.ne.s32.totalorder %s160, %s162
      %p169 = scmp.eq.s32.totalorder %s26, 1
      %p170 = por %p168, %p169
      %p171 = scmp.ne.s32.totalorder %s162, %s163
      %p172 = scmp.eq.s32.totalorder %s26, 0
      %p173 = por %p171, %p172
      %p174 = scmp.ne.s32.totalorder %s162, %s163
      %p175 = scmp.eq.s32.totalorder %s27, 1
      %p176 = por %p174, %p175
      %p178 = scmp.ne.s32.totalorder %s163, %s177
      %p179 = scmp.eq.s32.totalorder %s27, 0
      %p180 = por %p178, %p179
      %s182 = sadd.s32 %s181, 1
      %p185 = scmp.eq.s32.totalorder %s21, 1
      %p186 = scmp.ne.s32.totalorder %s181, %s183
      %p187 = scmp.eq.s32.totalorder %s21, 0
      %p188 = por %p186, %p187
      %p189 = scmp.ne.s32.totalorder %s181, %s183
      %p190 = scmp.eq.s32.totalorder %s26, 1
      %p191 = por %p189, %p190
      %p192 = scmp.ne.s32.totalorder %s183, %s184
      %p193 = scmp.eq.s32.totalorder %s26, 0
      %p194 = por %p192, %p193
      %p195 = scmp.ne.s32.totalorder %s183, %s184
      %p196 = scmp.eq.s32.totalorder %s27, 1
      %p197 = por %p195, %p196
      %p199 = scmp.ne.s32.totalorder %s184, %s198
      %p200 = scmp.eq.s32.totalorder %s27, 0
      %p201 = por %p199, %p200
      %s203 = sadd.s32 %s202, 1
      %p206 = scmp.eq.s32.totalorder %s21, 1
      %p207 = scmp.ne.s32.totalorder %s202, %s204
      %p208 = scmp.eq.s32.totalorder %s21, 0
      %p209 = por %p207, %p208
      %p210 = scmp.ne.s32.totalorder %s202, %s204
      %p211 = scmp.eq.s32.totalorder %s26, 1
      %p212 = por %p210, %p211
      %p213 = scmp.ne.s32.totalorder %s204, %s205
      %p214 = scmp.eq.s32.totalorder %s26, 0
      %p215 = por %p213, %p214
      %p216 = scmp.ne.s32.totalorder %s204, %s205
      %p217 = scmp.eq.s32.totalorder %s27, 1
      %p218 = por %p216, %p217
      %p220 = scmp.ne.s32.totalorder %s205, %s219
      %p221 = scmp.eq.s32.totalorder %s27, 0
      %p222 = por %p220, %p221
      %s224 = sadd.s32 %s223, 1
      %p227 = scmp.eq.s32.totalorder %s21, 1
      %p228 = scmp.ne.s32.totalorder %s223, %s225
      %p229 = scmp.eq.s32.totalorder %s21, 0
      %p230 = por %p228, %p229
      %p231 = scmp.ne.s32.totalorder %s223, %s225
      %p232 = scmp.eq.s32.totalorder %s26, 1
      %p233 = por %p231, %p232
      %p234 = scmp.ne.s32.totalorder %s225, %s226
      %p235 = scmp.eq.s32.totalorder %s26, 0
      %p236 = por %p234, %p235
      %p237 = scmp.ne.s32.totalorder %s225, %s226
      %p238 = scmp.eq.s32.totalorder %s27, 1
      %p239 = por %p237, %p238
      %p241 = scmp.ne.s32.totalorder %s226, %s240
      %p242 = scmp.eq.s32.totalorder %s27, 0
      %p243 = por %p241, %p242
      %s245 = sadd.s32 %s244, 1
      %p248 = scmp.eq.s32.totalorder %s21, 1
      %p249 = scmp.ne.s32.totalorder %s244, %s246
      %p250 = scmp.eq.s32.totalorder %s21, 0
      %p251 = por %p249, %p250
      %p252 = scmp.ne.s32.totalorder %s244, %s246
      %p253 = scmp.eq.s32.totalorder %s26, 1
      %p254 = por %p252, %p253
      %p255 = scmp.ne.s32.totalorder %s246, %s247
      %p256 = scmp.eq.s32.totalorder %s26, 0
      %p257 = por %p255, %p256
      %p258 = scmp.ne.s32.totalorder %s246, %s247
      %p259 = scmp.eq.s32.totalorder %s27, 1
      %p260 = por %p258, %p259
      %p262 = scmp.ne.s32.totalorder %s247, %s261
      %p263 = scmp.eq.s32.totalorder %s27, 0
      %p264 = por %p262, %p263
      %s266 = sadd.s32 %s265, 1
      %p269 = scmp.eq.s32.totalorder %s21, 1
      %p270 = scmp.ne.s32.totalorder %s265, %s267
      %p271 = scmp.eq.s32.totalorder %s21, 0
      %p272 = por %p270, %p271
      %p273 = scmp.ne.s32.totalorder %s265, %s267
      %p274 = scmp.eq.s32.totalorder %s26, 1
      %p275 = por %p273, %p274
      %p276 = scmp.ne.s32.totalorder %s267, %s268
      %p277 = scmp.eq.s32.totalorder %s26, 0
      %p278 = por %p276, %p277
      %p279 = scmp.ne.s32.totalorder %s267, %s268
      %p280 = scmp.eq.s32.totalorder %s27, 1
      %p281 = por %p279, %p280
      %p283 = scmp.ne.s32.totalorder %s268, %s282
      %p284 = scmp.eq.s32.totalorder %s27, 0
      %p285 = por %p283, %p284
      %s286 = ssub.s32 %s21, %s28
      %p287 = scmp.eq.s32.totalorder %s286, 0
      %s289 = sadd.s32 %s288, 1
      %s290 = scalar_select %p287, %s288, %s289
      %p293 = pneg %p287
      %p294 = scmp.eq.s32.totalorder %s21, 1
      %p295 = por %p293, %p294
      %p296 = scmp.ne.s32.totalorder %s288, %s291
      %p297 = scmp.eq.s32.totalorder %s21, 0
      %p298 = por %p296, %p297
      %p299 = scmp.ne.s32.totalorder %s288, %s291
      %p300 = scmp.eq.s32.totalorder %s26, 1
      %p301 = por %p299, %p300
      %p302 = scmp.ne.s32.totalorder %s291, %s292
      %p303 = scmp.eq.s32.totalorder %s26, 0
      %p304 = por %p302, %p303
      %p305 = scmp.ne.s32.totalorder %s291, %s292
      %p306 = scmp.eq.s32.totalorder %s27, 1
      %p307 = por %p305, %p306
      %p309 = scmp.ne.s32.totalorder %s292, %s308
      %p310 = scmp.eq.s32.totalorder %s27, 0
      %p311 = por %p309, %p310
      %p312 = scmp.le.s32.totalorder 1, %s21
      %p313 = scmp.lt.s32.totalorder %s21, 3
      %p314 = pnand %p312, %p313
      %p315 = pneg %p314
      // Predicated region
      $region9: #{image_model_forward.1} parent=5 // pred_check
        _
      $region10: #{image_model_forward.1} parent=5 // pred_check_branch
        %317 = sbr.rel (%p314) target = $region12
      $region11: #{image_model_forward.1} parent=5 // pred_region
        %s318 = ssub.s32 %s21, 1
        // Predicated region
        $region13: #{image_model_forward.1} parent=11 // pred_check
          %p319 = pneg %p68
        $region14: #{image_model_forward.1} parent=11 // pred_check_branch
          %321 = sbr.rel (%p319) target = $region16
        $region15: #{image_model_forward.1} parent=11 // pred_region
          _
        $region16: #{image_model_forward.1} parent=11 // pred_fallthru
          _
        // Predicated region
        $region17: #{image_model_forward.1} parent=11 // pred_check
          %p322 = pneg %p89
        $region18: #{image_model_forward.1} parent=11 // pred_check_branch
          %324 = sbr.rel (%p322) target = $region20
        $region19: #{image_model_forward.1} parent=11 // pred_region
          _
        $region20: #{image_model_forward.1} parent=11 // pred_fallthru
          _
        // Predicated region
        $region21: #{image_model_forward.1} parent=11 // pred_check
          %p325 = pneg %p110
        $region22: #{image_model_forward.1} parent=11 // pred_check_branch
          %327 = sbr.rel (%p325) target = $region24
        $region23: #{image_model_forward.1} parent=11 // pred_region
          _
        $region24: #{image_model_forward.1} parent=11 // pred_fallthru
          _
        // Predicated region
        $region25: #{image_model_forward.1} parent=11 // pred_check
          %p328 = pneg %p131
        $region26: #{image_model_forward.1} parent=11 // pred_check_branch
          %330 = sbr.rel (%p328) target = $region28
        $region27: #{image_model_forward.1} parent=11 // pred_region
          _
        $region28: #{image_model_forward.1} parent=11 // pred_fallthru
          _
        // Predicated region
        $region29: #{image_model_forward.1} parent=11 // pred_check
          %p331 = pneg %p152
        $region30: #{image_model_forward.1} parent=11 // pred_check_branch
          %333 = sbr.rel (%p331) target = $region32
        $region31: #{image_model_forward.1} parent=11 // pred_region
          _
        $region32: #{image_model_forward.1} parent=11 // pred_fallthru
          _
        // Predicated region
        $region33: #{image_model_forward.1} parent=11 // pred_check
          %p334 = pneg %p173
        $region34: #{image_model_forward.1} parent=11 // pred_check_branch
          %336 = sbr.rel (%p334) target = $region36
        $region35: #{image_model_forward.1} parent=11 // pred_region
          _
        $region36: #{image_model_forward.1} parent=11 // pred_fallthru
          _
        // Predicated region
        $region37: #{image_model_forward.1} parent=11 // pred_check
          %p337 = pneg %p194
        $region38: #{image_model_forward.1} parent=11 // pred_check_branch
          %339 = sbr.rel (%p337) target = $region40
        $region39: #{image_model_forward.1} parent=11 // pred_region
          _
        $region40: #{image_model_forward.1} parent=11 // pred_fallthru
          _
        // Predicated region
        $region41: #{image_model_forward.1} parent=11 // pred_check
          %p340 = pneg %p215
        $region42: #{image_model_forward.1} parent=11 // pred_check_branch
          %342 = sbr.rel (%p340) target = $region44
        $region43: #{image_model_forward.1} parent=11 // pred_region
          _
        $region44: #{image_model_forward.1} parent=11 // pred_fallthru
          _
        // Predicated region
        $region45: #{image_model_forward.1} parent=11 // pred_check
          %p343 = pneg %p236
        $region46: #{image_model_forward.1} parent=11 // pred_check_branch
          %345 = sbr.rel (%p343) target = $region48
        $region47: #{image_model_forward.1} parent=11 // pred_region
          _
        $region48: #{image_model_forward.1} parent=11 // pred_fallthru
          _
        // Predicated region
        $region49: #{image_model_forward.1} parent=11 // pred_check
          %p346 = pneg %p257
        $region50: #{image_model_forward.1} parent=11 // pred_check_branch
          %348 = sbr.rel (%p346) target = $region52
        $region51: #{image_model_forward.1} parent=11 // pred_region
          _
        $region52: #{image_model_forward.1} parent=11 // pred_fallthru
          _
        // Predicated region
        $region53: #{image_model_forward.1} parent=11 // pred_check
          %p349 = pneg %p278
        $region54: #{image_model_forward.1} parent=11 // pred_check_branch
          %351 = sbr.rel (%p349) target = $region56
        $region55: #{image_model_forward.1} parent=11 // pred_region
          _
        $region56: #{image_model_forward.1} parent=11 // pred_fallthru
          _
      $region12: #{image_model_forward.1} parent=5 // pred_fallthru
        _
      %p352 = scmp.lt.s32.totalorder %s21, 2
      // Predicated region
      $region57: #{image_model_forward.1} parent=5 // pred_check
        %p353 = pneg %p352
      $region58: #{image_model_forward.1} parent=5 // pred_check_branch
        %355 = sbr.rel (%p353) target = $region60
      $region59: #{image_model_forward.1} parent=5 // pred_region
        // Predicated region
        $region61: #{image_model_forward.1} parent=59 // pred_check
          %p356 = pneg %p41
        $region62: #{image_model_forward.1} parent=59 // pred_check_branch
          %358 = sbr.rel (%p356) target = $region64
        $region63: #{image_model_forward.1} parent=59 // pred_region
          %p359 = scmp.lt.s32.totalorder %s21, 1
          %s360 = scalar_select %p359, %s21, 1
          %s361 = smul.addr %s360, 72
          %s362 = smul.addr %s361, 8
          %s363 = scalar_lea.vmem %s0, %s362
        $region64: #{image_model_forward.1} parent=59 // pred_fallthru
          _
      $region60: #{image_model_forward.1} parent=5 // pred_fallthru
        _
      %p364 = scmp.le.s32.totalorder 1, %s21
      %p365 = scmp.lt.s32.totalorder %s21, 3
      %p366 = pnand %p364, %p365
      %p367 = pneg %p366
      // Predicated region
      $region65: #{image_model_forward.1} parent=5 // pred_check
        _
      $region66: #{image_model_forward.1} parent=5 // pred_check_branch
        %369 = sbr.rel (%p366) target = $region68
      $region67: #{image_model_forward.1} parent=5 // pred_region
        %s370 = ssub.s32 %s21, 1
        %p371 = scmp.lt.s32.totalorder %s26, 1
        %s372 = scalar_select %p371, %s26, 1
        %s373 = smul.addr %s372, 72
        %s374 = smul.addr %s373, 8
        %s375 = scalar_lea.vmem %s0, %s374
        %p376 = pneg %p47
        %p377 = pneg %p44
        %p378 = pneg %p68
        %p379 = pneg %p65
        %p380 = pneg %p89
        %p381 = pneg %p86
        %p382 = pneg %p110
        %p383 = pneg %p107
        %p384 = pneg %p131
        %p385 = pneg %p128
        %p386 = pneg %p152
        %p387 = pneg %p149
        %p388 = pneg %p173
        %p389 = pneg %p170
        %p390 = pneg %p194
        %p391 = pneg %p191
        %p392 = pneg %p215
        %p393 = pneg %p212
        %p394 = pneg %p236
        %p395 = pneg %p233
        %p396 = pneg %p257
        %p397 = pneg %p254
        %p398 = pneg %p278
        %p399 = pneg %p275
        %p400 = pneg %p304
        %p401 = pneg %p301
        %s402 = sand.u32 %s291, 1
        %s403 = scalar_lea.sflag [#allocation6], %s402
        %s404 = sand.u32 %s291, 1
        %s405 = scalar_lea.vmem [#allocation5], %s404
        %p406 = scmp.lt.s32.totalorder %s26, 1
        %s407 = scalar_select %p406, %s26, 1
        %s408 = smul.addr %s407, 72
        %s409 = smul.addr %s408, 8
        %s410 = scalar_lea.vmem %s0, %s409
        %v411 = vld [vmem:[%s410] sm:$0xff]
        %v412 = vld [vmem:[%s410 + $0x8] sm:$0xff]
        %v413 = vld [vmem:[%s410 + $0x10] sm:$0xff]
        %v414 = vld [vmem:[%s410 + $0x18] sm:$0xff]
        %v415 = vld [vmem:[%s410 + $0x20] sm:$0xff]
        %v416 = vld [vmem:[%s410 + $0x28] sm:$0xff]
        %v417 = vld [vmem:[%s410 + $0x30] sm:$0xff]
        %v418 = vld [vmem:[%s410 + $0x38] sm:$0xff]
        %v419 = vld [vmem:[%s410 + $0x40] sm:$0xff]
        %v420 = vld [vmem:[%s410 + $0x48] sm:$0xff]
        %v421 = vld [vmem:[%s410 + $0x50] sm:$0xff]
        %v422 = vld [vmem:[%s410 + $0x58] sm:$0xff]
        %v423 = vld [vmem:[%s410 + $0x60] sm:$0xff]
        %v424 = vld [vmem:[%s410 + $0x68] sm:$0xff]
        %v425 = vld [vmem:[%s410 + $0x70] sm:$0xff]
        %v426 = vld [vmem:[%s410 + $0x78] sm:$0xff]
        %v427 = vld [vmem:[%s410 + $0x80] sm:$0xff]
        %v428 = vld [vmem:[%s410 + $0x88] sm:$0xff]
        %v429 = vld [vmem:[%s410 + $0x90] sm:$0xff]
        %v430 = vld [vmem:[%s410 + $0x98] sm:$0xff]
        %v431 = vld [vmem:[%s410 + $0xa0] sm:$0xff]
        %v432 = vld [vmem:[%s410 + $0xa8] sm:$0xff]
        %v433 = vld [vmem:[%s410 + $0xb0] sm:$0xff]
        %v434 = vld [vmem:[%s410 + $0xb8] sm:$0xff]
        %v435 = vld [vmem:[%s410 + $0xc0] sm:$0xff]
        %v436 = vld [vmem:[%s410 + $0xc8] sm:$0xff]
        %v437 = vld [vmem:[%s410 + $0xd0] sm:$0xff]
        %v438 = vld [vmem:[%s410 + $0xd8] sm:$0xff]
        %v439 = vld [vmem:[%s410 + $0xe0] sm:$0xff]
        %v440 = vld [vmem:[%s410 + $0xe8] sm:$0xff]
        %v441 = vld [vmem:[%s410 + $0xf0] sm:$0xff]
        %v442 = vld [vmem:[%s410 + $0xf8] sm:$0xff]
        %v443 = vld [vmem:[%s410 + $0x100] sm:$0xff]
        %v444 = vld [vmem:[%s410 + $0x108] sm:$0xff]
        %v445 = vld [vmem:[%s410 + $0x110] sm:$0xff]
        %v446 = vld [vmem:[%s410 + $0x118] sm:$0xff]
        %v447 = vld [vmem:[%s410 + $0x120] sm:$0xff]
        %v448 = vld [vmem:[%s410 + $0x128] sm:$0xff]
        %v449 = vld [vmem:[%s410 + $0x130] sm:$0xff]
        %v450 = vld [vmem:[%s410 + $0x138] sm:$0xff]
        %v451 = vld [vmem:[%s410 + $0x140] sm:$0xff]
        %v452 = vld [vmem:[%s410 + $0x148] sm:$0xff]
        %v453 = vld [vmem:[%s410 + $0x150] sm:$0xff]
        %v454 = vld [vmem:[%s410 + $0x158] sm:$0xff]
        %v455 = vld [vmem:[%s410 + $0x160] sm:$0xff]
        %v456 = vld [vmem:[%s410 + $0x168] sm:$0xff]
        %v457 = vld [vmem:[%s410 + $0x170] sm:$0xff]
        %v458 = vld [vmem:[%s410 + $0x178] sm:$0xff]
        %v459 = vld [vmem:[%s410 + $0x180] sm:$0xff]
        %v460 = vld [vmem:[%s410 + $0x188] sm:$0xff]
        %v461 = vld [vmem:[%s410 + $0x190] sm:$0xff]
        %v462 = vld [vmem:[%s410 + $0x198] sm:$0xff]
        %v463 = vld [vmem:[%s410 + $0x1a0] sm:$0xff]
        %v464 = vld [vmem:[%s410 + $0x1a8] sm:$0xff]
        %v465 = vld [vmem:[%s410 + $0x1b0] sm:$0xff]
        %v466 = vld [vmem:[%s410 + $0x1b8] sm:$0xff]
        %v467 = vld [vmem:[%s410 + $0x1c0] sm:$0xff]
        %v468 = vld [vmem:[%s410 + $0x1c8] sm:$0xff]
        %v469 = vld [vmem:[%s410 + $0x1d0] sm:$0xff]
        %v470 = vld [vmem:[%s410 + $0x1d8] sm:$0xff]
        %v471 = vld [vmem:[%s410 + $0x1e0] sm:$0xff]
        %v472 = vld [vmem:[%s410 + $0x1e8] sm:$0xff]
        %v473 = vld [vmem:[%s410 + $0x1f0] sm:$0xff]
        %v474 = vld [vmem:[%s410 + $0x1f8] sm:$0xff]
        %v475 = vld [vmem:[%s410 + $0x200] sm:$0xff]
        %v476 = vld [vmem:[%s410 + $0x208] sm:$0xff]
        %v477 = vld [vmem:[%s410 + $0x210] sm:$0xff]
        %v478 = vld [vmem:[%s410 + $0x218] sm:$0xff]
        %v479 = vld [vmem:[%s410 + $0x220] sm:$0xff]
        %v480 = vld [vmem:[%s410 + $0x228] sm:$0xff]
        %v481 = vld [vmem:[%s410 + $0x230] sm:$0xff]
        %v482 = vld [vmem:[%s410 + $0x238] sm:$0xff]
        %v483 = vld [vmem:[%s1] sm:$0xff]
        %v484 = vld [vmem:[%s1 + $0x8] sm:$0xff]
        %v485 = vld [vmem:[%s1 + $0x10] sm:$0xff]
        %v486 = vld [vmem:[%s1 + $0x18] sm:$0x1]
        %v487 = vld [vmem:[%s2] sm:$0x1]
        %v489 = vperm.slane %v487, 0
        %vm491 = vcmask 203776
        %v493 = vsel %vm491, %v411, 0
        %v496 = vsel %vm491, %v412, 0
        %v499 = vsel %vm491, %v413, 0
        %v502 = vsel %vm491, %v414, 0
        %v505 = vsel %vm491, %v415, 0
        %v508 = vsel %vm491, %v416, 0
        %v511 = vsel %vm491, %v417, 0
        %v514 = vsel %vm491, %v418, 0
        %v517 = vsel %vm491, %v419, 0
        %v520 = vsel %vm491, %v420, 0
        %v523 = vsel %vm491, %v421, 0
        %v526 = vsel %vm491, %v422, 0
        %v529 = vsel %vm491, %v423, 0
        %v532 = vsel %vm491, %v424, 0
        %v535 = vsel %vm491, %v425, 0
        %v538 = vsel %vm491, %v426, 0
        %v541 = vsel %vm491, %v427, 0
        %v544 = vsel %vm491, %v428, 0
        %v547 = vsel %vm491, %v429, 0
        %v550 = vsel %vm491, %v430, 0
        %v553 = vsel %vm491, %v431, 0
        %v556 = vsel %vm491, %v432, 0
        %v559 = vsel %vm491, %v433, 0
        %v562 = vsel %vm491, %v434, 0
        %v565 = vsel %vm491, %v435, 0
        %v568 = vsel %vm491, %v436, 0
        %v571 = vsel %vm491, %v437, 0
        %v574 = vsel %vm491, %v438, 0
        %v577 = vsel %vm491, %v439, 0
        %v580 = vsel %vm491, %v440, 0
        %v583 = vsel %vm491, %v441, 0
        %v586 = vsel %vm491, %v442, 0
        %v589 = vsel %vm491, %v443, 0
        %v592 = vsel %vm491, %v444, 0
        %v595 = vsel %vm491, %v445, 0
        %v598 = vsel %vm491, %v446, 0
        %v601 = vsel %vm491, %v447, 0
        %v604 = vsel %vm491, %v448, 0
        %v607 = vsel %vm491, %v449, 0
        %v610 = vsel %vm491, %v450, 0
        %v613 = vsel %vm491, %v451, 0
        %v616 = vsel %vm491, %v452, 0
        %v619 = vsel %vm491, %v453, 0
        %v622 = vsel %vm491, %v454, 0
        %v625 = vsel %vm491, %v455, 0
        %v628 = vsel %vm491, %v456, 0
        %v631 = vsel %vm491, %v457, 0
        %v634 = vsel %vm491, %v458, 0
        %v637 = vsel %vm491, %v459, 0
        %v640 = vsel %vm491, %v460, 0
        %v643 = vsel %vm491, %v461, 0
        %v646 = vsel %vm491, %v462, 0
        %v649 = vsel %vm491, %v463, 0
        %v652 = vsel %vm491, %v464, 0
        %v655 = vsel %vm491, %v465, 0
        %v658 = vsel %vm491, %v466, 0
        %v661 = vsel %vm491, %v467, 0
        %v664 = vsel %vm491, %v468, 0
        %v667 = vsel %vm491, %v469, 0
        %v670 = vsel %vm491, %v470, 0
        %v673 = vsel %vm491, %v471, 0
        %v676 = vsel %vm491, %v472, 0
        %v679 = vsel %vm491, %v473, 0
        %v682 = vsel %vm491, %v474, 0
        %v685 = vsel %vm491, %v475, 0
        %v688 = vsel %vm491, %v476, 0
        %v691 = vsel %vm491, %v477, 0
        %v694 = vsel %vm491, %v478, 0
        %v697 = vsel %vm491, %v479, 0
        %v700 = vsel %vm491, %v480, 0
        %v703 = vsel %vm491, %v481, 0
        %v706 = vsel %vm491, %v482, 0
        %vm708 = vcmask 1040384
        %v710 = vsel %vm708, %v486, 0
        %712 = vmatpush.msra.mxu0 0.0
        %713 = vmatpush.msra.mxu0 0.0
        %714 = vmatpush.msra.mxu0 0.0
        %715 = vmatpush.msra.mxu0 0.0
        %716 = vmatpush.msra.mxu0 0.0
        %717 = vmatpush.msra.mxu0 0.0
        %718 = vmatpush.msra.mxu0 0.0
        %719 = vmatpush.msra.mxu0 0.0
        %720 = vmatpush.msra.mxu0 0.0
        %721 = vmatpush.msra.mxu0 0.0
        %722 = vmatpush.msra.mxu0 0.0
        %723 = vmatpush.msra.mxu0 0.0
        %724 = vmatpush.msra.mxu0 %v710
        %725 = vmatpush.msra.mxu0 %v485
        %726 = vmatpush.msra.mxu0 %v484
        %727 = vmatpush.msra.mxu0 %v483
        %728 = vmatmul.f32.gmra.mxu0 %v493
        %v729 = vpop.f32.mrf.mxu0
        %v730 = vadd.f32 %v489, %v729
        %731 = vmatmul.f32.gmra.mxu0 %v496
        %v732 = vpop.f32.mrf.mxu0
        %v733 = vadd.f32 %v489, %v732
        %734 = vmatmul.f32.gmra.mxu0 %v499
        %v735 = vpop.f32.mrf.mxu0
        %v736 = vadd.f32 %v489, %v735
        %737 = vmatmul.f32.gmra.mxu0 %v502
        %v738 = vpop.f32.mrf.mxu0
        %v739 = vadd.f32 %v489, %v738
        %740 = vmatmul.f32.gmra.mxu0 %v505
        %v741 = vpop.f32.mrf.mxu0
        %v742 = vadd.f32 %v489, %v741
        %743 = vmatmul.f32.gmra.mxu0 %v508
        %v744 = vpop.f32.mrf.mxu0
        %v745 = vadd.f32 %v489, %v744
        %746 = vmatmul.f32.gmra.mxu0 %v511
        %v747 = vpop.f32.mrf.mxu0
        %v748 = vadd.f32 %v489, %v747
        %749 = vmatmul.f32.gmra.mxu0 %v514
        %v750 = vpop.f32.mrf.mxu0
        %v751 = vadd.f32 %v489, %v750
        %752 = vmatmul.f32.gmra.mxu0 %v517
        %v753 = vpop.f32.mrf.mxu0
        %v754 = vadd.f32 %v489, %v753
        %755 = vmatmul.f32.gmra.mxu0 %v520
        %v756 = vpop.f32.mrf.mxu0
        %v757 = vadd.f32 %v489, %v756
        %758 = vmatmul.f32.gmra.mxu0 %v523
        %v759 = vpop.f32.mrf.mxu0
        %v760 = vadd.f32 %v489, %v759
        %761 = vmatmul.f32.gmra.mxu0 %v526
        %v762 = vpop.f32.mrf.mxu0
        %v763 = vadd.f32 %v489, %v762
        %764 = vmatmul.f32.gmra.mxu0 %v529
        %v765 = vpop.f32.mrf.mxu0
        %v766 = vadd.f32 %v489, %v765
        %767 = vmatmul.f32.gmra.mxu0 %v532
        %v768 = vpop.f32.mrf.mxu0
        %v769 = vadd.f32 %v489, %v768
        %770 = vmatmul.f32.gmra.mxu0 %v535
        %v771 = vpop.f32.mrf.mxu0
        %v772 = vadd.f32 %v489, %v771
        %773 = vmatmul.f32.gmra.mxu0 %v538
        %v774 = vpop.f32.mrf.mxu0
        %v775 = vadd.f32 %v489, %v774
        %776 = vmatmul.f32.gmra.mxu0 %v541
        %v777 = vpop.f32.mrf.mxu0
        %v778 = vadd.f32 %v489, %v777
        %779 = vmatmul.f32.gmra.mxu0 %v544
        %v780 = vpop.f32.mrf.mxu0
        %v781 = vadd.f32 %v489, %v780
        %782 = vmatmul.f32.gmra.mxu0 %v547
        %v783 = vpop.f32.mrf.mxu0
        %v784 = vadd.f32 %v489, %v783
        %785 = vmatmul.f32.gmra.mxu0 %v550
        %v786 = vpop.f32.mrf.mxu0
        %v787 = vadd.f32 %v489, %v786
        %788 = vmatmul.f32.gmra.mxu0 %v553
        %v789 = vpop.f32.mrf.mxu0
        %v790 = vadd.f32 %v489, %v789
        %791 = vmatmul.f32.gmra.mxu0 %v556
        %v792 = vpop.f32.mrf.mxu0
        %v793 = vadd.f32 %v489, %v792
        %794 = vmatmul.f32.gmra.mxu0 %v559
        %v795 = vpop.f32.mrf.mxu0
        %v796 = vadd.f32 %v489, %v795
        %797 = vmatmul.f32.gmra.mxu0 %v562
        %v798 = vpop.f32.mrf.mxu0
        %v799 = vadd.f32 %v489, %v798
        %800 = vmatmul.f32.gmra.mxu0 %v565
        %v801 = vpop.f32.mrf.mxu0
        %v802 = vadd.f32 %v489, %v801
        %803 = vmatmul.f32.gmra.mxu0 %v568
        %v804 = vpop.f32.mrf.mxu0
        %v805 = vadd.f32 %v489, %v804
        %806 = vmatmul.f32.gmra.mxu0 %v571
        %v807 = vpop.f32.mrf.mxu0
        %v808 = vadd.f32 %v489, %v807
        %809 = vmatmul.f32.gmra.mxu0 %v574
        %v810 = vpop.f32.mrf.mxu0
        %v811 = vadd.f32 %v489, %v810
        %812 = vmatmul.f32.gmra.mxu0 %v577
        %v813 = vpop.f32.mrf.mxu0
        %v814 = vadd.f32 %v489, %v813
        %815 = vmatmul.f32.gmra.mxu0 %v580
        %v816 = vpop.f32.mrf.mxu0
        %v817 = vadd.f32 %v489, %v816
        %818 = vmatmul.f32.gmra.mxu0 %v583
        %v819 = vpop.f32.mrf.mxu0
        %v820 = vadd.f32 %v489, %v819
        %821 = vmatmul.f32.gmra.mxu0 %v586
        %v822 = vpop.f32.mrf.mxu0
        %v823 = vadd.f32 %v489, %v822
        %824 = vmatmul.f32.gmra.mxu0 %v589
        %v825 = vpop.f32.mrf.mxu0
        %v826 = vadd.f32 %v489, %v825
        %827 = vmatmul.f32.gmra.mxu0 %v592
        %v828 = vpop.f32.mrf.mxu0
        %v829 = vadd.f32 %v489, %v828
        %830 = vmatmul.f32.gmra.mxu0 %v595
        %v831 = vpop.f32.mrf.mxu0
        %v832 = vadd.f32 %v489, %v831
        %833 = vmatmul.f32.gmra.mxu0 %v598
        %v834 = vpop.f32.mrf.mxu0
        %v835 = vadd.f32 %v489, %v834
        %836 = vmatmul.f32.gmra.mxu0 %v601
        %v837 = vpop.f32.mrf.mxu0
        %v838 = vadd.f32 %v489, %v837
        %839 = vmatmul.f32.gmra.mxu0 %v604
        %v840 = vpop.f32.mrf.mxu0
        %v841 = vadd.f32 %v489, %v840
        %842 = vmatmul.f32.gmra.mxu0 %v607
        %v843 = vpop.f32.mrf.mxu0
        %v844 = vadd.f32 %v489, %v843
        %845 = vmatmul.f32.gmra.mxu0 %v610
        %v846 = vpop.f32.mrf.mxu0
        %v847 = vadd.f32 %v489, %v846
        %848 = vmatmul.f32.gmra.mxu0 %v613
        %v849 = vpop.f32.mrf.mxu0
        %v850 = vadd.f32 %v489, %v849
        %851 = vmatmul.f32.gmra.mxu0 %v616
        %v852 = vpop.f32.mrf.mxu0
        %v853 = vadd.f32 %v489, %v852
        %854 = vmatmul.f32.gmra.mxu0 %v619
        %v855 = vpop.f32.mrf.mxu0
        %v856 = vadd.f32 %v489, %v855
        %857 = vmatmul.f32.gmra.mxu0 %v622
        %v858 = vpop.f32.mrf.mxu0
        %v859 = vadd.f32 %v489, %v858
        %860 = vmatmul.f32.gmra.mxu0 %v625
        %v861 = vpop.f32.mrf.mxu0
        %v862 = vadd.f32 %v489, %v861
        %863 = vmatmul.f32.gmra.mxu0 %v628
        %v864 = vpop.f32.mrf.mxu0
        %v865 = vadd.f32 %v489, %v864
        %866 = vmatmul.f32.gmra.mxu0 %v631
        %v867 = vpop.f32.mrf.mxu0
        %v868 = vadd.f32 %v489, %v867
        %869 = vmatmul.f32.gmra.mxu0 %v634
        %v870 = vpop.f32.mrf.mxu0
        %v871 = vadd.f32 %v489, %v870
        %872 = vmatmul.f32.gmra.mxu0 %v637
        %v873 = vpop.f32.mrf.mxu0
        %v874 = vadd.f32 %v489, %v873
        %875 = vmatmul.f32.gmra.mxu0 %v640
        %v876 = vpop.f32.mrf.mxu0
        %v877 = vadd.f32 %v489, %v876
        %878 = vmatmul.f32.gmra.mxu0 %v643
        %v879 = vpop.f32.mrf.mxu0
        %v880 = vadd.f32 %v489, %v879
        %881 = vmatmul.f32.gmra.mxu0 %v646
        %v882 = vpop.f32.mrf.mxu0
        %v883 = vadd.f32 %v489, %v882
        %884 = vmatmul.f32.gmra.mxu0 %v649
        %v885 = vpop.f32.mrf.mxu0
        %v886 = vadd.f32 %v489, %v885
        %887 = vmatmul.f32.gmra.mxu0 %v652
        %v888 = vpop.f32.mrf.mxu0
        %v889 = vadd.f32 %v489, %v888
        %890 = vmatmul.f32.gmra.mxu0 %v655
        %v891 = vpop.f32.mrf.mxu0
        %v892 = vadd.f32 %v489, %v891
        %893 = vmatmul.f32.gmra.mxu0 %v658
        %v894 = vpop.f32.mrf.mxu0
        %v895 = vadd.f32 %v489, %v894
        %896 = vmatmul.f32.gmra.mxu0 %v661
        %v897 = vpop.f32.mrf.mxu0
        %v898 = vadd.f32 %v489, %v897
        %899 = vmatmul.f32.gmra.mxu0 %v664
        %v900 = vpop.f32.mrf.mxu0
        %v901 = vadd.f32 %v489, %v900
        %902 = vmatmul.f32.gmra.mxu0 %v667
        %v903 = vpop.f32.mrf.mxu0
        %v904 = vadd.f32 %v489, %v903
        %905 = vmatmul.f32.gmra.mxu0 %v670
        %v906 = vpop.f32.mrf.mxu0
        %v907 = vadd.f32 %v489, %v906
        %908 = vmatmul.f32.gmra.mxu0 %v673
        %v909 = vpop.f32.mrf.mxu0
        %v910 = vadd.f32 %v489, %v909
        %911 = vmatmul.f32.gmra.mxu0 %v676
        %v912 = vpop.f32.mrf.mxu0
        %v913 = vadd.f32 %v489, %v912
        %914 = vmatmul.f32.gmra.mxu0 %v679
        %v915 = vpop.f32.mrf.mxu0
        %v916 = vadd.f32 %v489, %v915
        %917 = vmatmul.f32.gmra.mxu0 %v682
        %v918 = vpop.f32.mrf.mxu0
        %v919 = vadd.f32 %v489, %v918
        %920 = vmatmul.f32.gmra.mxu0 %v685
        %v921 = vpop.f32.mrf.mxu0
        %v922 = vadd.f32 %v489, %v921
        %923 = vmatmul.f32.gmra.mxu0 %v688
        %v924 = vpop.f32.mrf.mxu0
        %v925 = vadd.f32 %v489, %v924
        %926 = vmatmul.f32.gmra.mxu0 %v691
        %v927 = vpop.f32.mrf.mxu0
        %v928 = vadd.f32 %v489, %v927
        %929 = vmatmul.f32.gmra.mxu0 %v694
        %v930 = vpop.f32.mrf.mxu0
        %v931 = vadd.f32 %v489, %v930
        %932 = vmatmul.f32.gmra.mxu0 %v697
        %v933 = vpop.f32.mrf.mxu0
        %v934 = vadd.f32 %v489, %v933
        %935 = vmatmul.f32.gmra.mxu0 %v700
        %v936 = vpop.f32.mrf.mxu0
        %v937 = vadd.f32 %v489, %v936
        %938 = vmatmul.f32.gmra.mxu0 %v703
        %v939 = vpop.f32.mrf.mxu0
        %v940 = vadd.f32 %v489, %v939
        %941 = vmatmul.f32.gmra.mxu0 %v706
        %v942 = vpop.f32.mrf.mxu0
        %v943 = vadd.f32 %v489, %v942
        %944 = vdwg.mxu0
        %v945 = vmax.f32 %v730, 0.0
        %v946 = vmax.f32 %v733, 0.0
        %v947 = vmax.f32 %v736, 0.0
        %v948 = vmax.f32 %v739, 0.0
        %v949 = vmax.f32 %v742, 0.0
        %v950 = vmax.f32 %v745, 0.0
        %v951 = vmax.f32 %v748, 0.0
        %v952 = vmax.f32 %v751, 0.0
        %v953 = vmax.f32 %v754, 0.0
        %v954 = vmax.f32 %v757, 0.0
        %v955 = vmax.f32 %v760, 0.0
        %v956 = vmax.f32 %v763, 0.0
        %v957 = vmax.f32 %v766, 0.0
        %v958 = vmax.f32 %v769, 0.0
        %v959 = vmax.f32 %v772, 0.0
        %v960 = vmax.f32 %v775, 0.0
        %v961 = vmax.f32 %v778, 0.0
        %v962 = vmax.f32 %v781, 0.0
        %v963 = vmax.f32 %v784, 0.0
        %v964 = vmax.f32 %v787, 0.0
        %v965 = vmax.f32 %v790, 0.0
        %v966 = vmax.f32 %v793, 0.0
        %v967 = vmax.f32 %v796, 0.0
        %v968 = vmax.f32 %v799, 0.0
        %v969 = vmax.f32 %v802, 0.0
        %v970 = vmax.f32 %v805, 0.0
        %v971 = vmax.f32 %v808, 0.0
        %v972 = vmax.f32 %v811, 0.0
        %v973 = vmax.f32 %v814, 0.0
        %v974 = vmax.f32 %v817, 0.0
        %v975 = vmax.f32 %v820, 0.0
        %v976 = vmax.f32 %v823, 0.0
        %v977 = vmax.f32 %v826, 0.0
        %v978 = vmax.f32 %v829, 0.0
        %v979 = vmax.f32 %v832, 0.0
        %v980 = vmax.f32 %v835, 0.0
        %v981 = vmax.f32 %v838, 0.0
        %v982 = vmax.f32 %v841, 0.0
        %v983 = vmax.f32 %v844, 0.0
        %v984 = vmax.f32 %v847, 0.0
        %v985 = vmax.f32 %v850, 0.0
        %v986 = vmax.f32 %v853, 0.0
        %v987 = vmax.f32 %v856, 0.0
        %v988 = vmax.f32 %v859, 0.0
        %v989 = vmax.f32 %v862, 0.0
        %v990 = vmax.f32 %v865, 0.0
        %v991 = vmax.f32 %v868, 0.0
        %v992 = vmax.f32 %v871, 0.0
        %v993 = vmax.f32 %v874, 0.0
        %v994 = vmax.f32 %v877, 0.0
        %v995 = vmax.f32 %v880, 0.0
        %v996 = vmax.f32 %v883, 0.0
        %v997 = vmax.f32 %v886, 0.0
        %v998 = vmax.f32 %v889, 0.0
        %v999 = vmax.f32 %v892, 0.0
        %v1000 = vmax.f32 %v895, 0.0
        %v1001 = vmax.f32 %v898, 0.0
        %v1002 = vmax.f32 %v901, 0.0
        %v1003 = vmax.f32 %v904, 0.0
        %v1004 = vmax.f32 %v907, 0.0
        %v1005 = vmax.f32 %v910, 0.0
        %v1006 = vmax.f32 %v913, 0.0
        %v1007 = vmax.f32 %v916, 0.0
        %v1008 = vmax.f32 %v919, 0.0
        %v1009 = vmax.f32 %v922, 0.0
        %v1010 = vmax.f32 %v925, 0.0
        %v1011 = vmax.f32 %v928, 0.0
        %v1012 = vmax.f32 %v931, 0.0
        %v1013 = vmax.f32 %v934, 0.0
        %v1014 = vmax.f32 %v937, 0.0
        %v1015 = vmax.f32 %v940, 0.0
        %v1016 = vmax.f32 %v943, 0.0
        %v1017 = vmax.f32 %v945, %v963
        %v1018 = vmax.f32 %v946, %v964
        %v1019 = vmax.f32 %v947, %v965
        %v1020 = vmax.f32 %v948, %v966
        %v1021 = vmax.f32 %v949, %v967
        %v1022 = vmax.f32 %v950, %v968
        %v1023 = vmax.f32 %v951, %v969
        %v1024 = vmax.f32 %v952, %v970
        %v1025 = vmax.f32 %v953, %v971
        %v1026 = vmax.f32 %v954, %v972
        %v1027 = vmax.f32 %v955, %v973
        %v1028 = vmax.f32 %v956, %v974
        %v1029 = vmax.f32 %v957, %v975
        %v1030 = vmax.f32 %v958, %v976
        %v1031 = vmax.f32 %v959, %v977
        %v1032 = vmax.f32 %v960, %v978
        %v1033 = vmax.f32 %v961, %v979
        %v1034 = vmax.f32 %v962, %v980
        %v1035 = vmax.f32 %v981, %v999
        %v1036 = vmax.f32 %v982, %v1000
        %v1037 = vmax.f32 %v983, %v1001
        %v1038 = vmax.f32 %v984, %v1002
        %v1039 = vmax.f32 %v985, %v1003
        %v1040 = vmax.f32 %v986, %v1004
        %v1041 = vmax.f32 %v987, %v1005
        %v1042 = vmax.f32 %v988, %v1006
        %v1043 = vmax.f32 %v989, %v1007
        %v1044 = vmax.f32 %v990, %v1008
        %v1045 = vmax.f32 %v991, %v1009
        %v1046 = vmax.f32 %v992, %v1010
        %v1047 = vmax.f32 %v993, %v1011
        %v1048 = vmax.f32 %v994, %v1012
        %v1049 = vmax.f32 %v995, %v1013
        %v1050 = vmax.f32 %v996, %v1014
        %v1051 = vmax.f32 %v997, %v1015
        %v1052 = vmax.f32 %v998, %v1016
        %v1053 = vmax.f32 %v1017, %v1035
        %v1054 = vmax.f32 %v1018, %v1036
        %v1055 = vmax.f32 %v1019, %v1037
        %v1056 = vmax.f32 %v1020, %v1038
        %v1057 = vmax.f32 %v1021, %v1039
        %v1058 = vmax.f32 %v1022, %v1040
        %v1059 = vmax.f32 %v1023, %v1041
        %v1060 = vmax.f32 %v1024, %v1042
        %v1061 = vmax.f32 %v1025, %v1043
        %v1062 = vmax.f32 %v1026, %v1044
        %v1063 = vmax.f32 %v1027, %v1045
        %v1064 = vmax.f32 %v1028, %v1046
        %v1065 = vmax.f32 %v1029, %v1047
        %v1066 = vmax.f32 %v1030, %v1048
        %v1067 = vmax.f32 %v1031, %v1049
        %v1068 = vmax.f32 %v1032, %v1050
        %v1069 = vmax.f32 %v1033, %v1051
        %v1070 = vmax.f32 %v1034, %v1052
        %v1071 = vld [vmem:[%s3] sm:$0x1]
        %v1073 = vperm.slane %v1071, 0
        %v1075 = vmul.f32 %v1053, %v1073
        %v1076 = vmul.f32 %v1054, %v1073
        %v1077 = vmul.f32 %v1055, %v1073
        %v1078 = vmul.f32 %v1056, %v1073
        %v1079 = vmul.f32 %v1057, %v1073
        %v1080 = vmul.f32 %v1058, %v1073
        %v1081 = vmul.f32 %v1059, %v1073
        %v1082 = vmul.f32 %v1060, %v1073
        %v1083 = vmul.f32 %v1061, %v1073
        %v1084 = vmul.f32 %v1062, %v1073
        %v1085 = vmul.f32 %v1063, %v1073
        %v1086 = vmul.f32 %v1064, %v1073
        %v1087 = vmul.f32 %v1065, %v1073
        %v1088 = vmul.f32 %v1066, %v1073
        %v1089 = vmul.f32 %v1067, %v1073
        %v1090 = vmul.f32 %v1068, %v1073
        %v1091 = vmul.f32 %v1069, %v1073
        %v1092 = vmul.f32 %v1070, %v1073
        %v1093 = vld [vmem:[%s4] sm:$0x1]
        %v1095 = vperm.slane %v1093, 0
        %v1097 = vadd.f32 %v1075, %v1095
        %v1098 = vadd.f32 %v1076, %v1095
        %v1099 = vadd.f32 %v1077, %v1095
        %v1100 = vadd.f32 %v1078, %v1095
        %v1101 = vadd.f32 %v1079, %v1095
        %v1102 = vadd.f32 %v1080, %v1095
        %v1103 = vadd.f32 %v1081, %v1095
        %v1104 = vadd.f32 %v1082, %v1095
        %v1105 = vadd.f32 %v1083, %v1095
        %v1106 = vadd.f32 %v1084, %v1095
        %v1107 = vadd.f32 %v1085, %v1095
        %v1108 = vadd.f32 %v1086, %v1095
        %v1109 = vadd.f32 %v1087, %v1095
        %v1110 = vadd.f32 %v1088, %v1095
        %v1111 = vadd.f32 %v1089, %v1095
        %v1112 = vadd.f32 %v1090, %v1095
        %v1113 = vadd.f32 %v1091, %v1095
        %v1114 = vadd.f32 %v1092, %v1095
        %vm1115 = vcmask 261120
        %1116 = vst.msk [vmem:[#allocation2] sm:$0xff] %vm1115, %v1097
        %1117 = vst.msk [vmem:[#allocation2 + $0x8] sm:$0xff] %vm1115, %v1098
        %1118 = vst.msk [vmem:[#allocation2 + $0x10] sm:$0xff] %vm1115, %v1099
        %1119 = vst.msk [vmem:[#allocation2 + $0x18] sm:$0xff] %vm1115, %v1100
        %1120 = vst.msk [vmem:[#allocation2 + $0x20] sm:$0xff] %vm1115, %v1101
        %1121 = vst.msk [vmem:[#allocation2 + $0x28] sm:$0xff] %vm1115, %v1102
        %1122 = vst.msk [vmem:[#allocation2 + $0x30] sm:$0xff] %vm1115, %v1103
        %1123 = vst.msk [vmem:[#allocation2 + $0x38] sm:$0xff] %vm1115, %v1104
        %1124 = vst.msk [vmem:[#allocation2 + $0x40] sm:$0xff] %vm1115, %v1105
        %1125 = vst.msk [vmem:[#allocation2 + $0x48] sm:$0xff] %vm1115, %v1106
        %1126 = vst.msk [vmem:[#allocation2 + $0x50] sm:$0xff] %vm1115, %v1107
        %1127 = vst.msk [vmem:[#allocation2 + $0x58] sm:$0xff] %vm1115, %v1108
        %1128 = vst.msk [vmem:[#allocation2 + $0x60] sm:$0xff] %vm1115, %v1109
        %1129 = vst.msk [vmem:[#allocation2 + $0x68] sm:$0xff] %vm1115, %v1110
        %1130 = vst.msk [vmem:[#allocation2 + $0x70] sm:$0xff] %vm1115, %v1111
        %1131 = vst.msk [vmem:[#allocation2 + $0x78] sm:$0xff] %vm1115, %v1112
        %1132 = vst.msk [vmem:[#allocation2 + $0x80] sm:$0xff] %vm1115, %v1113
        %1133 = vst.msk [vmem:[#allocation2 + $0x88] sm:$0xff] %vm1115, %v1114
        %1134 = vst.msk [vmem:[#allocation2 + $0x90] sm:$0xff] %vm1115, 0.0
        %1135 = vst.msk [vmem:[#allocation2 + $0x98] sm:$0xff] %vm1115, 0.0
        %1136 = vst.msk [vmem:[#allocation2 + $0xa0] sm:$0xff] %vm1115, 0.0
        %1137 = vst.msk [vmem:[#allocation2 + $0xa8] sm:$0xff] %vm1115, 0.0
        %1138 = vst.msk [vmem:[#allocation2 + $0xb0] sm:$0xff] %vm1115, 0.0
        %1139 = vst.msk [vmem:[#allocation2 + $0xb8] sm:$0xff] %vm1115, 0.0
        %1140 = vst.msk [vmem:[#allocation2 + $0xc0] sm:$0xff] %vm1115, 0.0
        %v1141 = vld [vmem:[#allocation2] sm:$0xff]
        %v1142 = vld [vmem:[#allocation2 + $0x8] sm:$0xff]
        %v1143 = vld [vmem:[#allocation2 + $0x10] sm:$0xff]
        %v1144 = vld [vmem:[#allocation2 + $0x18] sm:$0xff]
        %v1145 = vld [vmem:[#allocation2 + $0x20] sm:$0xff]
        %v1146 = vld [vmem:[#allocation2 + $0x28] sm:$0xff]
        %v1147 = vld [vmem:[#allocation2 + $0x30] sm:$0xff]
        %v1148 = vld [vmem:[#allocation2 + $0x38] sm:$0xff]
        %v1149 = vld [vmem:[#allocation2 + $0x40] sm:$0xff]
        %v1150 = vld [vmem:[#allocation2 + $0x48] sm:$0xff]
        %v1151 = vld [vmem:[#allocation2 + $0x50] sm:$0xff]
        %v1152 = vld [vmem:[#allocation2 + $0x58] sm:$0xff]
        %v1153 = vld [vmem:[#allocation2 + $0x60] sm:$0xff]
        %v1154 = vld [vmem:[#allocation2 + $0x68] sm:$0xff]
        %v1155 = vld [vmem:[#allocation2 + $0x70] sm:$0xff]
        %v1156 = vld [vmem:[#allocation2 + $0x78] sm:$0xff]
        %v1157 = vld [vmem:[#allocation2 + $0x80] sm:$0xff]
        %v1158 = vld [vmem:[#allocation2 + $0x88] sm:$0xff]
        %v1159 = vld [vmem:[%s5] sm:$0xff]
        %v1160 = vld [vmem:[%s5 + $0x8] sm:$0xff]
        %v1161 = vld [vmem:[%s5 + $0x10] sm:$0xff]
        %v1162 = vld [vmem:[%s5 + $0x18] sm:$0xff]
        %v1163 = vld [vmem:[#allocation2 + $0x1] sm:$0xff]
        %v1164 = vld [vmem:[#allocation2 + $0x9] sm:$0xff]
        %v1165 = vld [vmem:[#allocation2 + $0x11] sm:$0xff]
        %v1166 = vld [vmem:[#allocation2 + $0x19] sm:$0xff]
        %v1167 = vld [vmem:[#allocation2 + $0x21] sm:$0xff]
        %v1168 = vld [vmem:[#allocation2 + $0x29] sm:$0xff]
        %v1169 = vld [vmem:[#allocation2 + $0x31] sm:$0xff]
        %v1170 = vld [vmem:[#allocation2 + $0x39] sm:$0xff]
        %v1171 = vld [vmem:[#allocation2 + $0x41] sm:$0xff]
        %v1172 = vld [vmem:[#allocation2 + $0x49] sm:$0xff]
        %v1173 = vld [vmem:[#allocation2 + $0x51] sm:$0xff]
        %v1174 = vld [vmem:[#allocation2 + $0x59] sm:$0xff]
        %v1175 = vld [vmem:[#allocation2 + $0x61] sm:$0xff]
        %v1176 = vld [vmem:[#allocation2 + $0x69] sm:$0xff]
        %v1177 = vld [vmem:[#allocation2 + $0x71] sm:$0xff]
        %v1178 = vld [vmem:[#allocation2 + $0x79] sm:$0xff]
        %v1179 = vld [vmem:[#allocation2 + $0x81] sm:$0xff]
        %v1180 = vld [vmem:[#allocation2 + $0x89] sm:$0xff]
        %s1181 = scalar_lea.vmem %s5, 32
        %v1182 = vld [vmem:[%s1181] sm:$0xff]
        %v1183 = vld [vmem:[%s1181 + $0x8] sm:$0xff]
        %v1184 = vld [vmem:[%s1181 + $0x10] sm:$0xff]
        %v1185 = vld [vmem:[%s1181 + $0x18] sm:$0xff]
        %v1187 = vsel %vm1115, %v1163, 0
        %v1190 = vsel %vm1115, %v1164, 0
        %v1193 = vsel %vm1115, %v1165, 0
        %v1196 = vsel %vm1115, %v1166, 0
        %v1199 = vsel %vm1115, %v1167, 0
        %v1202 = vsel %vm1115, %v1168, 0
        %v1205 = vsel %vm1115, %v1169, 0
        %v1208 = vsel %vm1115, %v1170, 0
        %v1211 = vsel %vm1115, %v1171, 0
        %v1214 = vsel %vm1115, %v1172, 0
        %v1217 = vsel %vm1115, %v1173, 0
        %v1220 = vsel %vm1115, %v1174, 0
        %v1223 = vsel %vm1115, %v1175, 0
        %v1226 = vsel %vm1115, %v1176, 0
        %v1229 = vsel %vm1115, %v1177, 0
        %v1232 = vsel %vm1115, %v1178, 0
        %v1235 = vsel %vm1115, %v1179, 0
        %v1238 = vsel %vm1115, %v1180, 0
        %1240 = vmatpush.msra.mxu0 0.0
        %1241 = vmatpush.msra.mxu0 0.0
        %1242 = vmatpush.msra.mxu0 0.0
        %1243 = vmatpush.msra.mxu0 0.0
        %1244 = vmatpush.msra.mxu0 0.0
        %1245 = vmatpush.msra.mxu0 0.0
        %1246 = vmatpush.msra.mxu0 0.0
        %1247 = vmatpush.msra.mxu0 0.0
        %1248 = vmatpush.msra.mxu0 0.0
        %1249 = vmatpush.msra.mxu0 0.0
        %1250 = vmatpush.msra.mxu0 0.0
        %1251 = vmatpush.msra.mxu0 0.0
        %1252 = vmatpush.msra.mxu0 %v1185
        %1253 = vmatpush.msra.mxu0 %v1184
        %1254 = vmatpush.msra.mxu0 %v1183
        %1255 = vmatpush.msra.mxu0 %v1182
        %1256 = vmatmul.f32.gmra.mxu0 %v1187
        %v1257 = vpop.f32.mrf.mxu0
        %v1258 = vadd.f32 0.0, %v1257
        %1259 = vmatmul.f32.gmra.mxu0 %v1190
        %v1260 = vpop.f32.mrf.mxu0
        %v1261 = vadd.f32 0.0, %v1260
        %1262 = vmatmul.f32.gmra.mxu0 %v1193
        %v1263 = vpop.f32.mrf.mxu0
        %v1264 = vadd.f32 0.0, %v1263
        %1265 = vmatmul.f32.gmra.mxu0 %v1196
        %v1266 = vpop.f32.mrf.mxu0
        %v1267 = vadd.f32 0.0, %v1266
        %1268 = vmatmul.f32.gmra.mxu0 %v1199
        %v1269 = vpop.f32.mrf.mxu0
        %v1270 = vadd.f32 0.0, %v1269
        %1271 = vmatmul.f32.gmra.mxu0 %v1202
        %v1272 = vpop.f32.mrf.mxu0
        %v1273 = vadd.f32 0.0, %v1272
        %1274 = vmatmul.f32.gmra.mxu0 %v1205
        %v1275 = vpop.f32.mrf.mxu0
        %v1276 = vadd.f32 0.0, %v1275
        %1277 = vmatmul.f32.gmra.mxu0 %v1208
        %v1278 = vpop.f32.mrf.mxu0
        %v1279 = vadd.f32 0.0, %v1278
        %1280 = vmatmul.f32.gmra.mxu0 %v1211
        %v1281 = vpop.f32.mrf.mxu0
        %v1282 = vadd.f32 0.0, %v1281
        %1283 = vmatmul.f32.gmra.mxu0 %v1214
        %v1284 = vpop.f32.mrf.mxu0
        %v1285 = vadd.f32 0.0, %v1284
        %1286 = vmatmul.f32.gmra.mxu0 %v1217
        %v1287 = vpop.f32.mrf.mxu0
        %v1288 = vadd.f32 0.0, %v1287
        %1289 = vmatmul.f32.gmra.mxu0 %v1220
        %v1290 = vpop.f32.mrf.mxu0
        %v1291 = vadd.f32 0.0, %v1290
        %1292 = vmatmul.f32.gmra.mxu0 %v1223
        %v1293 = vpop.f32.mrf.mxu0
        %v1294 = vadd.f32 0.0, %v1293
        %1295 = vmatmul.f32.gmra.mxu0 %v1226
        %v1296 = vpop.f32.mrf.mxu0
        %v1297 = vadd.f32 0.0, %v1296
        %1298 = vmatmul.f32.gmra.mxu0 %v1229
        %v1299 = vpop.f32.mrf.mxu0
        %v1300 = vadd.f32 0.0, %v1299
        %1301 = vmatmul.f32.gmra.mxu0 %v1232
        %v1302 = vpop.f32.mrf.mxu0
        %v1303 = vadd.f32 0.0, %v1302
        %1304 = vmatmul.f32.gmra.mxu0 %v1235
        %v1305 = vpop.f32.mrf.mxu0
        %v1306 = vadd.f32 0.0, %v1305
        %1307 = vmatmul.f32.gmra.mxu0 %v1238
        %v1308 = vpop.f32.mrf.mxu0
        %v1309 = vadd.f32 0.0, %v1308
        %1310 = vdwg.mxu0
        %v1312 = vsel %vm1115, %v1141, 0
        %v1315 = vsel %vm1115, %v1142, 0
        %v1318 = vsel %vm1115, %v1143, 0
        %v1321 = vsel %vm1115, %v1144, 0
        %v1324 = vsel %vm1115, %v1145, 0
        %v1327 = vsel %vm1115, %v1146, 0
        %v1330 = vsel %vm1115, %v1147, 0
        %v1333 = vsel %vm1115, %v1148, 0
        %v1336 = vsel %vm1115, %v1149, 0
        %v1339 = vsel %vm1115, %v1150, 0
        %v1342 = vsel %vm1115, %v1151, 0
        %v1345 = vsel %vm1115, %v1152, 0
        %v1348 = vsel %vm1115, %v1153, 0
        %v1351 = vsel %vm1115, %v1154, 0
        %v1354 = vsel %vm1115, %v1155, 0
        %v1357 = vsel %vm1115, %v1156, 0
        %v1360 = vsel %vm1115, %v1157, 0
        %v1363 = vsel %vm1115, %v1158, 0
        %1365 = vmatpush.msra.mxu0 0.0
        %1366 = vmatpush.msra.mxu0 0.0
        %1367 = vmatpush.msra.mxu0 0.0
        %1368 = vmatpush.msra.mxu0 0.0
        %1369 = vmatpush.msra.mxu0 0.0
        %1370 = vmatpush.msra.mxu0 0.0
        %1371 = vmatpush.msra.mxu0 0.0
        %1372 = vmatpush.msra.mxu0 0.0
        %1373 = vmatpush.msra.mxu0 0.0
        %1374 = vmatpush.msra.mxu0 0.0
        %1375 = vmatpush.msra.mxu0 0.0
        %1376 = vmatpush.msra.mxu0 0.0
        %1377 = vmatpush.msra.mxu0 %v1162
        %1378 = vmatpush.msra.mxu0 %v1161
        %1379 = vmatpush.msra.mxu0 %v1160
        %1380 = vmatpush.msra.mxu0 %v1159
        %1381 = vmatmul.f32.gmra.mxu0 %v1312
        %v1382 = vpop.f32.mrf.mxu0
        %v1383 = vadd.f32 %v1258, %v1382
        %1384 = vmatmul.f32.gmra.mxu0 %v1315
        %v1385 = vpop.f32.mrf.mxu0
        %v1386 = vadd.f32 %v1261, %v1385
        %1387 = vmatmul.f32.gmra.mxu0 %v1318
        %v1388 = vpop.f32.mrf.mxu0
        %v1389 = vadd.f32 %v1264, %v1388
        %1390 = vmatmul.f32.gmra.mxu0 %v1321
        %v1391 = vpop.f32.mrf.mxu0
        %v1392 = vadd.f32 %v1267, %v1391
        %1393 = vmatmul.f32.gmra.mxu0 %v1324
        %v1394 = vpop.f32.mrf.mxu0
        %v1395 = vadd.f32 %v1270, %v1394
        %1396 = vmatmul.f32.gmra.mxu0 %v1327
        %v1397 = vpop.f32.mrf.mxu0
        %v1398 = vadd.f32 %v1273, %v1397
        %1399 = vmatmul.f32.gmra.mxu0 %v1330
        %v1400 = vpop.f32.mrf.mxu0
        %v1401 = vadd.f32 %v1276, %v1400
        %1402 = vmatmul.f32.gmra.mxu0 %v1333
        %v1403 = vpop.f32.mrf.mxu0
        %v1404 = vadd.f32 %v1279, %v1403
        %1405 = vmatmul.f32.gmra.mxu0 %v1336
        %v1406 = vpop.f32.mrf.mxu0
        %v1407 = vadd.f32 %v1282, %v1406
        %1408 = vmatmul.f32.gmra.mxu0 %v1339
        %v1409 = vpop.f32.mrf.mxu0
        %v1410 = vadd.f32 %v1285, %v1409
        %1411 = vmatmul.f32.gmra.mxu0 %v1342
        %v1412 = vpop.f32.mrf.mxu0
        %v1413 = vadd.f32 %v1288, %v1412
        %1414 = vmatmul.f32.gmra.mxu0 %v1345
        %v1415 = vpop.f32.mrf.mxu0
        %v1416 = vadd.f32 %v1291, %v1415
        %1417 = vmatmul.f32.gmra.mxu0 %v1348
        %v1418 = vpop.f32.mrf.mxu0
        %v1419 = vadd.f32 %v1294, %v1418
        %1420 = vmatmul.f32.gmra.mxu0 %v1351
        %v1421 = vpop.f32.mrf.mxu0
        %v1422 = vadd.f32 %v1297, %v1421
        %1423 = vmatmul.f32.gmra.mxu0 %v1354
        %v1424 = vpop.f32.mrf.mxu0
        %v1425 = vadd.f32 %v1300, %v1424
        %1426 = vmatmul.f32.gmra.mxu0 %v1357
        %v1427 = vpop.f32.mrf.mxu0
        %v1428 = vadd.f32 %v1303, %v1427
        %1429 = vmatmul.f32.gmra.mxu0 %v1360
        %v1430 = vpop.f32.mrf.mxu0
        %v1431 = vadd.f32 %v1306, %v1430
        %1432 = vmatmul.f32.gmra.mxu0 %v1363
        %v1433 = vpop.f32.mrf.mxu0
        %v1434 = vadd.f32 %v1309, %v1433
        %1435 = vdwg.mxu0
        %v1436 = vld [vmem:[#allocation2 + $0x2] sm:$0xff]
        %v1437 = vld [vmem:[#allocation2 + $0xa] sm:$0xff]
        %v1438 = vld [vmem:[#allocation2 + $0x12] sm:$0xff]
        %v1439 = vld [vmem:[#allocation2 + $0x1a] sm:$0xff]
        %v1440 = vld [vmem:[#allocation2 + $0x22] sm:$0xff]
        %v1441 = vld [vmem:[#allocation2 + $0x2a] sm:$0xff]
        %v1442 = vld [vmem:[#allocation2 + $0x32] sm:$0xff]
        %v1443 = vld [vmem:[#allocation2 + $0x3a] sm:$0xff]
        %v1444 = vld [vmem:[#allocation2 + $0x42] sm:$0xff]
        %v1445 = vld [vmem:[#allocation2 + $0x4a] sm:$0xff]
        %v1446 = vld [vmem:[#allocation2 + $0x52] sm:$0xff]
        %v1447 = vld [vmem:[#allocation2 + $0x5a] sm:$0xff]
        %v1448 = vld [vmem:[#allocation2 + $0x62] sm:$0xff]
        %v1449 = vld [vmem:[#allocation2 + $0x6a] sm:$0xff]
        %v1450 = vld [vmem:[#allocation2 + $0x72] sm:$0xff]
        %v1451 = vld [vmem:[#allocation2 + $0x7a] sm:$0xff]
        %v1452 = vld [vmem:[#allocation2 + $0x82] sm:$0xff]
        %v1453 = vld [vmem:[#allocation2 + $0x8a] sm:$0xff]
        %s1454 = scalar_lea.vmem %s5, 64
        %v1455 = vld [vmem:[%s1454] sm:$0xff]
        %v1456 = vld [vmem:[%s1454 + $0x8] sm:$0xff]
        %v1457 = vld [vmem:[%s1454 + $0x10] sm:$0xff]
        %v1458 = vld [vmem:[%s1454 + $0x18] sm:$0xff]
        %v1460 = vsel %vm1115, %v1436, 0
        %v1463 = vsel %vm1115, %v1437, 0
        %v1466 = vsel %vm1115, %v1438, 0
        %v1469 = vsel %vm1115, %v1439, 0
        %v1472 = vsel %vm1115, %v1440, 0
        %v1475 = vsel %vm1115, %v1441, 0
        %v1478 = vsel %vm1115, %v1442, 0
        %v1481 = vsel %vm1115, %v1443, 0
        %v1484 = vsel %vm1115, %v1444, 0
        %v1487 = vsel %vm1115, %v1445, 0
        %v1490 = vsel %vm1115, %v1446, 0
        %v1493 = vsel %vm1115, %v1447, 0
        %v1496 = vsel %vm1115, %v1448, 0
        %v1499 = vsel %vm1115, %v1449, 0
        %v1502 = vsel %vm1115, %v1450, 0
        %v1505 = vsel %vm1115, %v1451, 0
        %v1508 = vsel %vm1115, %v1452, 0
        %v1511 = vsel %vm1115, %v1453, 0
        %1513 = vmatpush.msra.mxu0 0.0
        %1514 = vmatpush.msra.mxu0 0.0
        %1515 = vmatpush.msra.mxu0 0.0
        %1516 = vmatpush.msra.mxu0 0.0
        %1517 = vmatpush.msra.mxu0 0.0
        %1518 = vmatpush.msra.mxu0 0.0
        %1519 = vmatpush.msra.mxu0 0.0
        %1520 = vmatpush.msra.mxu0 0.0
        %1521 = vmatpush.msra.mxu0 0.0
        %1522 = vmatpush.msra.mxu0 0.0
        %1523 = vmatpush.msra.mxu0 0.0
        %1524 = vmatpush.msra.mxu0 0.0
        %1525 = vmatpush.msra.mxu0 %v1458
        %1526 = vmatpush.msra.mxu0 %v1457
        %1527 = vmatpush.msra.mxu0 %v1456
        %1528 = vmatpush.msra.mxu0 %v1455
        %1529 = vmatmul.f32.gmra.mxu0 %v1460
        %v1530 = vpop.f32.mrf.mxu0
        %v1531 = vadd.f32 0.0, %v1530
        %1532 = vmatmul.f32.gmra.mxu0 %v1463
        %v1533 = vpop.f32.mrf.mxu0
        %v1534 = vadd.f32 0.0, %v1533
        %1535 = vmatmul.f32.gmra.mxu0 %v1466
        %v1536 = vpop.f32.mrf.mxu0
        %v1537 = vadd.f32 0.0, %v1536
        %1538 = vmatmul.f32.gmra.mxu0 %v1469
        %v1539 = vpop.f32.mrf.mxu0
        %v1540 = vadd.f32 0.0, %v1539
        %1541 = vmatmul.f32.gmra.mxu0 %v1472
        %v1542 = vpop.f32.mrf.mxu0
        %v1543 = vadd.f32 0.0, %v1542
        %1544 = vmatmul.f32.gmra.mxu0 %v1475
        %v1545 = vpop.f32.mrf.mxu0
        %v1546 = vadd.f32 0.0, %v1545
        %1547 = vmatmul.f32.gmra.mxu0 %v1478
        %v1548 = vpop.f32.mrf.mxu0
        %v1549 = vadd.f32 0.0, %v1548
        %1550 = vmatmul.f32.gmra.mxu0 %v1481
        %v1551 = vpop.f32.mrf.mxu0
        %v1552 = vadd.f32 0.0, %v1551
        %1553 = vmatmul.f32.gmra.mxu0 %v1484
        %v1554 = vpop.f32.mrf.mxu0
        %v1555 = vadd.f32 0.0, %v1554
        %1556 = vmatmul.f32.gmra.mxu0 %v1487
        %v1557 = vpop.f32.mrf.mxu0
        %v1558 = vadd.f32 0.0, %v1557
        %1559 = vmatmul.f32.gmra.mxu0 %v1490
        %v1560 = vpop.f32.mrf.mxu0
        %v1561 = vadd.f32 0.0, %v1560
        %1562 = vmatmul.f32.gmra.mxu0 %v1493
        %v1563 = vpop.f32.mrf.mxu0
        %v1564 = vadd.f32 0.0, %v1563
        %1565 = vmatmul.f32.gmra.mxu0 %v1496
        %v1566 = vpop.f32.mrf.mxu0
        %v1567 = vadd.f32 0.0, %v1566
        %1568 = vmatmul.f32.gmra.mxu0 %v1499
        %v1569 = vpop.f32.mrf.mxu0
        %v1570 = vadd.f32 0.0, %v1569
        %1571 = vmatmul.f32.gmra.mxu0 %v1502
        %v1572 = vpop.f32.mrf.mxu0
        %v1573 = vadd.f32 0.0, %v1572
        %1574 = vmatmul.f32.gmra.mxu0 %v1505
        %v1575 = vpop.f32.mrf.mxu0
        %v1576 = vadd.f32 0.0, %v1575
        %1577 = vmatmul.f32.gmra.mxu0 %v1508
        %v1578 = vpop.f32.mrf.mxu0
        %v1579 = vadd.f32 0.0, %v1578
        %1580 = vmatmul.f32.gmra.mxu0 %v1511
        %v1581 = vpop.f32.mrf.mxu0
        %v1582 = vadd.f32 0.0, %v1581
        %1583 = vdwg.mxu0
        %v1584 = vadd.f32 %v1383, %v1531
        %v1585 = vadd.f32 %v1386, %v1534
        %v1586 = vadd.f32 %v1389, %v1537
        %v1587 = vadd.f32 %v1392, %v1540
        %v1588 = vadd.f32 %v1395, %v1543
        %v1589 = vadd.f32 %v1398, %v1546
        %v1590 = vadd.f32 %v1401, %v1549
        %v1591 = vadd.f32 %v1404, %v1552
        %v1592 = vadd.f32 %v1407, %v1555
        %v1593 = vadd.f32 %v1410, %v1558
        %v1594 = vadd.f32 %v1413, %v1561
        %v1595 = vadd.f32 %v1416, %v1564
        %v1596 = vadd.f32 %v1419, %v1567
        %v1597 = vadd.f32 %v1422, %v1570
        %v1598 = vadd.f32 %v1425, %v1573
        %v1599 = vadd.f32 %v1428, %v1576
        %v1600 = vadd.f32 %v1431, %v1579
        %v1601 = vadd.f32 %v1434, %v1582
        %v1602 = vld [vmem:[#allocation2 + $0x3] sm:$0xff]
        %v1603 = vld [vmem:[#allocation2 + $0xb] sm:$0xff]
        %v1604 = vld [vmem:[#allocation2 + $0x13] sm:$0xff]
        %v1605 = vld [vmem:[#allocation2 + $0x1b] sm:$0xff]
        %v1606 = vld [vmem:[#allocation2 + $0x23] sm:$0xff]
        %v1607 = vld [vmem:[#allocation2 + $0x2b] sm:$0xff]
        %v1608 = vld [vmem:[#allocation2 + $0x33] sm:$0xff]
        %v1609 = vld [vmem:[#allocation2 + $0x3b] sm:$0xff]
        %v1610 = vld [vmem:[#allocation2 + $0x43] sm:$0xff]
        %v1611 = vld [vmem:[#allocation2 + $0x4b] sm:$0xff]
        %v1612 = vld [vmem:[#allocation2 + $0x53] sm:$0xff]
        %v1613 = vld [vmem:[#allocation2 + $0x5b] sm:$0xff]
        %v1614 = vld [vmem:[#allocation2 + $0x63] sm:$0xff]
        %v1615 = vld [vmem:[#allocation2 + $0x6b] sm:$0xff]
        %v1616 = vld [vmem:[#allocation2 + $0x73] sm:$0xff]
        %v1617 = vld [vmem:[#allocation2 + $0x7b] sm:$0xff]
        %v1618 = vld [vmem:[#allocation2 + $0x83] sm:$0xff]
        %v1619 = vld [vmem:[#allocation2 + $0x8b] sm:$0xff]
        %s1620 = scalar_lea.vmem %s5, 96
        %v1621 = vld [vmem:[%s1620] sm:$0xff]
        %v1622 = vld [vmem:[%s1620 + $0x8] sm:$0xff]
        %v1623 = vld [vmem:[%s1620 + $0x10] sm:$0xff]
        %v1624 = vld [vmem:[%s1620 + $0x18] sm:$0xff]
        %v1626 = vsel %vm1115, %v1602, 0
        %v1629 = vsel %vm1115, %v1603, 0
        %v1632 = vsel %vm1115, %v1604, 0
        %v1635 = vsel %vm1115, %v1605, 0
        %v1638 = vsel %vm1115, %v1606, 0
        %v1641 = vsel %vm1115, %v1607, 0
        %v1644 = vsel %vm1115, %v1608, 0
        %v1647 = vsel %vm1115, %v1609, 0
        %v1650 = vsel %vm1115, %v1610, 0
        %v1653 = vsel %vm1115, %v1611, 0
        %v1656 = vsel %vm1115, %v1612, 0
        %v1659 = vsel %vm1115, %v1613, 0
        %v1662 = vsel %vm1115, %v1614, 0
        %v1665 = vsel %vm1115, %v1615, 0
        %v1668 = vsel %vm1115, %v1616, 0
        %v1671 = vsel %vm1115, %v1617, 0
        %v1674 = vsel %vm1115, %v1618, 0
        %v1677 = vsel %vm1115, %v1619, 0
        %1679 = vmatpush.msra.mxu0 0.0
        %1680 = vmatpush.msra.mxu0 0.0
        %1681 = vmatpush.msra.mxu0 0.0
        %1682 = vmatpush.msra.mxu0 0.0
        %1683 = vmatpush.msra.mxu0 0.0
        %1684 = vmatpush.msra.mxu0 0.0
        %1685 = vmatpush.msra.mxu0 0.0
        %1686 = vmatpush.msra.mxu0 0.0
        %1687 = vmatpush.msra.mxu0 0.0
        %1688 = vmatpush.msra.mxu0 0.0
        %1689 = vmatpush.msra.mxu0 0.0
        %1690 = vmatpush.msra.mxu0 0.0
        %1691 = vmatpush.msra.mxu0 %v1624
        %1692 = vmatpush.msra.mxu0 %v1623
        %1693 = vmatpush.msra.mxu0 %v1622
        %1694 = vmatpush.msra.mxu0 %v1621
        %1695 = vmatmul.f32.gmra.mxu0 %v1626
        %v1696 = vpop.f32.mrf.mxu0
        %v1697 = vadd.f32 0.0, %v1696
        %1698 = vmatmul.f32.gmra.mxu0 %v1629
        %v1699 = vpop.f32.mrf.mxu0
        %v1700 = vadd.f32 0.0, %v1699
        %1701 = vmatmul.f32.gmra.mxu0 %v1632
        %v1702 = vpop.f32.mrf.mxu0
        %v1703 = vadd.f32 0.0, %v1702
        %1704 = vmatmul.f32.gmra.mxu0 %v1635
        %v1705 = vpop.f32.mrf.mxu0
        %v1706 = vadd.f32 0.0, %v1705
        %1707 = vmatmul.f32.gmra.mxu0 %v1638
        %v1708 = vpop.f32.mrf.mxu0
        %v1709 = vadd.f32 0.0, %v1708
        %1710 = vmatmul.f32.gmra.mxu0 %v1641
        %v1711 = vpop.f32.mrf.mxu0
        %v1712 = vadd.f32 0.0, %v1711
        %1713 = vmatmul.f32.gmra.mxu0 %v1644
        %v1714 = vpop.f32.mrf.mxu0
        %v1715 = vadd.f32 0.0, %v1714
        %1716 = vmatmul.f32.gmra.mxu0 %v1647
        %v1717 = vpop.f32.mrf.mxu0
        %v1718 = vadd.f32 0.0, %v1717
        %1719 = vmatmul.f32.gmra.mxu0 %v1650
        %v1720 = vpop.f32.mrf.mxu0
        %v1721 = vadd.f32 0.0, %v1720
        %1722 = vmatmul.f32.gmra.mxu0 %v1653
        %v1723 = vpop.f32.mrf.mxu0
        %v1724 = vadd.f32 0.0, %v1723
        %1725 = vmatmul.f32.gmra.mxu0 %v1656
        %v1726 = vpop.f32.mrf.mxu0
        %v1727 = vadd.f32 0.0, %v1726
        %1728 = vmatmul.f32.gmra.mxu0 %v1659
        %v1729 = vpop.f32.mrf.mxu0
        %v1730 = vadd.f32 0.0, %v1729
        %1731 = vmatmul.f32.gmra.mxu0 %v1662
        %v1732 = vpop.f32.mrf.mxu0
        %v1733 = vadd.f32 0.0, %v1732
        %1734 = vmatmul.f32.gmra.mxu0 %v1665
        %v1735 = vpop.f32.mrf.mxu0
        %v1736 = vadd.f32 0.0, %v1735
        %1737 = vmatmul.f32.gmra.mxu0 %v1668
        %v1738 = vpop.f32.mrf.mxu0
        %v1739 = vadd.f32 0.0, %v1738
        %1740 = vmatmul.f32.gmra.mxu0 %v1671
        %v1741 = vpop.f32.mrf.mxu0
        %v1742 = vadd.f32 0.0, %v1741
        %1743 = vmatmul.f32.gmra.mxu0 %v1674
        %v1744 = vpop.f32.mrf.mxu0
        %v1745 = vadd.f32 0.0, %v1744
        %1746 = vmatmul.f32.gmra.mxu0 %v1677
        %v1747 = vpop.f32.mrf.mxu0
        %v1748 = vadd.f32 0.0, %v1747
        %1749 = vdwg.mxu0
        %v1750 = vadd.f32 %v1584, %v1697
        %v1751 = vadd.f32 %v1585, %v1700
        %v1752 = vadd.f32 %v1586, %v1703
        %v1753 = vadd.f32 %v1587, %v1706
        %v1754 = vadd.f32 %v1588, %v1709
        %v1755 = vadd.f32 %v1589, %v1712
        %v1756 = vadd.f32 %v1590, %v1715
        %v1757 = vadd.f32 %v1591, %v1718
        %v1758 = vadd.f32 %v1592, %v1721
        %v1759 = vadd.f32 %v1593, %v1724
        %v1760 = vadd.f32 %v1594, %v1727
        %v1761 = vadd.f32 %v1595, %v1730
        %v1762 = vadd.f32 %v1596, %v1733
        %v1763 = vadd.f32 %v1597, %v1736
        %v1764 = vadd.f32 %v1598, %v1739
        %v1765 = vadd.f32 %v1599, %v1742
        %v1766 = vadd.f32 %v1600, %v1745
        %v1767 = vadd.f32 %v1601, %v1748
        %v1768 = vld [vmem:[#allocation2 + $0x4] sm:$0xff]
        %v1769 = vld [vmem:[#allocation2 + $0xc] sm:$0xff]
        %v1770 = vld [vmem:[#allocation2 + $0x14] sm:$0xff]
        %v1771 = vld [vmem:[#allocation2 + $0x1c] sm:$0xff]
        %v1772 = vld [vmem:[#allocation2 + $0x24] sm:$0xff]
        %v1773 = vld [vmem:[#allocation2 + $0x2c] sm:$0xff]
        %v1774 = vld [vmem:[#allocation2 + $0x34] sm:$0xff]
        %v1775 = vld [vmem:[#allocation2 + $0x3c] sm:$0xff]
        %v1776 = vld [vmem:[#allocation2 + $0x44] sm:$0xff]
        %v1777 = vld [vmem:[#allocation2 + $0x4c] sm:$0xff]
        %v1778 = vld [vmem:[#allocation2 + $0x54] sm:$0xff]
        %v1779 = vld [vmem:[#allocation2 + $0x5c] sm:$0xff]
        %v1780 = vld [vmem:[#allocation2 + $0x64] sm:$0xff]
        %v1781 = vld [vmem:[#allocation2 + $0x6c] sm:$0xff]
        %v1782 = vld [vmem:[#allocation2 + $0x74] sm:$0xff]
        %v1783 = vld [vmem:[#allocation2 + $0x7c] sm:$0xff]
        %v1784 = vld [vmem:[#allocation2 + $0x84] sm:$0xff]
        %v1785 = vld [vmem:[#allocation2 + $0x8c] sm:$0xff]
        %s1786 = scalar_lea.vmem %s5, 128
        %v1787 = vld [vmem:[%s1786] sm:$0xff]
        %v1788 = vld [vmem:[%s1786 + $0x8] sm:$0xff]
        %v1789 = vld [vmem:[%s1786 + $0x10] sm:$0xff]
        %v1790 = vld [vmem:[%s1786 + $0x18] sm:$0xff]
        %v1792 = vsel %vm1115, %v1768, 0
        %v1795 = vsel %vm1115, %v1769, 0
        %v1798 = vsel %vm1115, %v1770, 0
        %v1801 = vsel %vm1115, %v1771, 0
        %v1804 = vsel %vm1115, %v1772, 0
        %v1807 = vsel %vm1115, %v1773, 0
        %v1810 = vsel %vm1115, %v1774, 0
        %v1813 = vsel %vm1115, %v1775, 0
        %v1816 = vsel %vm1115, %v1776, 0
        %v1819 = vsel %vm1115, %v1777, 0
        %v1822 = vsel %vm1115, %v1778, 0
        %v1825 = vsel %vm1115, %v1779, 0
        %v1828 = vsel %vm1115, %v1780, 0
        %v1831 = vsel %vm1115, %v1781, 0
        %v1834 = vsel %vm1115, %v1782, 0
        %v1837 = vsel %vm1115, %v1783, 0
        %v1840 = vsel %vm1115, %v1784, 0
        %v1843 = vsel %vm1115, %v1785, 0
        %1845 = vmatpush.msra.mxu0 0.0
        %1846 = vmatpush.msra.mxu0 0.0
        %1847 = vmatpush.msra.mxu0 0.0
        %1848 = vmatpush.msra.mxu0 0.0
        %1849 = vmatpush.msra.mxu0 0.0
        %1850 = vmatpush.msra.mxu0 0.0
        %1851 = vmatpush.msra.mxu0 0.0
        %1852 = vmatpush.msra.mxu0 0.0
        %1853 = vmatpush.msra.mxu0 0.0
        %1854 = vmatpush.msra.mxu0 0.0
        %1855 = vmatpush.msra.mxu0 0.0
        %1856 = vmatpush.msra.mxu0 0.0
        %1857 = vmatpush.msra.mxu0 %v1790
        %1858 = vmatpush.msra.mxu0 %v1789
        %1859 = vmatpush.msra.mxu0 %v1788
        %1860 = vmatpush.msra.mxu0 %v1787
        %1861 = vmatmul.f32.gmra.mxu0 %v1792
        %v1862 = vpop.f32.mrf.mxu0
        %v1863 = vadd.f32 0.0, %v1862
        %1864 = vmatmul.f32.gmra.mxu0 %v1795
        %v1865 = vpop.f32.mrf.mxu0
        %v1866 = vadd.f32 0.0, %v1865
        %1867 = vmatmul.f32.gmra.mxu0 %v1798
        %v1868 = vpop.f32.mrf.mxu0
        %v1869 = vadd.f32 0.0, %v1868
        %1870 = vmatmul.f32.gmra.mxu0 %v1801
        %v1871 = vpop.f32.mrf.mxu0
        %v1872 = vadd.f32 0.0, %v1871
        %1873 = vmatmul.f32.gmra.mxu0 %v1804
        %v1874 = vpop.f32.mrf.mxu0
        %v1875 = vadd.f32 0.0, %v1874
        %1876 = vmatmul.f32.gmra.mxu0 %v1807
        %v1877 = vpop.f32.mrf.mxu0
        %v1878 = vadd.f32 0.0, %v1877
        %1879 = vmatmul.f32.gmra.mxu0 %v1810
        %v1880 = vpop.f32.mrf.mxu0
        %v1881 = vadd.f32 0.0, %v1880
        %1882 = vmatmul.f32.gmra.mxu0 %v1813
        %v1883 = vpop.f32.mrf.mxu0
        %v1884 = vadd.f32 0.0, %v1883
        %1885 = vmatmul.f32.gmra.mxu0 %v1816
        %v1886 = vpop.f32.mrf.mxu0
        %v1887 = vadd.f32 0.0, %v1886
        %1888 = vmatmul.f32.gmra.mxu0 %v1819
        %v1889 = vpop.f32.mrf.mxu0
        %v1890 = vadd.f32 0.0, %v1889
        %1891 = vmatmul.f32.gmra.mxu0 %v1822
        %v1892 = vpop.f32.mrf.mxu0
        %v1893 = vadd.f32 0.0, %v1892
        %1894 = vmatmul.f32.gmra.mxu0 %v1825
        %v1895 = vpop.f32.mrf.mxu0
        %v1896 = vadd.f32 0.0, %v1895
        %1897 = vmatmul.f32.gmra.mxu0 %v1828
        %v1898 = vpop.f32.mrf.mxu0
        %v1899 = vadd.f32 0.0, %v1898
        %1900 = vmatmul.f32.gmra.mxu0 %v1831
        %v1901 = vpop.f32.mrf.mxu0
        %v1902 = vadd.f32 0.0, %v1901
        %1903 = vmatmul.f32.gmra.mxu0 %v1834
        %v1904 = vpop.f32.mrf.mxu0
        %v1905 = vadd.f32 0.0, %v1904
        %1906 = vmatmul.f32.gmra.mxu0 %v1837
        %v1907 = vpop.f32.mrf.mxu0
        %v1908 = vadd.f32 0.0, %v1907
        %1909 = vmatmul.f32.gmra.mxu0 %v1840
        %v1910 = vpop.f32.mrf.mxu0
        %v1911 = vadd.f32 0.0, %v1910
        %1912 = vmatmul.f32.gmra.mxu0 %v1843
        %v1913 = vpop.f32.mrf.mxu0
        %v1914 = vadd.f32 0.0, %v1913
        %1915 = vdwg.mxu0
        %v1916 = vadd.f32 %v1750, %v1863
        %v1917 = vadd.f32 %v1751, %v1866
        %v1918 = vadd.f32 %v1752, %v1869
        %v1919 = vadd.f32 %v1753, %v1872
        %v1920 = vadd.f32 %v1754, %v1875
        %v1921 = vadd.f32 %v1755, %v1878
        %v1922 = vadd.f32 %v1756, %v1881
        %v1923 = vadd.f32 %v1757, %v1884
        %v1924 = vadd.f32 %v1758, %v1887
        %v1925 = vadd.f32 %v1759, %v1890
        %v1926 = vadd.f32 %v1760, %v1893
        %v1927 = vadd.f32 %v1761, %v1896
        %v1928 = vadd.f32 %v1762, %v1899
        %v1929 = vadd.f32 %v1763, %v1902
        %v1930 = vadd.f32 %v1764, %v1905
        %v1931 = vadd.f32 %v1765, %v1908
        %v1932 = vadd.f32 %v1766, %v1911
        %v1933 = vadd.f32 %v1767, %v1914
        %v1934 = vld [vmem:[#allocation2 + $0xc] sm:$0xff]
        %v1935 = vld [vmem:[#allocation2 + $0x14] sm:$0xff]
        %v1936 = vld [vmem:[#allocation2 + $0x1c] sm:$0xff]
        %v1937 = vld [vmem:[#allocation2 + $0x24] sm:$0xff]
        %v1938 = vld [vmem:[#allocation2 + $0x2c] sm:$0xff]
        %v1939 = vld [vmem:[#allocation2 + $0x34] sm:$0xff]
        %v1940 = vld [vmem:[#allocation2 + $0x3c] sm:$0xff]
        %v1941 = vld [vmem:[#allocation2 + $0x44] sm:$0xff]
        %v1942 = vld [vmem:[#allocation2 + $0x4c] sm:$0xff]
        %v1943 = vld [vmem:[#allocation2 + $0x54] sm:$0xff]
        %v1944 = vld [vmem:[#allocation2 + $0x5c] sm:$0xff]
        %v1945 = vld [vmem:[#allocation2 + $0x64] sm:$0xff]
        %v1946 = vld [vmem:[#allocation2 + $0x6c] sm:$0xff]
        %v1947 = vld [vmem:[#allocation2 + $0x74] sm:$0xff]
        %v1948 = vld [vmem:[#allocation2 + $0x7c] sm:$0xff]
        %v1949 = vld [vmem:[#allocation2 + $0x84] sm:$0xff]
        %v1950 = vld [vmem:[#allocation2 + $0x8c] sm:$0xff]
        %v1951 = vld [vmem:[#allocation2 + $0x94] sm:$0xff]
        %s1952 = scalar_lea.vmem %s5, 160
        %v1953 = vld [vmem:[%s1952] sm:$0xff]
        %v1954 = vld [vmem:[%s1952 + $0x8] sm:$0xff]
        %v1955 = vld [vmem:[%s1952 + $0x10] sm:$0xff]
        %v1956 = vld [vmem:[%s1952 + $0x18] sm:$0xff]
        %v1958 = vsel %vm1115, %v1934, 0
        %v1961 = vsel %vm1115, %v1935, 0
        %v1964 = vsel %vm1115, %v1936, 0
        %v1967 = vsel %vm1115, %v1937, 0
        %v1970 = vsel %vm1115, %v1938, 0
        %v1973 = vsel %vm1115, %v1939, 0
        %v1976 = vsel %vm1115, %v1940, 0
        %v1979 = vsel %vm1115, %v1941, 0
        %v1982 = vsel %vm1115, %v1942, 0
        %v1985 = vsel %vm1115, %v1943, 0
        %v1988 = vsel %vm1115, %v1944, 0
        %v1991 = vsel %vm1115, %v1945, 0
        %v1994 = vsel %vm1115, %v1946, 0
        %v1997 = vsel %vm1115, %v1947, 0
        %v2000 = vsel %vm1115, %v1948, 0
        %v2003 = vsel %vm1115, %v1949, 0
        %v2006 = vsel %vm1115, %v1950, 0
        %v2009 = vsel %vm1115, %v1951, 0
        %2011 = vmatpush.msra.mxu0 0.0
        %2012 = vmatpush.msra.mxu0 0.0
        %2013 = vmatpush.msra.mxu0 0.0
        %2014 = vmatpush.msra.mxu0 0.0
        %2015 = vmatpush.msra.mxu0 0.0
        %2016 = vmatpush.msra.mxu0 0.0
        %2017 = vmatpush.msra.mxu0 0.0
        %2018 = vmatpush.msra.mxu0 0.0
        %2019 = vmatpush.msra.mxu0 0.0
        %2020 = vmatpush.msra.mxu0 0.0
        %2021 = vmatpush.msra.mxu0 0.0
        %2022 = vmatpush.msra.mxu0 0.0
        %2023 = vmatpush.msra.mxu0 %v1956
        %2024 = vmatpush.msra.mxu0 %v1955
        %2025 = vmatpush.msra.mxu0 %v1954
        %2026 = vmatpush.msra.mxu0 %v1953
        %2027 = vmatmul.f32.gmra.mxu0 %v1958
        %v2028 = vpop.f32.mrf.mxu0
        %v2029 = vadd.f32 0.0, %v2028
        %2030 = vmatmul.f32.gmra.mxu0 %v1961
        %v2031 = vpop.f32.mrf.mxu0
        %v2032 = vadd.f32 0.0, %v2031
        %2033 = vmatmul.f32.gmra.mxu0 %v1964
        %v2034 = vpop.f32.mrf.mxu0
        %v2035 = vadd.f32 0.0, %v2034
        %2036 = vmatmul.f32.gmra.mxu0 %v1967
        %v2037 = vpop.f32.mrf.mxu0
        %v2038 = vadd.f32 0.0, %v2037
        %2039 = vmatmul.f32.gmra.mxu0 %v1970
        %v2040 = vpop.f32.mrf.mxu0
        %v2041 = vadd.f32 0.0, %v2040
        %2042 = vmatmul.f32.gmra.mxu0 %v1973
        %v2043 = vpop.f32.mrf.mxu0
        %v2044 = vadd.f32 0.0, %v2043
        %2045 = vmatmul.f32.gmra.mxu0 %v1976
        %v2046 = vpop.f32.mrf.mxu0
        %v2047 = vadd.f32 0.0, %v2046
        %2048 = vmatmul.f32.gmra.mxu0 %v1979
        %v2049 = vpop.f32.mrf.mxu0
        %v2050 = vadd.f32 0.0, %v2049
        %2051 = vmatmul.f32.gmra.mxu0 %v1982
        %v2052 = vpop.f32.mrf.mxu0
        %v2053 = vadd.f32 0.0, %v2052
        %2054 = vmatmul.f32.gmra.mxu0 %v1985
        %v2055 = vpop.f32.mrf.mxu0
        %v2056 = vadd.f32 0.0, %v2055
        %2057 = vmatmul.f32.gmra.mxu0 %v1988
        %v2058 = vpop.f32.mrf.mxu0
        %v2059 = vadd.f32 0.0, %v2058
        %2060 = vmatmul.f32.gmra.mxu0 %v1991
        %v2061 = vpop.f32.mrf.mxu0
        %v2062 = vadd.f32 0.0, %v2061
        %2063 = vmatmul.f32.gmra.mxu0 %v1994
        %v2064 = vpop.f32.mrf.mxu0
        %v2065 = vadd.f32 0.0, %v2064
        %2066 = vmatmul.f32.gmra.mxu0 %v1997
        %v2067 = vpop.f32.mrf.mxu0
        %v2068 = vadd.f32 0.0, %v2067
        %2069 = vmatmul.f32.gmra.mxu0 %v2000
        %v2070 = vpop.f32.mrf.mxu0
        %v2071 = vadd.f32 0.0, %v2070
        %2072 = vmatmul.f32.gmra.mxu0 %v2003
        %v2073 = vpop.f32.mrf.mxu0
        %v2074 = vadd.f32 0.0, %v2073
        %2075 = vmatmul.f32.gmra.mxu0 %v2006
        %v2076 = vpop.f32.mrf.mxu0
        %v2077 = vadd.f32 0.0, %v2076
        %2078 = vmatmul.f32.gmra.mxu0 %v2009
        %v2079 = vpop.f32.mrf.mxu0
        %v2080 = vadd.f32 0.0, %v2079
        %2081 = vdwg.mxu0
        %v2082 = vadd.f32 %v1916, %v2029
        %v2083 = vadd.f32 %v1917, %v2032
        %v2084 = vadd.f32 %v1918, %v2035
        %v2085 = vadd.f32 %v1919, %v2038
        %v2086 = vadd.f32 %v1920, %v2041
        %v2087 = vadd.f32 %v1921, %v2044
        %v2088 = vadd.f32 %v1922, %v2047
        %v2089 = vadd.f32 %v1923, %v2050
        %v2090 = vadd.f32 %v1924, %v2053
        %v2091 = vadd.f32 %v1925, %v2056
        %v2092 = vadd.f32 %v1926, %v2059
        %v2093 = vadd.f32 %v1927, %v2062
        %v2094 = vadd.f32 %v1928, %v2065
        %v2095 = vadd.f32 %v1929, %v2068
        %v2096 = vadd.f32 %v1930, %v2071
        %v2097 = vadd.f32 %v1931, %v2074
        %v2098 = vadd.f32 %v1932, %v2077
        %v2099 = vadd.f32 %v1933, %v2080
        %v2100 = vld [vmem:[#allocation2 + $0xd] sm:$0xff]
        %v2101 = vld [vmem:[#allocation2 + $0x15] sm:$0xff]
        %v2102 = vld [vmem:[#allocation2 + $0x1d] sm:$0xff]
        %v2103 = vld [vmem:[#allocation2 + $0x25] sm:$0xff]
        %v2104 = vld [vmem:[#allocation2 + $0x2d] sm:$0xff]
        %v2105 = vld [vmem:[#allocation2 + $0x35] sm:$0xff]
        %v2106 = vld [vmem:[#allocation2 + $0x3d] sm:$0xff]
        %v2107 = vld [vmem:[#allocation2 + $0x45] sm:$0xff]
        %v2108 = vld [vmem:[#allocation2 + $0x4d] sm:$0xff]
        %v2109 = vld [vmem:[#allocation2 + $0x55] sm:$0xff]
        %v2110 = vld [vmem:[#allocation2 + $0x5d] sm:$0xff]
        %v2111 = vld [vmem:[#allocation2 + $0x65] sm:$0xff]
        %v2112 = vld [vmem:[#allocation2 + $0x6d] sm:$0xff]
        %v2113 = vld [vmem:[#allocation2 + $0x75] sm:$0xff]
        %v2114 = vld [vmem:[#allocation2 + $0x7d] sm:$0xff]
        %v2115 = vld [vmem:[#allocation2 + $0x85] sm:$0xff]
        %v2116 = vld [vmem:[#allocation2 + $0x8d] sm:$0xff]
        %v2117 = vld [vmem:[#allocation2 + $0x95] sm:$0xff]
        %s2118 = scalar_lea.vmem %s5, 192
        %v2119 = vld [vmem:[%s2118] sm:$0xff]
        %v2120 = vld [vmem:[%s2118 + $0x8] sm:$0xff]
        %v2121 = vld [vmem:[%s2118 + $0x10] sm:$0xff]
        %v2122 = vld [vmem:[%s2118 + $0x18] sm:$0xff]
        %v2124 = vsel %vm1115, %v2100, 0
        %v2127 = vsel %vm1115, %v2101, 0
        %v2130 = vsel %vm1115, %v2102, 0
        %v2133 = vsel %vm1115, %v2103, 0
        %v2136 = vsel %vm1115, %v2104, 0
        %v2139 = vsel %vm1115, %v2105, 0
        %v2142 = vsel %vm1115, %v2106, 0
        %v2145 = vsel %vm1115, %v2107, 0
        %v2148 = vsel %vm1115, %v2108, 0
        %v2151 = vsel %vm1115, %v2109, 0
        %v2154 = vsel %vm1115, %v2110, 0
        %v2157 = vsel %vm1115, %v2111, 0
        %v2160 = vsel %vm1115, %v2112, 0
        %v2163 = vsel %vm1115, %v2113, 0
        %v2166 = vsel %vm1115, %v2114, 0
        %v2169 = vsel %vm1115, %v2115, 0
        %v2172 = vsel %vm1115, %v2116, 0
        %v2175 = vsel %vm1115, %v2117, 0
        %2177 = vmatpush.msra.mxu0 0.0
        %2178 = vmatpush.msra.mxu0 0.0
        %2179 = vmatpush.msra.mxu0 0.0
        %2180 = vmatpush.msra.mxu0 0.0
        %2181 = vmatpush.msra.mxu0 0.0
        %2182 = vmatpush.msra.mxu0 0.0
        %2183 = vmatpush.msra.mxu0 0.0
        %2184 = vmatpush.msra.mxu0 0.0
        %2185 = vmatpush.msra.mxu0 0.0
        %2186 = vmatpush.msra.mxu0 0.0
        %2187 = vmatpush.msra.mxu0 0.0
        %2188 = vmatpush.msra.mxu0 0.0
        %2189 = vmatpush.msra.mxu0 %v2122
        %2190 = vmatpush.msra.mxu0 %v2121
        %2191 = vmatpush.msra.mxu0 %v2120
        %2192 = vmatpush.msra.mxu0 %v2119
        %2193 = vmatmul.f32.gmra.mxu0 %v2124
        %v2194 = vpop.f32.mrf.mxu0
        %v2195 = vadd.f32 0.0, %v2194
        %2196 = vmatmul.f32.gmra.mxu0 %v2127
        %v2197 = vpop.f32.mrf.mxu0
        %v2198 = vadd.f32 0.0, %v2197
        %2199 = vmatmul.f32.gmra.mxu0 %v2130
        %v2200 = vpop.f32.mrf.mxu0
        %v2201 = vadd.f32 0.0, %v2200
        %2202 = vmatmul.f32.gmra.mxu0 %v2133
        %v2203 = vpop.f32.mrf.mxu0
        %v2204 = vadd.f32 0.0, %v2203
        %2205 = vmatmul.f32.gmra.mxu0 %v2136
        %v2206 = vpop.f32.mrf.mxu0
        %v2207 = vadd.f32 0.0, %v2206
        %2208 = vmatmul.f32.gmra.mxu0 %v2139
        %v2209 = vpop.f32.mrf.mxu0
        %v2210 = vadd.f32 0.0, %v2209
        %2211 = vmatmul.f32.gmra.mxu0 %v2142
        %v2212 = vpop.f32.mrf.mxu0
        %v2213 = vadd.f32 0.0, %v2212
        %2214 = vmatmul.f32.gmra.mxu0 %v2145
        %v2215 = vpop.f32.mrf.mxu0
        %v2216 = vadd.f32 0.0, %v2215
        %2217 = vmatmul.f32.gmra.mxu0 %v2148
        %v2218 = vpop.f32.mrf.mxu0
        %v2219 = vadd.f32 0.0, %v2218
        %2220 = vmatmul.f32.gmra.mxu0 %v2151
        %v2221 = vpop.f32.mrf.mxu0
        %v2222 = vadd.f32 0.0, %v2221
        %2223 = vmatmul.f32.gmra.mxu0 %v2154
        %v2224 = vpop.f32.mrf.mxu0
        %v2225 = vadd.f32 0.0, %v2224
        %2226 = vmatmul.f32.gmra.mxu0 %v2157
        %v2227 = vpop.f32.mrf.mxu0
        %v2228 = vadd.f32 0.0, %v2227
        %2229 = vmatmul.f32.gmra.mxu0 %v2160
        %v2230 = vpop.f32.mrf.mxu0
        %v2231 = vadd.f32 0.0, %v2230
        %2232 = vmatmul.f32.gmra.mxu0 %v2163
        %v2233 = vpop.f32.mrf.mxu0
        %v2234 = vadd.f32 0.0, %v2233
        %2235 = vmatmul.f32.gmra.mxu0 %v2166
        %v2236 = vpop.f32.mrf.mxu0
        %v2237 = vadd.f32 0.0, %v2236
        %2238 = vmatmul.f32.gmra.mxu0 %v2169
        %v2239 = vpop.f32.mrf.mxu0
        %v2240 = vadd.f32 0.0, %v2239
        %2241 = vmatmul.f32.gmra.mxu0 %v2172
        %v2242 = vpop.f32.mrf.mxu0
        %v2243 = vadd.f32 0.0, %v2242
        %2244 = vmatmul.f32.gmra.mxu0 %v2175
        %v2245 = vpop.f32.mrf.mxu0
        %v2246 = vadd.f32 0.0, %v2245
        %2247 = vdwg.mxu0
        %v2248 = vadd.f32 %v2082, %v2195
        %v2249 = vadd.f32 %v2083, %v2198
        %v2250 = vadd.f32 %v2084, %v2201
        %v2251 = vadd.f32 %v2085, %v2204
        %v2252 = vadd.f32 %v2086, %v2207
        %v2253 = vadd.f32 %v2087, %v2210
        %v2254 = vadd.f32 %v2088, %v2213
        %v2255 = vadd.f32 %v2089, %v2216
        %v2256 = vadd.f32 %v2090, %v2219
        %v2257 = vadd.f32 %v2091, %v2222
        %v2258 = vadd.f32 %v2092, %v2225
        %v2259 = vadd.f32 %v2093, %v2228
        %v2260 = vadd.f32 %v2094, %v2231
        %v2261 = vadd.f32 %v2095, %v2234
        %v2262 = vadd.f32 %v2096, %v2237
        %v2263 = vadd.f32 %v2097, %v2240
        %v2264 = vadd.f32 %v2098, %v2243
        %v2265 = vadd.f32 %v2099, %v2246
        %v2266 = vld [vmem:[#allocation2 + $0xe] sm:$0xff]
        %v2267 = vld [vmem:[#allocation2 + $0x16] sm:$0xff]
        %v2268 = vld [vmem:[#allocation2 + $0x1e] sm:$0xff]
        %v2269 = vld [vmem:[#allocation2 + $0x26] sm:$0xff]
        %v2270 = vld [vmem:[#allocation2 + $0x2e] sm:$0xff]
        %v2271 = vld [vmem:[#allocation2 + $0x36] sm:$0xff]
        %v2272 = vld [vmem:[#allocation2 + $0x3e] sm:$0xff]
        %v2273 = vld [vmem:[#allocation2 + $0x46] sm:$0xff]
        %v2274 = vld [vmem:[#allocation2 + $0x4e] sm:$0xff]
        %v2275 = vld [vmem:[#allocation2 + $0x56] sm:$0xff]
        %v2276 = vld [vmem:[#allocation2 + $0x5e] sm:$0xff]
        %v2277 = vld [vmem:[#allocation2 + $0x66] sm:$0xff]
        %v2278 = vld [vmem:[#allocation2 + $0x6e] sm:$0xff]
        %v2279 = vld [vmem:[#allocation2 + $0x76] sm:$0xff]
        %v2280 = vld [vmem:[#allocation2 + $0x7e] sm:$0xff]
        %v2281 = vld [vmem:[#allocation2 + $0x86] sm:$0xff]
        %v2282 = vld [vmem:[#allocation2 + $0x8e] sm:$0xff]
        %v2283 = vld [vmem:[#allocation2 + $0x96] sm:$0xff]
        %s2284 = scalar_lea.vmem %s5, 224
        %v2285 = vld [vmem:[%s2284] sm:$0xff]
        %v2286 = vld [vmem:[%s2284 + $0x8] sm:$0xff]
        %v2287 = vld [vmem:[%s2284 + $0x10] sm:$0xff]
        %v2288 = vld [vmem:[%s2284 + $0x18] sm:$0xff]
        %v2290 = vsel %vm1115, %v2266, 0
        %v2293 = vsel %vm1115, %v2267, 0
        %v2296 = vsel %vm1115, %v2268, 0
        %v2299 = vsel %vm1115, %v2269, 0
        %v2302 = vsel %vm1115, %v2270, 0
        %v2305 = vsel %vm1115, %v2271, 0
        %v2308 = vsel %vm1115, %v2272, 0
        %v2311 = vsel %vm1115, %v2273, 0
        %v2314 = vsel %vm1115, %v2274, 0
        %v2317 = vsel %vm1115, %v2275, 0
        %v2320 = vsel %vm1115, %v2276, 0
        %v2323 = vsel %vm1115, %v2277, 0
        %v2326 = vsel %vm1115, %v2278, 0
        %v2329 = vsel %vm1115, %v2279, 0
        %v2332 = vsel %vm1115, %v2280, 0
        %v2335 = vsel %vm1115, %v2281, 0
        %v2338 = vsel %vm1115, %v2282, 0
        %v2341 = vsel %vm1115, %v2283, 0
        %2343 = vmatpush.msra.mxu0 0.0
        %2344 = vmatpush.msra.mxu0 0.0
        %2345 = vmatpush.msra.mxu0 0.0
        %2346 = vmatpush.msra.mxu0 0.0
        %2347 = vmatpush.msra.mxu0 0.0
        %2348 = vmatpush.msra.mxu0 0.0
        %2349 = vmatpush.msra.mxu0 0.0
        %2350 = vmatpush.msra.mxu0 0.0
        %2351 = vmatpush.msra.mxu0 0.0
        %2352 = vmatpush.msra.mxu0 0.0
        %2353 = vmatpush.msra.mxu0 0.0
        %2354 = vmatpush.msra.mxu0 0.0
        %2355 = vmatpush.msra.mxu0 %v2288
        %2356 = vmatpush.msra.mxu0 %v2287
        %2357 = vmatpush.msra.mxu0 %v2286
        %2358 = vmatpush.msra.mxu0 %v2285
        %2359 = vmatmul.f32.gmra.mxu0 %v2290
        %v2360 = vpop.f32.mrf.mxu0
        %v2361 = vadd.f32 0.0, %v2360
        %2362 = vmatmul.f32.gmra.mxu0 %v2293
        %v2363 = vpop.f32.mrf.mxu0
        %v2364 = vadd.f32 0.0, %v2363
        %2365 = vmatmul.f32.gmra.mxu0 %v2296
        %v2366 = vpop.f32.mrf.mxu0
        %v2367 = vadd.f32 0.0, %v2366
        %2368 = vmatmul.f32.gmra.mxu0 %v2299
        %v2369 = vpop.f32.mrf.mxu0
        %v2370 = vadd.f32 0.0, %v2369
        %2371 = vmatmul.f32.gmra.mxu0 %v2302
        %v2372 = vpop.f32.mrf.mxu0
        %v2373 = vadd.f32 0.0, %v2372
        %2374 = vmatmul.f32.gmra.mxu0 %v2305
        %v2375 = vpop.f32.mrf.mxu0
        %v2376 = vadd.f32 0.0, %v2375
        %2377 = vmatmul.f32.gmra.mxu0 %v2308
        %v2378 = vpop.f32.mrf.mxu0
        %v2379 = vadd.f32 0.0, %v2378
        %2380 = vmatmul.f32.gmra.mxu0 %v2311
        %v2381 = vpop.f32.mrf.mxu0
        %v2382 = vadd.f32 0.0, %v2381
        %2383 = vmatmul.f32.gmra.mxu0 %v2314
        %v2384 = vpop.f32.mrf.mxu0
        %v2385 = vadd.f32 0.0, %v2384
        %2386 = vmatmul.f32.gmra.mxu0 %v2317
        %v2387 = vpop.f32.mrf.mxu0
        %v2388 = vadd.f32 0.0, %v2387
        %2389 = vmatmul.f32.gmra.mxu0 %v2320
        %v2390 = vpop.f32.mrf.mxu0
        %v2391 = vadd.f32 0.0, %v2390
        %2392 = vmatmul.f32.gmra.mxu0 %v2323
        %v2393 = vpop.f32.mrf.mxu0
        %v2394 = vadd.f32 0.0, %v2393
        %2395 = vmatmul.f32.gmra.mxu0 %v2326
        %v2396 = vpop.f32.mrf.mxu0
        %v2397 = vadd.f32 0.0, %v2396
        %2398 = vmatmul.f32.gmra.mxu0 %v2329
        %v2399 = vpop.f32.mrf.mxu0
        %v2400 = vadd.f32 0.0, %v2399
        %2401 = vmatmul.f32.gmra.mxu0 %v2332
        %v2402 = vpop.f32.mrf.mxu0
        %v2403 = vadd.f32 0.0, %v2402
        %2404 = vmatmul.f32.gmra.mxu0 %v2335
        %v2405 = vpop.f32.mrf.mxu0
        %v2406 = vadd.f32 0.0, %v2405
        %2407 = vmatmul.f32.gmra.mxu0 %v2338
        %v2408 = vpop.f32.mrf.mxu0
        %v2409 = vadd.f32 0.0, %v2408
        %2410 = vmatmul.f32.gmra.mxu0 %v2341
        %v2411 = vpop.f32.mrf.mxu0
        %v2412 = vadd.f32 0.0, %v2411
        %2413 = vdwg.mxu0
        %v2414 = vadd.f32 %v2248, %v2361
        %v2415 = vadd.f32 %v2249, %v2364
        %v2416 = vadd.f32 %v2250, %v2367
        %v2417 = vadd.f32 %v2251, %v2370
        %v2418 = vadd.f32 %v2252, %v2373
        %v2419 = vadd.f32 %v2253, %v2376
        %v2420 = vadd.f32 %v2254, %v2379
        %v2421 = vadd.f32 %v2255, %v2382
        %v2422 = vadd.f32 %v2256, %v2385
        %v2423 = vadd.f32 %v2257, %v2388
        %v2424 = vadd.f32 %v2258, %v2391
        %v2425 = vadd.f32 %v2259, %v2394
        %v2426 = vadd.f32 %v2260, %v2397
        %v2427 = vadd.f32 %v2261, %v2400
        %v2428 = vadd.f32 %v2262, %v2403
        %v2429 = vadd.f32 %v2263, %v2406
        %v2430 = vadd.f32 %v2264, %v2409
        %v2431 = vadd.f32 %v2265, %v2412
        %v2432 = vld [vmem:[#allocation2 + $0xf] sm:$0xff]
        %v2433 = vld [vmem:[#allocation2 + $0x17] sm:$0xff]
        %v2434 = vld [vmem:[#allocation2 + $0x1f] sm:$0xff]
        %v2435 = vld [vmem:[#allocation2 + $0x27] sm:$0xff]
        %v2436 = vld [vmem:[#allocation2 + $0x2f] sm:$0xff]
        %v2437 = vld [vmem:[#allocation2 + $0x37] sm:$0xff]
        %v2438 = vld [vmem:[#allocation2 + $0x3f] sm:$0xff]
        %v2439 = vld [vmem:[#allocation2 + $0x47] sm:$0xff]
        %v2440 = vld [vmem:[#allocation2 + $0x4f] sm:$0xff]
        %v2441 = vld [vmem:[#allocation2 + $0x57] sm:$0xff]
        %v2442 = vld [vmem:[#allocation2 + $0x5f] sm:$0xff]
        %v2443 = vld [vmem:[#allocation2 + $0x67] sm:$0xff]
        %v2444 = vld [vmem:[#allocation2 + $0x6f] sm:$0xff]
        %v2445 = vld [vmem:[#allocation2 + $0x77] sm:$0xff]
        %v2446 = vld [vmem:[#allocation2 + $0x7f] sm:$0xff]
        %v2447 = vld [vmem:[#allocation2 + $0x87] sm:$0xff]
        %v2448 = vld [vmem:[#allocation2 + $0x8f] sm:$0xff]
        %v2449 = vld [vmem:[#allocation2 + $0x97] sm:$0xff]
        %s2450 = scalar_lea.vmem %s5, 256
        %v2451 = vld [vmem:[%s2450] sm:$0xff]
        %v2452 = vld [vmem:[%s2450 + $0x8] sm:$0xff]
        %v2453 = vld [vmem:[%s2450 + $0x10] sm:$0xff]
        %v2454 = vld [vmem:[%s2450 + $0x18] sm:$0xff]
        %v2456 = vsel %vm1115, %v2432, 0
        %v2459 = vsel %vm1115, %v2433, 0
        %v2462 = vsel %vm1115, %v2434, 0
        %v2465 = vsel %vm1115, %v2435, 0
        %v2468 = vsel %vm1115, %v2436, 0
        %v2471 = vsel %vm1115, %v2437, 0
        %v2474 = vsel %vm1115, %v2438, 0
        %v2477 = vsel %vm1115, %v2439, 0
        %v2480 = vsel %vm1115, %v2440, 0
        %v2483 = vsel %vm1115, %v2441, 0
        %v2486 = vsel %vm1115, %v2442, 0
        %v2489 = vsel %vm1115, %v2443, 0
        %v2492 = vsel %vm1115, %v2444, 0
        %v2495 = vsel %vm1115, %v2445, 0
        %v2498 = vsel %vm1115, %v2446, 0
        %v2501 = vsel %vm1115, %v2447, 0
        %v2504 = vsel %vm1115, %v2448, 0
        %v2507 = vsel %vm1115, %v2449, 0
        %2509 = vmatpush.msra.mxu0 0.0
        %2510 = vmatpush.msra.mxu0 0.0
        %2511 = vmatpush.msra.mxu0 0.0
        %2512 = vmatpush.msra.mxu0 0.0
        %2513 = vmatpush.msra.mxu0 0.0
        %2514 = vmatpush.msra.mxu0 0.0
        %2515 = vmatpush.msra.mxu0 0.0
        %2516 = vmatpush.msra.mxu0 0.0
        %2517 = vmatpush.msra.mxu0 0.0
        %2518 = vmatpush.msra.mxu0 0.0
        %2519 = vmatpush.msra.mxu0 0.0
        %2520 = vmatpush.msra.mxu0 0.0
        %2521 = vmatpush.msra.mxu0 %v2454
        %2522 = vmatpush.msra.mxu0 %v2453
        %2523 = vmatpush.msra.mxu0 %v2452
        %2524 = vmatpush.msra.mxu0 %v2451
        %2525 = vmatmul.f32.gmra.mxu0 %v2456
        %v2526 = vpop.f32.mrf.mxu0
        %v2527 = vadd.f32 0.0, %v2526
        %2528 = vmatmul.f32.gmra.mxu0 %v2459
        %v2529 = vpop.f32.mrf.mxu0
        %v2530 = vadd.f32 0.0, %v2529
        %2531 = vmatmul.f32.gmra.mxu0 %v2462
        %v2532 = vpop.f32.mrf.mxu0
        %v2533 = vadd.f32 0.0, %v2532
        %2534 = vmatmul.f32.gmra.mxu0 %v2465
        %v2535 = vpop.f32.mrf.mxu0
        %v2536 = vadd.f32 0.0, %v2535
        %2537 = vmatmul.f32.gmra.mxu0 %v2468
        %v2538 = vpop.f32.mrf.mxu0
        %v2539 = vadd.f32 0.0, %v2538
        %2540 = vmatmul.f32.gmra.mxu0 %v2471
        %v2541 = vpop.f32.mrf.mxu0
        %v2542 = vadd.f32 0.0, %v2541
        %2543 = vmatmul.f32.gmra.mxu0 %v2474
        %v2544 = vpop.f32.mrf.mxu0
        %v2545 = vadd.f32 0.0, %v2544
        %2546 = vmatmul.f32.gmra.mxu0 %v2477
        %v2547 = vpop.f32.mrf.mxu0
        %v2548 = vadd.f32 0.0, %v2547
        %2549 = vmatmul.f32.gmra.mxu0 %v2480
        %v2550 = vpop.f32.mrf.mxu0
        %v2551 = vadd.f32 0.0, %v2550
        %2552 = vmatmul.f32.gmra.mxu0 %v2483
        %v2553 = vpop.f32.mrf.mxu0
        %v2554 = vadd.f32 0.0, %v2553
        %2555 = vmatmul.f32.gmra.mxu0 %v2486
        %v2556 = vpop.f32.mrf.mxu0
        %v2557 = vadd.f32 0.0, %v2556
        %2558 = vmatmul.f32.gmra.mxu0 %v2489
        %v2559 = vpop.f32.mrf.mxu0
        %v2560 = vadd.f32 0.0, %v2559
        %2561 = vmatmul.f32.gmra.mxu0 %v2492
        %v2562 = vpop.f32.mrf.mxu0
        %v2563 = vadd.f32 0.0, %v2562
        %2564 = vmatmul.f32.gmra.mxu0 %v2495
        %v2565 = vpop.f32.mrf.mxu0
        %v2566 = vadd.f32 0.0, %v2565
        %2567 = vmatmul.f32.gmra.mxu0 %v2498
        %v2568 = vpop.f32.mrf.mxu0
        %v2569 = vadd.f32 0.0, %v2568
        %2570 = vmatmul.f32.gmra.mxu0 %v2501
        %v2571 = vpop.f32.mrf.mxu0
        %v2572 = vadd.f32 0.0, %v2571
        %2573 = vmatmul.f32.gmra.mxu0 %v2504
        %v2574 = vpop.f32.mrf.mxu0
        %v2575 = vadd.f32 0.0, %v2574
        %2576 = vmatmul.f32.gmra.mxu0 %v2507
        %v2577 = vpop.f32.mrf.mxu0
        %v2578 = vadd.f32 0.0, %v2577
        %2579 = vdwg.mxu0
        %v2580 = vadd.f32 %v2414, %v2527
        %v2581 = vadd.f32 %v2415, %v2530
        %v2582 = vadd.f32 %v2416, %v2533
        %v2583 = vadd.f32 %v2417, %v2536
        %v2584 = vadd.f32 %v2418, %v2539
        %v2585 = vadd.f32 %v2419, %v2542
        %v2586 = vadd.f32 %v2420, %v2545
        %v2587 = vadd.f32 %v2421, %v2548
        %v2588 = vadd.f32 %v2422, %v2551
        %v2589 = vadd.f32 %v2423, %v2554
        %v2590 = vadd.f32 %v2424, %v2557
        %v2591 = vadd.f32 %v2425, %v2560
        %v2592 = vadd.f32 %v2426, %v2563
        %v2593 = vadd.f32 %v2427, %v2566
        %v2594 = vadd.f32 %v2428, %v2569
        %v2595 = vadd.f32 %v2429, %v2572
        %v2596 = vadd.f32 %v2430, %v2575
        %v2597 = vadd.f32 %v2431, %v2578
        %v2598 = vld [vmem:[#allocation2 + $0x10] sm:$0xff]
        %v2599 = vld [vmem:[#allocation2 + $0x18] sm:$0xff]
        %v2600 = vld [vmem:[#allocation2 + $0x20] sm:$0xff]
        %v2601 = vld [vmem:[#allocation2 + $0x28] sm:$0xff]
        %v2602 = vld [vmem:[#allocation2 + $0x30] sm:$0xff]
        %v2603 = vld [vmem:[#allocation2 + $0x38] sm:$0xff]
        %v2604 = vld [vmem:[#allocation2 + $0x40] sm:$0xff]
        %v2605 = vld [vmem:[#allocation2 + $0x48] sm:$0xff]
        %v2606 = vld [vmem:[#allocation2 + $0x50] sm:$0xff]
        %v2607 = vld [vmem:[#allocation2 + $0x58] sm:$0xff]
        %v2608 = vld [vmem:[#allocation2 + $0x60] sm:$0xff]
        %v2609 = vld [vmem:[#allocation2 + $0x68] sm:$0xff]
        %v2610 = vld [vmem:[#allocation2 + $0x70] sm:$0xff]
        %v2611 = vld [vmem:[#allocation2 + $0x78] sm:$0xff]
        %v2612 = vld [vmem:[#allocation2 + $0x80] sm:$0xff]
        %v2613 = vld [vmem:[#allocation2 + $0x88] sm:$0xff]
        %v2614 = vld [vmem:[#allocation2 + $0x90] sm:$0xff]
        %v2615 = vld [vmem:[#allocation2 + $0x98] sm:$0xff]
        %s2616 = scalar_lea.vmem %s5, 288
        %v2617 = vld [vmem:[%s2616] sm:$0xff]
        %v2618 = vld [vmem:[%s2616 + $0x8] sm:$0xff]
        %v2619 = vld [vmem:[%s2616 + $0x10] sm:$0xff]
        %v2620 = vld [vmem:[%s2616 + $0x18] sm:$0xff]
        %v2622 = vsel %vm1115, %v2598, 0
        %v2625 = vsel %vm1115, %v2599, 0
        %v2628 = vsel %vm1115, %v2600, 0
        %v2631 = vsel %vm1115, %v2601, 0
        %v2634 = vsel %vm1115, %v2602, 0
        %v2637 = vsel %vm1115, %v2603, 0
        %v2640 = vsel %vm1115, %v2604, 0
        %v2643 = vsel %vm1115, %v2605, 0
        %v2646 = vsel %vm1115, %v2606, 0
        %v2649 = vsel %vm1115, %v2607, 0
        %v2652 = vsel %vm1115, %v2608, 0
        %v2655 = vsel %vm1115, %v2609, 0
        %v2658 = vsel %vm1115, %v2610, 0
        %v2661 = vsel %vm1115, %v2611, 0
        %v2664 = vsel %vm1115, %v2612, 0
        %v2667 = vsel %vm1115, %v2613, 0
        %v2670 = vsel %vm1115, %v2614, 0
        %v2673 = vsel %vm1115, %v2615, 0
        %2675 = vmatpush.msra.mxu0 0.0
        %2676 = vmatpush.msra.mxu0 0.0
        %2677 = vmatpush.msra.mxu0 0.0
        %2678 = vmatpush.msra.mxu0 0.0
        %2679 = vmatpush.msra.mxu0 0.0
        %2680 = vmatpush.msra.mxu0 0.0
        %2681 = vmatpush.msra.mxu0 0.0
        %2682 = vmatpush.msra.mxu0 0.0
        %2683 = vmatpush.msra.mxu0 0.0
        %2684 = vmatpush.msra.mxu0 0.0
        %2685 = vmatpush.msra.mxu0 0.0
        %2686 = vmatpush.msra.mxu0 0.0
        %2687 = vmatpush.msra.mxu0 %v2620
        %2688 = vmatpush.msra.mxu0 %v2619
        %2689 = vmatpush.msra.mxu0 %v2618
        %2690 = vmatpush.msra.mxu0 %v2617
        %2691 = vmatmul.f32.gmra.mxu0 %v2622
        %v2692 = vpop.f32.mrf.mxu0
        %v2693 = vadd.f32 0.0, %v2692
        %2694 = vmatmul.f32.gmra.mxu0 %v2625
        %v2695 = vpop.f32.mrf.mxu0
        %v2696 = vadd.f32 0.0, %v2695
        %2697 = vmatmul.f32.gmra.mxu0 %v2628
        %v2698 = vpop.f32.mrf.mxu0
        %v2699 = vadd.f32 0.0, %v2698
        %2700 = vmatmul.f32.gmra.mxu0 %v2631
        %v2701 = vpop.f32.mrf.mxu0
        %v2702 = vadd.f32 0.0, %v2701
        %2703 = vmatmul.f32.gmra.mxu0 %v2634
        %v2704 = vpop.f32.mrf.mxu0
        %v2705 = vadd.f32 0.0, %v2704
        %2706 = vmatmul.f32.gmra.mxu0 %v2637
        %v2707 = vpop.f32.mrf.mxu0
        %v2708 = vadd.f32 0.0, %v2707
        %2709 = vmatmul.f32.gmra.mxu0 %v2640
        %v2710 = vpop.f32.mrf.mxu0
        %v2711 = vadd.f32 0.0, %v2710
        %2712 = vmatmul.f32.gmra.mxu0 %v2643
        %v2713 = vpop.f32.mrf.mxu0
        %v2714 = vadd.f32 0.0, %v2713
        %2715 = vmatmul.f32.gmra.mxu0 %v2646
        %v2716 = vpop.f32.mrf.mxu0
        %v2717 = vadd.f32 0.0, %v2716
        %2718 = vmatmul.f32.gmra.mxu0 %v2649
        %v2719 = vpop.f32.mrf.mxu0
        %v2720 = vadd.f32 0.0, %v2719
        %2721 = vmatmul.f32.gmra.mxu0 %v2652
        %v2722 = vpop.f32.mrf.mxu0
        %v2723 = vadd.f32 0.0, %v2722
        %2724 = vmatmul.f32.gmra.mxu0 %v2655
        %v2725 = vpop.f32.mrf.mxu0
        %v2726 = vadd.f32 0.0, %v2725
        %2727 = vmatmul.f32.gmra.mxu0 %v2658
        %v2728 = vpop.f32.mrf.mxu0
        %v2729 = vadd.f32 0.0, %v2728
        %2730 = vmatmul.f32.gmra.mxu0 %v2661
        %v2731 = vpop.f32.mrf.mxu0
        %v2732 = vadd.f32 0.0, %v2731
        %2733 = vmatmul.f32.gmra.mxu0 %v2664
        %v2734 = vpop.f32.mrf.mxu0
        %v2735 = vadd.f32 0.0, %v2734
        %2736 = vmatmul.f32.gmra.mxu0 %v2667
        %v2737 = vpop.f32.mrf.mxu0
        %v2738 = vadd.f32 0.0, %v2737
        %2739 = vmatmul.f32.gmra.mxu0 %v2670
        %v2740 = vpop.f32.mrf.mxu0
        %v2741 = vadd.f32 0.0, %v2740
        %2742 = vmatmul.f32.gmra.mxu0 %v2673
        %v2743 = vpop.f32.mrf.mxu0
        %v2744 = vadd.f32 0.0, %v2743
        %2745 = vdwg.mxu0
        %v2746 = vadd.f32 %v2580, %v2693
        %v2747 = vadd.f32 %v2581, %v2696
        %v2748 = vadd.f32 %v2582, %v2699
        %v2749 = vadd.f32 %v2583, %v2702
        %v2750 = vadd.f32 %v2584, %v2705
        %v2751 = vadd.f32 %v2585, %v2708
        %v2752 = vadd.f32 %v2586, %v2711
        %v2753 = vadd.f32 %v2587, %v2714
        %v2754 = vadd.f32 %v2588, %v2717
        %v2755 = vadd.f32 %v2589, %v2720
        %v2756 = vadd.f32 %v2590, %v2723
        %v2757 = vadd.f32 %v2591, %v2726
        %v2758 = vadd.f32 %v2592, %v2729
        %v2759 = vadd.f32 %v2593, %v2732
        %v2760 = vadd.f32 %v2594, %v2735
        %v2761 = vadd.f32 %v2595, %v2738
        %v2762 = vadd.f32 %v2596, %v2741
        %v2763 = vadd.f32 %v2597, %v2744
        %v2764 = vld [vmem:[#allocation2 + $0x18] sm:$0xff]
        %v2765 = vld [vmem:[#allocation2 + $0x20] sm:$0xff]
        %v2766 = vld [vmem:[#allocation2 + $0x28] sm:$0xff]
        %v2767 = vld [vmem:[#allocation2 + $0x30] sm:$0xff]
        %v2768 = vld [vmem:[#allocation2 + $0x38] sm:$0xff]
        %v2769 = vld [vmem:[#allocation2 + $0x40] sm:$0xff]
        %v2770 = vld [vmem:[#allocation2 + $0x48] sm:$0xff]
        %v2771 = vld [vmem:[#allocation2 + $0x50] sm:$0xff]
        %v2772 = vld [vmem:[#allocation2 + $0x58] sm:$0xff]
        %v2773 = vld [vmem:[#allocation2 + $0x60] sm:$0xff]
        %v2774 = vld [vmem:[#allocation2 + $0x68] sm:$0xff]
        %v2775 = vld [vmem:[#allocation2 + $0x70] sm:$0xff]
        %v2776 = vld [vmem:[#allocation2 + $0x78] sm:$0xff]
        %v2777 = vld [vmem:[#allocation2 + $0x80] sm:$0xff]
        %v2778 = vld [vmem:[#allocation2 + $0x88] sm:$0xff]
        %v2779 = vld [vmem:[#allocation2 + $0x90] sm:$0xff]
        %v2780 = vld [vmem:[#allocation2 + $0x98] sm:$0xff]
        %v2781 = vld [vmem:[#allocation2 + $0xa0] sm:$0xff]
        %s2782 = scalar_lea.vmem %s5, 320
        %v2783 = vld [vmem:[%s2782] sm:$0xff]
        %v2784 = vld [vmem:[%s2782 + $0x8] sm:$0xff]
        %v2785 = vld [vmem:[%s2782 + $0x10] sm:$0xff]
        %v2786 = vld [vmem:[%s2782 + $0x18] sm:$0xff]
        %v2788 = vsel %vm1115, %v2764, 0
        %v2791 = vsel %vm1115, %v2765, 0
        %v2794 = vsel %vm1115, %v2766, 0
        %v2797 = vsel %vm1115, %v2767, 0
        %v2800 = vsel %vm1115, %v2768, 0
        %v2803 = vsel %vm1115, %v2769, 0
        %v2806 = vsel %vm1115, %v2770, 0
        %v2809 = vsel %vm1115, %v2771, 0
        %v2812 = vsel %vm1115, %v2772, 0
        %v2815 = vsel %vm1115, %v2773, 0
        %v2818 = vsel %vm1115, %v2774, 0
        %v2821 = vsel %vm1115, %v2775, 0
        %v2824 = vsel %vm1115, %v2776, 0
        %v2827 = vsel %vm1115, %v2777, 0
        %v2830 = vsel %vm1115, %v2778, 0
        %v2833 = vsel %vm1115, %v2779, 0
        %v2836 = vsel %vm1115, %v2780, 0
        %v2839 = vsel %vm1115, %v2781, 0
        %2841 = vmatpush.msra.mxu0 0.0
        %2842 = vmatpush.msra.mxu0 0.0
        %2843 = vmatpush.msra.mxu0 0.0
        %2844 = vmatpush.msra.mxu0 0.0
        %2845 = vmatpush.msra.mxu0 0.0
        %2846 = vmatpush.msra.mxu0 0.0
        %2847 = vmatpush.msra.mxu0 0.0
        %2848 = vmatpush.msra.mxu0 0.0
        %2849 = vmatpush.msra.mxu0 0.0
        %2850 = vmatpush.msra.mxu0 0.0
        %2851 = vmatpush.msra.mxu0 0.0
        %2852 = vmatpush.msra.mxu0 0.0
        %2853 = vmatpush.msra.mxu0 %v2786
        %2854 = vmatpush.msra.mxu0 %v2785
        %2855 = vmatpush.msra.mxu0 %v2784
        %2856 = vmatpush.msra.mxu0 %v2783
        %2857 = vmatmul.f32.gmra.mxu0 %v2788
        %v2858 = vpop.f32.mrf.mxu0
        %v2859 = vadd.f32 0.0, %v2858
        %2860 = vmatmul.f32.gmra.mxu0 %v2791
        %v2861 = vpop.f32.mrf.mxu0
        %v2862 = vadd.f32 0.0, %v2861
        %2863 = vmatmul.f32.gmra.mxu0 %v2794
        %v2864 = vpop.f32.mrf.mxu0
        %v2865 = vadd.f32 0.0, %v2864
        %2866 = vmatmul.f32.gmra.mxu0 %v2797
        %v2867 = vpop.f32.mrf.mxu0
        %v2868 = vadd.f32 0.0, %v2867
        %2869 = vmatmul.f32.gmra.mxu0 %v2800
        %v2870 = vpop.f32.mrf.mxu0
        %v2871 = vadd.f32 0.0, %v2870
        %2872 = vmatmul.f32.gmra.mxu0 %v2803
        %v2873 = vpop.f32.mrf.mxu0
        %v2874 = vadd.f32 0.0, %v2873
        %2875 = vmatmul.f32.gmra.mxu0 %v2806
        %v2876 = vpop.f32.mrf.mxu0
        %v2877 = vadd.f32 0.0, %v2876
        %2878 = vmatmul.f32.gmra.mxu0 %v2809
        %v2879 = vpop.f32.mrf.mxu0
        %v2880 = vadd.f32 0.0, %v2879
        %2881 = vmatmul.f32.gmra.mxu0 %v2812
        %v2882 = vpop.f32.mrf.mxu0
        %v2883 = vadd.f32 0.0, %v2882
        %2884 = vmatmul.f32.gmra.mxu0 %v2815
        %v2885 = vpop.f32.mrf.mxu0
        %v2886 = vadd.f32 0.0, %v2885
        %2887 = vmatmul.f32.gmra.mxu0 %v2818
        %v2888 = vpop.f32.mrf.mxu0
        %v2889 = vadd.f32 0.0, %v2888
        %2890 = vmatmul.f32.gmra.mxu0 %v2821
        %v2891 = vpop.f32.mrf.mxu0
        %v2892 = vadd.f32 0.0, %v2891
        %2893 = vmatmul.f32.gmra.mxu0 %v2824
        %v2894 = vpop.f32.mrf.mxu0
        %v2895 = vadd.f32 0.0, %v2894
        %2896 = vmatmul.f32.gmra.mxu0 %v2827
        %v2897 = vpop.f32.mrf.mxu0
        %v2898 = vadd.f32 0.0, %v2897
        %2899 = vmatmul.f32.gmra.mxu0 %v2830
        %v2900 = vpop.f32.mrf.mxu0
        %v2901 = vadd.f32 0.0, %v2900
        %2902 = vmatmul.f32.gmra.mxu0 %v2833
        %v2903 = vpop.f32.mrf.mxu0
        %v2904 = vadd.f32 0.0, %v2903
        %2905 = vmatmul.f32.gmra.mxu0 %v2836
        %v2906 = vpop.f32.mrf.mxu0
        %v2907 = vadd.f32 0.0, %v2906
        %2908 = vmatmul.f32.gmra.mxu0 %v2839
        %v2909 = vpop.f32.mrf.mxu0
        %v2910 = vadd.f32 0.0, %v2909
        %2911 = vdwg.mxu0
        %v2912 = vadd.f32 %v2746, %v2859
        %v2913 = vadd.f32 %v2747, %v2862
        %v2914 = vadd.f32 %v2748, %v2865
        %v2915 = vadd.f32 %v2749, %v2868
        %v2916 = vadd.f32 %v2750, %v2871
        %v2917 = vadd.f32 %v2751, %v2874
        %v2918 = vadd.f32 %v2752, %v2877
        %v2919 = vadd.f32 %v2753, %v2880
        %v2920 = vadd.f32 %v2754, %v2883
        %v2921 = vadd.f32 %v2755, %v2886
        %v2922 = vadd.f32 %v2756, %v2889
        %v2923 = vadd.f32 %v2757, %v2892
        %v2924 = vadd.f32 %v2758, %v2895
        %v2925 = vadd.f32 %v2759, %v2898
        %v2926 = vadd.f32 %v2760, %v2901
        %v2927 = vadd.f32 %v2761, %v2904
        %v2928 = vadd.f32 %v2762, %v2907
        %v2929 = vadd.f32 %v2763, %v2910
        %v2930 = vld [vmem:[#allocation2 + $0x19] sm:$0xff]
        %v2931 = vld [vmem:[#allocation2 + $0x21] sm:$0xff]
        %v2932 = vld [vmem:[#allocation2 + $0x29] sm:$0xff]
        %v2933 = vld [vmem:[#allocation2 + $0x31] sm:$0xff]
        %v2934 = vld [vmem:[#allocation2 + $0x39] sm:$0xff]
        %v2935 = vld [vmem:[#allocation2 + $0x41] sm:$0xff]
        %v2936 = vld [vmem:[#allocation2 + $0x49] sm:$0xff]
        %v2937 = vld [vmem:[#allocation2 + $0x51] sm:$0xff]
        %v2938 = vld [vmem:[#allocation2 + $0x59] sm:$0xff]
        %v2939 = vld [vmem:[#allocation2 + $0x61] sm:$0xff]
        %v2940 = vld [vmem:[#allocation2 + $0x69] sm:$0xff]
        %v2941 = vld [vmem:[#allocation2 + $0x71] sm:$0xff]
        %v2942 = vld [vmem:[#allocation2 + $0x79] sm:$0xff]
        %v2943 = vld [vmem:[#allocation2 + $0x81] sm:$0xff]
        %v2944 = vld [vmem:[#allocation2 + $0x89] sm:$0xff]
        %v2945 = vld [vmem:[#allocation2 + $0x91] sm:$0xff]
        %v2946 = vld [vmem:[#allocation2 + $0x99] sm:$0xff]
        %v2947 = vld [vmem:[#allocation2 + $0xa1] sm:$0xff]
        %s2948 = scalar_lea.vmem %s5, 352
        %v2949 = vld [vmem:[%s2948] sm:$0xff]
        %v2950 = vld [vmem:[%s2948 + $0x8] sm:$0xff]
        %v2951 = vld [vmem:[%s2948 + $0x10] sm:$0xff]
        %v2952 = vld [vmem:[%s2948 + $0x18] sm:$0xff]
        %v2954 = vsel %vm1115, %v2930, 0
        %v2957 = vsel %vm1115, %v2931, 0
        %v2960 = vsel %vm1115, %v2932, 0
        %v2963 = vsel %vm1115, %v2933, 0
        %v2966 = vsel %vm1115, %v2934, 0
        %v2969 = vsel %vm1115, %v2935, 0
        %v2972 = vsel %vm1115, %v2936, 0
        %v2975 = vsel %vm1115, %v2937, 0
        %v2978 = vsel %vm1115, %v2938, 0
        %v2981 = vsel %vm1115, %v2939, 0
        %v2984 = vsel %vm1115, %v2940, 0
        %v2987 = vsel %vm1115, %v2941, 0
        %v2990 = vsel %vm1115, %v2942, 0
        %v2993 = vsel %vm1115, %v2943, 0
        %v2996 = vsel %vm1115, %v2944, 0
        %v2999 = vsel %vm1115, %v2945, 0
        %v3002 = vsel %vm1115, %v2946, 0
        %v3005 = vsel %vm1115, %v2947, 0
        %3007 = vmatpush.msra.mxu0 0.0
        %3008 = vmatpush.msra.mxu0 0.0
        %3009 = vmatpush.msra.mxu0 0.0
        %3010 = vmatpush.msra.mxu0 0.0
        %3011 = vmatpush.msra.mxu0 0.0
        %3012 = vmatpush.msra.mxu0 0.0
        %3013 = vmatpush.msra.mxu0 0.0
        %3014 = vmatpush.msra.mxu0 0.0
        %3015 = vmatpush.msra.mxu0 0.0
        %3016 = vmatpush.msra.mxu0 0.0
        %3017 = vmatpush.msra.mxu0 0.0
        %3018 = vmatpush.msra.mxu0 0.0
        %3019 = vmatpush.msra.mxu0 %v2952
        %3020 = vmatpush.msra.mxu0 %v2951
        %3021 = vmatpush.msra.mxu0 %v2950
        %3022 = vmatpush.msra.mxu0 %v2949
        %3023 = vmatmul.f32.gmra.mxu0 %v2954
        %v3024 = vpop.f32.mrf.mxu0
        %v3025 = vadd.f32 0.0, %v3024
        %3026 = vmatmul.f32.gmra.mxu0 %v2957
        %v3027 = vpop.f32.mrf.mxu0
        %v3028 = vadd.f32 0.0, %v3027
        %3029 = vmatmul.f32.gmra.mxu0 %v2960
        %v3030 = vpop.f32.mrf.mxu0
        %v3031 = vadd.f32 0.0, %v3030
        %3032 = vmatmul.f32.gmra.mxu0 %v2963
        %v3033 = vpop.f32.mrf.mxu0
        %v3034 = vadd.f32 0.0, %v3033
        %3035 = vmatmul.f32.gmra.mxu0 %v2966
        %v3036 = vpop.f32.mrf.mxu0
        %v3037 = vadd.f32 0.0, %v3036
        %3038 = vmatmul.f32.gmra.mxu0 %v2969
        %v3039 = vpop.f32.mrf.mxu0
        %v3040 = vadd.f32 0.0, %v3039
        %3041 = vmatmul.f32.gmra.mxu0 %v2972
        %v3042 = vpop.f32.mrf.mxu0
        %v3043 = vadd.f32 0.0, %v3042
        %3044 = vmatmul.f32.gmra.mxu0 %v2975
        %v3045 = vpop.f32.mrf.mxu0
        %v3046 = vadd.f32 0.0, %v3045
        %3047 = vmatmul.f32.gmra.mxu0 %v2978
        %v3048 = vpop.f32.mrf.mxu0
        %v3049 = vadd.f32 0.0, %v3048
        %3050 = vmatmul.f32.gmra.mxu0 %v2981
        %v3051 = vpop.f32.mrf.mxu0
        %v3052 = vadd.f32 0.0, %v3051
        %3053 = vmatmul.f32.gmra.mxu0 %v2984
        %v3054 = vpop.f32.mrf.mxu0
        %v3055 = vadd.f32 0.0, %v3054
        %3056 = vmatmul.f32.gmra.mxu0 %v2987
        %v3057 = vpop.f32.mrf.mxu0
        %v3058 = vadd.f32 0.0, %v3057
        %3059 = vmatmul.f32.gmra.mxu0 %v2990
        %v3060 = vpop.f32.mrf.mxu0
        %v3061 = vadd.f32 0.0, %v3060
        %3062 = vmatmul.f32.gmra.mxu0 %v2993
        %v3063 = vpop.f32.mrf.mxu0
        %v3064 = vadd.f32 0.0, %v3063
        %3065 = vmatmul.f32.gmra.mxu0 %v2996
        %v3066 = vpop.f32.mrf.mxu0
        %v3067 = vadd.f32 0.0, %v3066
        %3068 = vmatmul.f32.gmra.mxu0 %v2999
        %v3069 = vpop.f32.mrf.mxu0
        %v3070 = vadd.f32 0.0, %v3069
        %3071 = vmatmul.f32.gmra.mxu0 %v3002
        %v3072 = vpop.f32.mrf.mxu0
        %v3073 = vadd.f32 0.0, %v3072
        %3074 = vmatmul.f32.gmra.mxu0 %v3005
        %v3075 = vpop.f32.mrf.mxu0
        %v3076 = vadd.f32 0.0, %v3075
        %3077 = vdwg.mxu0
        %v3078 = vadd.f32 %v2912, %v3025
        %v3079 = vadd.f32 %v2913, %v3028
        %v3080 = vadd.f32 %v2914, %v3031
        %v3081 = vadd.f32 %v2915, %v3034
        %v3082 = vadd.f32 %v2916, %v3037
        %v3083 = vadd.f32 %v2917, %v3040
        %v3084 = vadd.f32 %v2918, %v3043
        %v3085 = vadd.f32 %v2919, %v3046
        %v3086 = vadd.f32 %v2920, %v3049
        %v3087 = vadd.f32 %v2921, %v3052
        %v3088 = vadd.f32 %v2922, %v3055
        %v3089 = vadd.f32 %v2923, %v3058
        %v3090 = vadd.f32 %v2924, %v3061
        %v3091 = vadd.f32 %v2925, %v3064
        %v3092 = vadd.f32 %v2926, %v3067
        %v3093 = vadd.f32 %v2927, %v3070
        %v3094 = vadd.f32 %v2928, %v3073
        %v3095 = vadd.f32 %v2929, %v3076
        %v3096 = vld [vmem:[#allocation2 + $0x1a] sm:$0xff]
        %v3097 = vld [vmem:[#allocation2 + $0x22] sm:$0xff]
        %v3098 = vld [vmem:[#allocation2 + $0x2a] sm:$0xff]
        %v3099 = vld [vmem:[#allocation2 + $0x32] sm:$0xff]
        %v3100 = vld [vmem:[#allocation2 + $0x3a] sm:$0xff]
        %v3101 = vld [vmem:[#allocation2 + $0x42] sm:$0xff]
        %v3102 = vld [vmem:[#allocation2 + $0x4a] sm:$0xff]
        %v3103 = vld [vmem:[#allocation2 + $0x52] sm:$0xff]
        %v3104 = vld [vmem:[#allocation2 + $0x5a] sm:$0xff]
        %v3105 = vld [vmem:[#allocation2 + $0x62] sm:$0xff]
        %v3106 = vld [vmem:[#allocation2 + $0x6a] sm:$0xff]
        %v3107 = vld [vmem:[#allocation2 + $0x72] sm:$0xff]
        %v3108 = vld [vmem:[#allocation2 + $0x7a] sm:$0xff]
        %v3109 = vld [vmem:[#allocation2 + $0x82] sm:$0xff]
        %v3110 = vld [vmem:[#allocation2 + $0x8a] sm:$0xff]
        %v3111 = vld [vmem:[#allocation2 + $0x92] sm:$0xff]
        %v3112 = vld [vmem:[#allocation2 + $0x9a] sm:$0xff]
        %v3113 = vld [vmem:[#allocation2 + $0xa2] sm:$0xff]
        %s3114 = scalar_lea.vmem %s5, 384
        %v3115 = vld [vmem:[%s3114] sm:$0xff]
        %v3116 = vld [vmem:[%s3114 + $0x8] sm:$0xff]
        %v3117 = vld [vmem:[%s3114 + $0x10] sm:$0xff]
        %v3118 = vld [vmem:[%s3114 + $0x18] sm:$0xff]
        %v3120 = vsel %vm1115, %v3096, 0
        %v3123 = vsel %vm1115, %v3097, 0
        %v3126 = vsel %vm1115, %v3098, 0
        %v3129 = vsel %vm1115, %v3099, 0
        %v3132 = vsel %vm1115, %v3100, 0
        %v3135 = vsel %vm1115, %v3101, 0
        %v3138 = vsel %vm1115, %v3102, 0
        %v3141 = vsel %vm1115, %v3103, 0
        %v3144 = vsel %vm1115, %v3104, 0
        %v3147 = vsel %vm1115, %v3105, 0
        %v3150 = vsel %vm1115, %v3106, 0
        %v3153 = vsel %vm1115, %v3107, 0
        %v3156 = vsel %vm1115, %v3108, 0
        %v3159 = vsel %vm1115, %v3109, 0
        %v3162 = vsel %vm1115, %v3110, 0
        %v3165 = vsel %vm1115, %v3111, 0
        %v3168 = vsel %vm1115, %v3112, 0
        %v3171 = vsel %vm1115, %v3113, 0
        %3173 = vmatpush.msra.mxu0 0.0
        %3174 = vmatpush.msra.mxu0 0.0
        %3175 = vmatpush.msra.mxu0 0.0
        %3176 = vmatpush.msra.mxu0 0.0
        %3177 = vmatpush.msra.mxu0 0.0
        %3178 = vmatpush.msra.mxu0 0.0
        %3179 = vmatpush.msra.mxu0 0.0
        %3180 = vmatpush.msra.mxu0 0.0
        %3181 = vmatpush.msra.mxu0 0.0
        %3182 = vmatpush.msra.mxu0 0.0
        %3183 = vmatpush.msra.mxu0 0.0
        %3184 = vmatpush.msra.mxu0 0.0
        %3185 = vmatpush.msra.mxu0 %v3118
        %3186 = vmatpush.msra.mxu0 %v3117
        %3187 = vmatpush.msra.mxu0 %v3116
        %3188 = vmatpush.msra.mxu0 %v3115
        %3189 = vmatmul.f32.gmra.mxu0 %v3120
        %v3190 = vpop.f32.mrf.mxu0
        %v3191 = vadd.f32 0.0, %v3190
        %3192 = vmatmul.f32.gmra.mxu0 %v3123
        %v3193 = vpop.f32.mrf.mxu0
        %v3194 = vadd.f32 0.0, %v3193
        %3195 = vmatmul.f32.gmra.mxu0 %v3126
        %v3196 = vpop.f32.mrf.mxu0
        %v3197 = vadd.f32 0.0, %v3196
        %3198 = vmatmul.f32.gmra.mxu0 %v3129
        %v3199 = vpop.f32.mrf.mxu0
        %v3200 = vadd.f32 0.0, %v3199
        %3201 = vmatmul.f32.gmra.mxu0 %v3132
        %v3202 = vpop.f32.mrf.mxu0
        %v3203 = vadd.f32 0.0, %v3202
        %3204 = vmatmul.f32.gmra.mxu0 %v3135
        %v3205 = vpop.f32.mrf.mxu0
        %v3206 = vadd.f32 0.0, %v3205
        %3207 = vmatmul.f32.gmra.mxu0 %v3138
        %v3208 = vpop.f32.mrf.mxu0
        %v3209 = vadd.f32 0.0, %v3208
        %3210 = vmatmul.f32.gmra.mxu0 %v3141
        %v3211 = vpop.f32.mrf.mxu0
        %v3212 = vadd.f32 0.0, %v3211
        %3213 = vmatmul.f32.gmra.mxu0 %v3144
        %v3214 = vpop.f32.mrf.mxu0
        %v3215 = vadd.f32 0.0, %v3214
        %3216 = vmatmul.f32.gmra.mxu0 %v3147
        %v3217 = vpop.f32.mrf.mxu0
        %v3218 = vadd.f32 0.0, %v3217
        %3219 = vmatmul.f32.gmra.mxu0 %v3150
        %v3220 = vpop.f32.mrf.mxu0
        %v3221 = vadd.f32 0.0, %v3220
        %3222 = vmatmul.f32.gmra.mxu0 %v3153
        %v3223 = vpop.f32.mrf.mxu0
        %v3224 = vadd.f32 0.0, %v3223
        %3225 = vmatmul.f32.gmra.mxu0 %v3156
        %v3226 = vpop.f32.mrf.mxu0
        %v3227 = vadd.f32 0.0, %v3226
        %3228 = vmatmul.f32.gmra.mxu0 %v3159
        %v3229 = vpop.f32.mrf.mxu0
        %v3230 = vadd.f32 0.0, %v3229
        %3231 = vmatmul.f32.gmra.mxu0 %v3162
        %v3232 = vpop.f32.mrf.mxu0
        %v3233 = vadd.f32 0.0, %v3232
        %3234 = vmatmul.f32.gmra.mxu0 %v3165
        %v3235 = vpop.f32.mrf.mxu0
        %v3236 = vadd.f32 0.0, %v3235
        %3237 = vmatmul.f32.gmra.mxu0 %v3168
        %v3238 = vpop.f32.mrf.mxu0
        %v3239 = vadd.f32 0.0, %v3238
        %3240 = vmatmul.f32.gmra.mxu0 %v3171
        %v3241 = vpop.f32.mrf.mxu0
        %v3242 = vadd.f32 0.0, %v3241
        %3243 = vdwg.mxu0
        %v3244 = vadd.f32 %v3078, %v3191
        %v3245 = vadd.f32 %v3079, %v3194
        %v3246 = vadd.f32 %v3080, %v3197
        %v3247 = vadd.f32 %v3081, %v3200
        %v3248 = vadd.f32 %v3082, %v3203
        %v3249 = vadd.f32 %v3083, %v3206
        %v3250 = vadd.f32 %v3084, %v3209
        %v3251 = vadd.f32 %v3085, %v3212
        %v3252 = vadd.f32 %v3086, %v3215
        %v3253 = vadd.f32 %v3087, %v3218
        %v3254 = vadd.f32 %v3088, %v3221
        %v3255 = vadd.f32 %v3089, %v3224
        %v3256 = vadd.f32 %v3090, %v3227
        %v3257 = vadd.f32 %v3091, %v3230
        %v3258 = vadd.f32 %v3092, %v3233
        %v3259 = vadd.f32 %v3093, %v3236
        %v3260 = vadd.f32 %v3094, %v3239
        %v3261 = vadd.f32 %v3095, %v3242
        %v3262 = vld [vmem:[#allocation2 + $0x1b] sm:$0xff]
        %v3263 = vld [vmem:[#allocation2 + $0x23] sm:$0xff]
        %v3264 = vld [vmem:[#allocation2 + $0x2b] sm:$0xff]
        %v3265 = vld [vmem:[#allocation2 + $0x33] sm:$0xff]
        %v3266 = vld [vmem:[#allocation2 + $0x3b] sm:$0xff]
        %v3267 = vld [vmem:[#allocation2 + $0x43] sm:$0xff]
        %v3268 = vld [vmem:[#allocation2 + $0x4b] sm:$0xff]
        %v3269 = vld [vmem:[#allocation2 + $0x53] sm:$0xff]
        %v3270 = vld [vmem:[#allocation2 + $0x5b] sm:$0xff]
        %v3271 = vld [vmem:[#allocation2 + $0x63] sm:$0xff]
        %v3272 = vld [vmem:[#allocation2 + $0x6b] sm:$0xff]
        %v3273 = vld [vmem:[#allocation2 + $0x73] sm:$0xff]
        %v3274 = vld [vmem:[#allocation2 + $0x7b] sm:$0xff]
        %v3275 = vld [vmem:[#allocation2 + $0x83] sm:$0xff]
        %v3276 = vld [vmem:[#allocation2 + $0x8b] sm:$0xff]
        %v3277 = vld [vmem:[#allocation2 + $0x93] sm:$0xff]
        %v3278 = vld [vmem:[#allocation2 + $0x9b] sm:$0xff]
        %v3279 = vld [vmem:[#allocation2 + $0xa3] sm:$0xff]
        %s3280 = scalar_lea.vmem %s5, 416
        %v3281 = vld [vmem:[%s3280] sm:$0xff]
        %v3282 = vld [vmem:[%s3280 + $0x8] sm:$0xff]
        %v3283 = vld [vmem:[%s3280 + $0x10] sm:$0xff]
        %v3284 = vld [vmem:[%s3280 + $0x18] sm:$0xff]
        %v3286 = vsel %vm1115, %v3262, 0
        %v3289 = vsel %vm1115, %v3263, 0
        %v3292 = vsel %vm1115, %v3264, 0
        %v3295 = vsel %vm1115, %v3265, 0
        %v3298 = vsel %vm1115, %v3266, 0
        %v3301 = vsel %vm1115, %v3267, 0
        %v3304 = vsel %vm1115, %v3268, 0
        %v3307 = vsel %vm1115, %v3269, 0
        %v3310 = vsel %vm1115, %v3270, 0
        %v3313 = vsel %vm1115, %v3271, 0
        %v3316 = vsel %vm1115, %v3272, 0
        %v3319 = vsel %vm1115, %v3273, 0
        %v3322 = vsel %vm1115, %v3274, 0
        %v3325 = vsel %vm1115, %v3275, 0
        %v3328 = vsel %vm1115, %v3276, 0
        %v3331 = vsel %vm1115, %v3277, 0
        %v3334 = vsel %vm1115, %v3278, 0
        %v3337 = vsel %vm1115, %v3279, 0
        %3339 = vmatpush.msra.mxu0 0.0
        %3340 = vmatpush.msra.mxu0 0.0
        %3341 = vmatpush.msra.mxu0 0.0
        %3342 = vmatpush.msra.mxu0 0.0
        %3343 = vmatpush.msra.mxu0 0.0
        %3344 = vmatpush.msra.mxu0 0.0
        %3345 = vmatpush.msra.mxu0 0.0
        %3346 = vmatpush.msra.mxu0 0.0
        %3347 = vmatpush.msra.mxu0 0.0
        %3348 = vmatpush.msra.mxu0 0.0
        %3349 = vmatpush.msra.mxu0 0.0
        %3350 = vmatpush.msra.mxu0 0.0
        %3351 = vmatpush.msra.mxu0 %v3284
        %3352 = vmatpush.msra.mxu0 %v3283
        %3353 = vmatpush.msra.mxu0 %v3282
        %3354 = vmatpush.msra.mxu0 %v3281
        %3355 = vmatmul.f32.gmra.mxu0 %v3286
        %v3356 = vpop.f32.mrf.mxu0
        %v3357 = vadd.f32 0.0, %v3356
        %3358 = vmatmul.f32.gmra.mxu0 %v3289
        %v3359 = vpop.f32.mrf.mxu0
        %v3360 = vadd.f32 0.0, %v3359
        %3361 = vmatmul.f32.gmra.mxu0 %v3292
        %v3362 = vpop.f32.mrf.mxu0
        %v3363 = vadd.f32 0.0, %v3362
        %3364 = vmatmul.f32.gmra.mxu0 %v3295
        %v3365 = vpop.f32.mrf.mxu0
        %v3366 = vadd.f32 0.0, %v3365
        %3367 = vmatmul.f32.gmra.mxu0 %v3298
        %v3368 = vpop.f32.mrf.mxu0
        %v3369 = vadd.f32 0.0, %v3368
        %3370 = vmatmul.f32.gmra.mxu0 %v3301
        %v3371 = vpop.f32.mrf.mxu0
        %v3372 = vadd.f32 0.0, %v3371
        %3373 = vmatmul.f32.gmra.mxu0 %v3304
        %v3374 = vpop.f32.mrf.mxu0
        %v3375 = vadd.f32 0.0, %v3374
        %3376 = vmatmul.f32.gmra.mxu0 %v3307
        %v3377 = vpop.f32.mrf.mxu0
        %v3378 = vadd.f32 0.0, %v3377
        %3379 = vmatmul.f32.gmra.mxu0 %v3310
        %v3380 = vpop.f32.mrf.mxu0
        %v3381 = vadd.f32 0.0, %v3380
        %3382 = vmatmul.f32.gmra.mxu0 %v3313
        %v3383 = vpop.f32.mrf.mxu0
        %v3384 = vadd.f32 0.0, %v3383
        %3385 = vmatmul.f32.gmra.mxu0 %v3316
        %v3386 = vpop.f32.mrf.mxu0
        %v3387 = vadd.f32 0.0, %v3386
        %3388 = vmatmul.f32.gmra.mxu0 %v3319
        %v3389 = vpop.f32.mrf.mxu0
        %v3390 = vadd.f32 0.0, %v3389
        %3391 = vmatmul.f32.gmra.mxu0 %v3322
        %v3392 = vpop.f32.mrf.mxu0
        %v3393 = vadd.f32 0.0, %v3392
        %3394 = vmatmul.f32.gmra.mxu0 %v3325
        %v3395 = vpop.f32.mrf.mxu0
        %v3396 = vadd.f32 0.0, %v3395
        %3397 = vmatmul.f32.gmra.mxu0 %v3328
        %v3398 = vpop.f32.mrf.mxu0
        %v3399 = vadd.f32 0.0, %v3398
        %3400 = vmatmul.f32.gmra.mxu0 %v3331
        %v3401 = vpop.f32.mrf.mxu0
        %v3402 = vadd.f32 0.0, %v3401
        %3403 = vmatmul.f32.gmra.mxu0 %v3334
        %v3404 = vpop.f32.mrf.mxu0
        %v3405 = vadd.f32 0.0, %v3404
        %3406 = vmatmul.f32.gmra.mxu0 %v3337
        %v3407 = vpop.f32.mrf.mxu0
        %v3408 = vadd.f32 0.0, %v3407
        %3409 = vdwg.mxu0
        %v3410 = vadd.f32 %v3244, %v3357
        %v3411 = vadd.f32 %v3245, %v3360
        %v3412 = vadd.f32 %v3246, %v3363
        %v3413 = vadd.f32 %v3247, %v3366
        %v3414 = vadd.f32 %v3248, %v3369
        %v3415 = vadd.f32 %v3249, %v3372
        %v3416 = vadd.f32 %v3250, %v3375
        %v3417 = vadd.f32 %v3251, %v3378
        %v3418 = vadd.f32 %v3252, %v3381
        %v3419 = vadd.f32 %v3253, %v3384
        %v3420 = vadd.f32 %v3254, %v3387
        %v3421 = vadd.f32 %v3255, %v3390
        %v3422 = vadd.f32 %v3256, %v3393
        %v3423 = vadd.f32 %v3257, %v3396
        %v3424 = vadd.f32 %v3258, %v3399
        %v3425 = vadd.f32 %v3259, %v3402
        %v3426 = vadd.f32 %v3260, %v3405
        %v3427 = vadd.f32 %v3261, %v3408
        %v3428 = vld [vmem:[#allocation2 + $0x1c] sm:$0xff]
        %v3429 = vld [vmem:[#allocation2 + $0x24] sm:$0xff]
        %v3430 = vld [vmem:[#allocation2 + $0x2c] sm:$0xff]
        %v3431 = vld [vmem:[#allocation2 + $0x34] sm:$0xff]
        %v3432 = vld [vmem:[#allocation2 + $0x3c] sm:$0xff]
        %v3433 = vld [vmem:[#allocation2 + $0x44] sm:$0xff]
        %v3434 = vld [vmem:[#allocation2 + $0x4c] sm:$0xff]
        %v3435 = vld [vmem:[#allocation2 + $0x54] sm:$0xff]
        %v3436 = vld [vmem:[#allocation2 + $0x5c] sm:$0xff]
        %v3437 = vld [vmem:[#allocation2 + $0x64] sm:$0xff]
        %v3438 = vld [vmem:[#allocation2 + $0x6c] sm:$0xff]
        %v3439 = vld [vmem:[#allocation2 + $0x74] sm:$0xff]
        %v3440 = vld [vmem:[#allocation2 + $0x7c] sm:$0xff]
        %v3441 = vld [vmem:[#allocation2 + $0x84] sm:$0xff]
        %v3442 = vld [vmem:[#allocation2 + $0x8c] sm:$0xff]
        %v3443 = vld [vmem:[#allocation2 + $0x94] sm:$0xff]
        %v3444 = vld [vmem:[#allocation2 + $0x9c] sm:$0xff]
        %v3445 = vld [vmem:[#allocation2 + $0xa4] sm:$0xff]
        %s3446 = scalar_lea.vmem %s5, 448
        %v3447 = vld [vmem:[%s3446] sm:$0xff]
        %v3448 = vld [vmem:[%s3446 + $0x8] sm:$0xff]
        %v3449 = vld [vmem:[%s3446 + $0x10] sm:$0xff]
        %v3450 = vld [vmem:[%s3446 + $0x18] sm:$0xff]
        %v3452 = vsel %vm1115, %v3428, 0
        %v3455 = vsel %vm1115, %v3429, 0
        %v3458 = vsel %vm1115, %v3430, 0
        %v3461 = vsel %vm1115, %v3431, 0
        %v3464 = vsel %vm1115, %v3432, 0
        %v3467 = vsel %vm1115, %v3433, 0
        %v3470 = vsel %vm1115, %v3434, 0
        %v3473 = vsel %vm1115, %v3435, 0
        %v3476 = vsel %vm1115, %v3436, 0
        %v3479 = vsel %vm1115, %v3437, 0
        %v3482 = vsel %vm1115, %v3438, 0
        %v3485 = vsel %vm1115, %v3439, 0
        %v3488 = vsel %vm1115, %v3440, 0
        %v3491 = vsel %vm1115, %v3441, 0
        %v3494 = vsel %vm1115, %v3442, 0
        %v3497 = vsel %vm1115, %v3443, 0
        %v3500 = vsel %vm1115, %v3444, 0
        %v3503 = vsel %vm1115, %v3445, 0
        %3505 = vmatpush.msra.mxu0 0.0
        %3506 = vmatpush.msra.mxu0 0.0
        %3507 = vmatpush.msra.mxu0 0.0
        %3508 = vmatpush.msra.mxu0 0.0
        %3509 = vmatpush.msra.mxu0 0.0
        %3510 = vmatpush.msra.mxu0 0.0
        %3511 = vmatpush.msra.mxu0 0.0
        %3512 = vmatpush.msra.mxu0 0.0
        %3513 = vmatpush.msra.mxu0 0.0
        %3514 = vmatpush.msra.mxu0 0.0
        %3515 = vmatpush.msra.mxu0 0.0
        %3516 = vmatpush.msra.mxu0 0.0
        %3517 = vmatpush.msra.mxu0 %v3450
        %3518 = vmatpush.msra.mxu0 %v3449
        %3519 = vmatpush.msra.mxu0 %v3448
        %3520 = vmatpush.msra.mxu0 %v3447
        %3521 = vmatmul.f32.gmra.mxu0 %v3452
        %v3522 = vpop.f32.mrf.mxu0
        %v3523 = vadd.f32 0.0, %v3522
        %3524 = vmatmul.f32.gmra.mxu0 %v3455
        %v3525 = vpop.f32.mrf.mxu0
        %v3526 = vadd.f32 0.0, %v3525
        %3527 = vmatmul.f32.gmra.mxu0 %v3458
        %v3528 = vpop.f32.mrf.mxu0
        %v3529 = vadd.f32 0.0, %v3528
        %3530 = vmatmul.f32.gmra.mxu0 %v3461
        %v3531 = vpop.f32.mrf.mxu0
        %v3532 = vadd.f32 0.0, %v3531
        %3533 = vmatmul.f32.gmra.mxu0 %v3464
        %v3534 = vpop.f32.mrf.mxu0
        %v3535 = vadd.f32 0.0, %v3534
        %3536 = vmatmul.f32.gmra.mxu0 %v3467
        %v3537 = vpop.f32.mrf.mxu0
        %v3538 = vadd.f32 0.0, %v3537
        %3539 = vmatmul.f32.gmra.mxu0 %v3470
        %v3540 = vpop.f32.mrf.mxu0
        %v3541 = vadd.f32 0.0, %v3540
        %3542 = vmatmul.f32.gmra.mxu0 %v3473
        %v3543 = vpop.f32.mrf.mxu0
        %v3544 = vadd.f32 0.0, %v3543
        %3545 = vmatmul.f32.gmra.mxu0 %v3476
        %v3546 = vpop.f32.mrf.mxu0
        %v3547 = vadd.f32 0.0, %v3546
        %3548 = vmatmul.f32.gmra.mxu0 %v3479
        %v3549 = vpop.f32.mrf.mxu0
        %v3550 = vadd.f32 0.0, %v3549
        %3551 = vmatmul.f32.gmra.mxu0 %v3482
        %v3552 = vpop.f32.mrf.mxu0
        %v3553 = vadd.f32 0.0, %v3552
        %3554 = vmatmul.f32.gmra.mxu0 %v3485
        %v3555 = vpop.f32.mrf.mxu0
        %v3556 = vadd.f32 0.0, %v3555
        %3557 = vmatmul.f32.gmra.mxu0 %v3488
        %v3558 = vpop.f32.mrf.mxu0
        %v3559 = vadd.f32 0.0, %v3558
        %3560 = vmatmul.f32.gmra.mxu0 %v3491
        %v3561 = vpop.f32.mrf.mxu0
        %v3562 = vadd.f32 0.0, %v3561
        %3563 = vmatmul.f32.gmra.mxu0 %v3494
        %v3564 = vpop.f32.mrf.mxu0
        %v3565 = vadd.f32 0.0, %v3564
        %3566 = vmatmul.f32.gmra.mxu0 %v3497
        %v3567 = vpop.f32.mrf.mxu0
        %v3568 = vadd.f32 0.0, %v3567
        %3569 = vmatmul.f32.gmra.mxu0 %v3500
        %v3570 = vpop.f32.mrf.mxu0
        %v3571 = vadd.f32 0.0, %v3570
        %3572 = vmatmul.f32.gmra.mxu0 %v3503
        %v3573 = vpop.f32.mrf.mxu0
        %v3574 = vadd.f32 0.0, %v3573
        %3575 = vdwg.mxu0
        %v3576 = vadd.f32 %v3410, %v3523
        %v3577 = vadd.f32 %v3411, %v3526
        %v3578 = vadd.f32 %v3412, %v3529
        %v3579 = vadd.f32 %v3413, %v3532
        %v3580 = vadd.f32 %v3414, %v3535
        %v3581 = vadd.f32 %v3415, %v3538
        %v3582 = vadd.f32 %v3416, %v3541
        %v3583 = vadd.f32 %v3417, %v3544
        %v3584 = vadd.f32 %v3418, %v3547
        %v3585 = vadd.f32 %v3419, %v3550
        %v3586 = vadd.f32 %v3420, %v3553
        %v3587 = vadd.f32 %v3421, %v3556
        %v3588 = vadd.f32 %v3422, %v3559
        %v3589 = vadd.f32 %v3423, %v3562
        %v3590 = vadd.f32 %v3424, %v3565
        %v3591 = vadd.f32 %v3425, %v3568
        %v3592 = vadd.f32 %v3426, %v3571
        %v3593 = vadd.f32 %v3427, %v3574
        %v3594 = vld [vmem:[#allocation2 + $0x24] sm:$0xff]
        %v3595 = vld [vmem:[#allocation2 + $0x2c] sm:$0xff]
        %v3596 = vld [vmem:[#allocation2 + $0x34] sm:$0xff]
        %v3597 = vld [vmem:[#allocation2 + $0x3c] sm:$0xff]
        %v3598 = vld [vmem:[#allocation2 + $0x44] sm:$0xff]
        %v3599 = vld [vmem:[#allocation2 + $0x4c] sm:$0xff]
        %v3600 = vld [vmem:[#allocation2 + $0x54] sm:$0xff]
        %v3601 = vld [vmem:[#allocation2 + $0x5c] sm:$0xff]
        %v3602 = vld [vmem:[#allocation2 + $0x64] sm:$0xff]
        %v3603 = vld [vmem:[#allocation2 + $0x6c] sm:$0xff]
        %v3604 = vld [vmem:[#allocation2 + $0x74] sm:$0xff]
        %v3605 = vld [vmem:[#allocation2 + $0x7c] sm:$0xff]
        %v3606 = vld [vmem:[#allocation2 + $0x84] sm:$0xff]
        %v3607 = vld [vmem:[#allocation2 + $0x8c] sm:$0xff]
        %v3608 = vld [vmem:[#allocation2 + $0x94] sm:$0xff]
        %v3609 = vld [vmem:[#allocation2 + $0x9c] sm:$0xff]
        %v3610 = vld [vmem:[#allocation2 + $0xa4] sm:$0xff]
        %v3611 = vld [vmem:[#allocation2 + $0xac] sm:$0xff]
        %s3612 = scalar_lea.vmem %s5, 480
        %v3613 = vld [vmem:[%s3612] sm:$0xff]
        %v3614 = vld [vmem:[%s3612 + $0x8] sm:$0xff]
        %v3615 = vld [vmem:[%s3612 + $0x10] sm:$0xff]
        %v3616 = vld [vmem:[%s3612 + $0x18] sm:$0xff]
        %v3618 = vsel %vm1115, %v3594, 0
        %v3621 = vsel %vm1115, %v3595, 0
        %v3624 = vsel %vm1115, %v3596, 0
        %v3627 = vsel %vm1115, %v3597, 0
        %v3630 = vsel %vm1115, %v3598, 0
        %v3633 = vsel %vm1115, %v3599, 0
        %v3636 = vsel %vm1115, %v3600, 0
        %v3639 = vsel %vm1115, %v3601, 0
        %v3642 = vsel %vm1115, %v3602, 0
        %v3645 = vsel %vm1115, %v3603, 0
        %v3648 = vsel %vm1115, %v3604, 0
        %v3651 = vsel %vm1115, %v3605, 0
        %v3654 = vsel %vm1115, %v3606, 0
        %v3657 = vsel %vm1115, %v3607, 0
        %v3660 = vsel %vm1115, %v3608, 0
        %v3663 = vsel %vm1115, %v3609, 0
        %v3666 = vsel %vm1115, %v3610, 0
        %v3669 = vsel %vm1115, %v3611, 0
        %3671 = vmatpush.msra.mxu0 0.0
        %3672 = vmatpush.msra.mxu0 0.0
        %3673 = vmatpush.msra.mxu0 0.0
        %3674 = vmatpush.msra.mxu0 0.0
        %3675 = vmatpush.msra.mxu0 0.0
        %3676 = vmatpush.msra.mxu0 0.0
        %3677 = vmatpush.msra.mxu0 0.0
        %3678 = vmatpush.msra.mxu0 0.0
        %3679 = vmatpush.msra.mxu0 0.0
        %3680 = vmatpush.msra.mxu0 0.0
        %3681 = vmatpush.msra.mxu0 0.0
        %3682 = vmatpush.msra.mxu0 0.0
        %3683 = vmatpush.msra.mxu0 %v3616
        %3684 = vmatpush.msra.mxu0 %v3615
        %3685 = vmatpush.msra.mxu0 %v3614
        %3686 = vmatpush.msra.mxu0 %v3613
        %3687 = vmatmul.f32.gmra.mxu0 %v3618
        %v3688 = vpop.f32.mrf.mxu0
        %v3689 = vadd.f32 0.0, %v3688
        %3690 = vmatmul.f32.gmra.mxu0 %v3621
        %v3691 = vpop.f32.mrf.mxu0
        %v3692 = vadd.f32 0.0, %v3691
        %3693 = vmatmul.f32.gmra.mxu0 %v3624
        %v3694 = vpop.f32.mrf.mxu0
        %v3695 = vadd.f32 0.0, %v3694
        %3696 = vmatmul.f32.gmra.mxu0 %v3627
        %v3697 = vpop.f32.mrf.mxu0
        %v3698 = vadd.f32 0.0, %v3697
        %3699 = vmatmul.f32.gmra.mxu0 %v3630
        %v3700 = vpop.f32.mrf.mxu0
        %v3701 = vadd.f32 0.0, %v3700
        %3702 = vmatmul.f32.gmra.mxu0 %v3633
        %v3703 = vpop.f32.mrf.mxu0
        %v3704 = vadd.f32 0.0, %v3703
        %3705 = vmatmul.f32.gmra.mxu0 %v3636
        %v3706 = vpop.f32.mrf.mxu0
        %v3707 = vadd.f32 0.0, %v3706
        %3708 = vmatmul.f32.gmra.mxu0 %v3639
        %v3709 = vpop.f32.mrf.mxu0
        %v3710 = vadd.f32 0.0, %v3709
        %3711 = vmatmul.f32.gmra.mxu0 %v3642
        %v3712 = vpop.f32.mrf.mxu0
        %v3713 = vadd.f32 0.0, %v3712
        %3714 = vmatmul.f32.gmra.mxu0 %v3645
        %v3715 = vpop.f32.mrf.mxu0
        %v3716 = vadd.f32 0.0, %v3715
        %3717 = vmatmul.f32.gmra.mxu0 %v3648
        %v3718 = vpop.f32.mrf.mxu0
        %v3719 = vadd.f32 0.0, %v3718
        %3720 = vmatmul.f32.gmra.mxu0 %v3651
        %v3721 = vpop.f32.mrf.mxu0
        %v3722 = vadd.f32 0.0, %v3721
        %3723 = vmatmul.f32.gmra.mxu0 %v3654
        %v3724 = vpop.f32.mrf.mxu0
        %v3725 = vadd.f32 0.0, %v3724
        %3726 = vmatmul.f32.gmra.mxu0 %v3657
        %v3727 = vpop.f32.mrf.mxu0
        %v3728 = vadd.f32 0.0, %v3727
        %3729 = vmatmul.f32.gmra.mxu0 %v3660
        %v3730 = vpop.f32.mrf.mxu0
        %v3731 = vadd.f32 0.0, %v3730
        %3732 = vmatmul.f32.gmra.mxu0 %v3663
        %v3733 = vpop.f32.mrf.mxu0
        %v3734 = vadd.f32 0.0, %v3733
        %3735 = vmatmul.f32.gmra.mxu0 %v3666
        %v3736 = vpop.f32.mrf.mxu0
        %v3737 = vadd.f32 0.0, %v3736
        %3738 = vmatmul.f32.gmra.mxu0 %v3669
        %v3739 = vpop.f32.mrf.mxu0
        %v3740 = vadd.f32 0.0, %v3739
        %3741 = vdwg.mxu0
        %v3742 = vadd.f32 %v3576, %v3689
        %v3743 = vadd.f32 %v3577, %v3692
        %v3744 = vadd.f32 %v3578, %v3695
        %v3745 = vadd.f32 %v3579, %v3698
        %v3746 = vadd.f32 %v3580, %v3701
        %v3747 = vadd.f32 %v3581, %v3704
        %v3748 = vadd.f32 %v3582, %v3707
        %v3749 = vadd.f32 %v3583, %v3710
        %v3750 = vadd.f32 %v3584, %v3713
        %v3751 = vadd.f32 %v3585, %v3716
        %v3752 = vadd.f32 %v3586, %v3719
        %v3753 = vadd.f32 %v3587, %v3722
        %v3754 = vadd.f32 %v3588, %v3725
        %v3755 = vadd.f32 %v3589, %v3728
        %v3756 = vadd.f32 %v3590, %v3731
        %v3757 = vadd.f32 %v3591, %v3734
        %v3758 = vadd.f32 %v3592, %v3737
        %v3759 = vadd.f32 %v3593, %v3740
        %v3760 = vld [vmem:[#allocation2 + $0x25] sm:$0xff]
        %v3761 = vld [vmem:[#allocation2 + $0x2d] sm:$0xff]
        %v3762 = vld [vmem:[#allocation2 + $0x35] sm:$0xff]
        %v3763 = vld [vmem:[#allocation2 + $0x3d] sm:$0xff]
        %v3764 = vld [vmem:[#allocation2 + $0x45] sm:$0xff]
        %v3765 = vld [vmem:[#allocation2 + $0x4d] sm:$0xff]
        %v3766 = vld [vmem:[#allocation2 + $0x55] sm:$0xff]
        %v3767 = vld [vmem:[#allocation2 + $0x5d] sm:$0xff]
        %v3768 = vld [vmem:[#allocation2 + $0x65] sm:$0xff]
        %v3769 = vld [vmem:[#allocation2 + $0x6d] sm:$0xff]
        %v3770 = vld [vmem:[#allocation2 + $0x75] sm:$0xff]
        %v3771 = vld [vmem:[#allocation2 + $0x7d] sm:$0xff]
        %v3772 = vld [vmem:[#allocation2 + $0x85] sm:$0xff]
        %v3773 = vld [vmem:[#allocation2 + $0x8d] sm:$0xff]
        %v3774 = vld [vmem:[#allocation2 + $0x95] sm:$0xff]
        %v3775 = vld [vmem:[#allocation2 + $0x9d] sm:$0xff]
        %v3776 = vld [vmem:[#allocation2 + $0xa5] sm:$0xff]
        %v3777 = vld [vmem:[#allocation2 + $0xad] sm:$0xff]
        %s3778 = scalar_lea.vmem %s5, 512
        %v3779 = vld [vmem:[%s3778] sm:$0xff]
        %v3780 = vld [vmem:[%s3778 + $0x8] sm:$0xff]
        %v3781 = vld [vmem:[%s3778 + $0x10] sm:$0xff]
        %v3782 = vld [vmem:[%s3778 + $0x18] sm:$0xff]
        %v3784 = vsel %vm1115, %v3760, 0
        %v3787 = vsel %vm1115, %v3761, 0
        %v3790 = vsel %vm1115, %v3762, 0
        %v3793 = vsel %vm1115, %v3763, 0
        %v3796 = vsel %vm1115, %v3764, 0
        %v3799 = vsel %vm1115, %v3765, 0
        %v3802 = vsel %vm1115, %v3766, 0
        %v3805 = vsel %vm1115, %v3767, 0
        %v3808 = vsel %vm1115, %v3768, 0
        %v3811 = vsel %vm1115, %v3769, 0
        %v3814 = vsel %vm1115, %v3770, 0
        %v3817 = vsel %vm1115, %v3771, 0
        %v3820 = vsel %vm1115, %v3772, 0
        %v3823 = vsel %vm1115, %v3773, 0
        %v3826 = vsel %vm1115, %v3774, 0
        %v3829 = vsel %vm1115, %v3775, 0
        %v3832 = vsel %vm1115, %v3776, 0
        %v3835 = vsel %vm1115, %v3777, 0
        %3837 = vmatpush.msra.mxu0 0.0
        %3838 = vmatpush.msra.mxu0 0.0
        %3839 = vmatpush.msra.mxu0 0.0
        %3840 = vmatpush.msra.mxu0 0.0
        %3841 = vmatpush.msra.mxu0 0.0
        %3842 = vmatpush.msra.mxu0 0.0
        %3843 = vmatpush.msra.mxu0 0.0
        %3844 = vmatpush.msra.mxu0 0.0
        %3845 = vmatpush.msra.mxu0 0.0
        %3846 = vmatpush.msra.mxu0 0.0
        %3847 = vmatpush.msra.mxu0 0.0
        %3848 = vmatpush.msra.mxu0 0.0
        %3849 = vmatpush.msra.mxu0 %v3782
        %3850 = vmatpush.msra.mxu0 %v3781
        %3851 = vmatpush.msra.mxu0 %v3780
        %3852 = vmatpush.msra.mxu0 %v3779
        %3853 = vmatmul.f32.gmra.mxu0 %v3784
        %v3854 = vpop.f32.mrf.mxu0
        %v3855 = vadd.f32 0.0, %v3854
        %3856 = vmatmul.f32.gmra.mxu0 %v3787
        %v3857 = vpop.f32.mrf.mxu0
        %v3858 = vadd.f32 0.0, %v3857
        %3859 = vmatmul.f32.gmra.mxu0 %v3790
        %v3860 = vpop.f32.mrf.mxu0
        %v3861 = vadd.f32 0.0, %v3860
        %3862 = vmatmul.f32.gmra.mxu0 %v3793
        %v3863 = vpop.f32.mrf.mxu0
        %v3864 = vadd.f32 0.0, %v3863
        %3865 = vmatmul.f32.gmra.mxu0 %v3796
        %v3866 = vpop.f32.mrf.mxu0
        %v3867 = vadd.f32 0.0, %v3866
        %3868 = vmatmul.f32.gmra.mxu0 %v3799
        %v3869 = vpop.f32.mrf.mxu0
        %v3870 = vadd.f32 0.0, %v3869
        %3871 = vmatmul.f32.gmra.mxu0 %v3802
        %v3872 = vpop.f32.mrf.mxu0
        %v3873 = vadd.f32 0.0, %v3872
        %3874 = vmatmul.f32.gmra.mxu0 %v3805
        %v3875 = vpop.f32.mrf.mxu0
        %v3876 = vadd.f32 0.0, %v3875
        %3877 = vmatmul.f32.gmra.mxu0 %v3808
        %v3878 = vpop.f32.mrf.mxu0
        %v3879 = vadd.f32 0.0, %v3878
        %3880 = vmatmul.f32.gmra.mxu0 %v3811
        %v3881 = vpop.f32.mrf.mxu0
        %v3882 = vadd.f32 0.0, %v3881
        %3883 = vmatmul.f32.gmra.mxu0 %v3814
        %v3884 = vpop.f32.mrf.mxu0
        %v3885 = vadd.f32 0.0, %v3884
        %3886 = vmatmul.f32.gmra.mxu0 %v3817
        %v3887 = vpop.f32.mrf.mxu0
        %v3888 = vadd.f32 0.0, %v3887
        %3889 = vmatmul.f32.gmra.mxu0 %v3820
        %v3890 = vpop.f32.mrf.mxu0
        %v3891 = vadd.f32 0.0, %v3890
        %3892 = vmatmul.f32.gmra.mxu0 %v3823
        %v3893 = vpop.f32.mrf.mxu0
        %v3894 = vadd.f32 0.0, %v3893
        %3895 = vmatmul.f32.gmra.mxu0 %v3826
        %v3896 = vpop.f32.mrf.mxu0
        %v3897 = vadd.f32 0.0, %v3896
        %3898 = vmatmul.f32.gmra.mxu0 %v3829
        %v3899 = vpop.f32.mrf.mxu0
        %v3900 = vadd.f32 0.0, %v3899
        %3901 = vmatmul.f32.gmra.mxu0 %v3832
        %v3902 = vpop.f32.mrf.mxu0
        %v3903 = vadd.f32 0.0, %v3902
        %3904 = vmatmul.f32.gmra.mxu0 %v3835
        %v3905 = vpop.f32.mrf.mxu0
        %v3906 = vadd.f32 0.0, %v3905
        %3907 = vdwg.mxu0
        %v3908 = vadd.f32 %v3742, %v3855
        %v3909 = vadd.f32 %v3743, %v3858
        %v3910 = vadd.f32 %v3744, %v3861
        %v3911 = vadd.f32 %v3745, %v3864
        %v3912 = vadd.f32 %v3746, %v3867
        %v3913 = vadd.f32 %v3747, %v3870
        %v3914 = vadd.f32 %v3748, %v3873
        %v3915 = vadd.f32 %v3749, %v3876
        %v3916 = vadd.f32 %v3750, %v3879
        %v3917 = vadd.f32 %v3751, %v3882
        %v3918 = vadd.f32 %v3752, %v3885
        %v3919 = vadd.f32 %v3753, %v3888
        %v3920 = vadd.f32 %v3754, %v3891
        %v3921 = vadd.f32 %v3755, %v3894
        %v3922 = vadd.f32 %v3756, %v3897
        %v3923 = vadd.f32 %v3757, %v3900
        %v3924 = vadd.f32 %v3758, %v3903
        %v3925 = vadd.f32 %v3759, %v3906
        %v3926 = vld [vmem:[#allocation2 + $0x26] sm:$0xff]
        %v3927 = vld [vmem:[#allocation2 + $0x2e] sm:$0xff]
        %v3928 = vld [vmem:[#allocation2 + $0x36] sm:$0xff]
        %v3929 = vld [vmem:[#allocation2 + $0x3e] sm:$0xff]
        %v3930 = vld [vmem:[#allocation2 + $0x46] sm:$0xff]
        %v3931 = vld [vmem:[#allocation2 + $0x4e] sm:$0xff]
        %v3932 = vld [vmem:[#allocation2 + $0x56] sm:$0xff]
        %v3933 = vld [vmem:[#allocation2 + $0x5e] sm:$0xff]
        %v3934 = vld [vmem:[#allocation2 + $0x66] sm:$0xff]
        %v3935 = vld [vmem:[#allocation2 + $0x6e] sm:$0xff]
        %v3936 = vld [vmem:[#allocation2 + $0x76] sm:$0xff]
        %v3937 = vld [vmem:[#allocation2 + $0x7e] sm:$0xff]
        %v3938 = vld [vmem:[#allocation2 + $0x86] sm:$0xff]
        %v3939 = vld [vmem:[#allocation2 + $0x8e] sm:$0xff]
        %v3940 = vld [vmem:[#allocation2 + $0x96] sm:$0xff]
        %v3941 = vld [vmem:[#allocation2 + $0x9e] sm:$0xff]
        %v3942 = vld [vmem:[#allocation2 + $0xa6] sm:$0xff]
        %v3943 = vld [vmem:[#allocation2 + $0xae] sm:$0xff]
        %s3944 = scalar_lea.vmem %s5, 544
        %v3945 = vld [vmem:[%s3944] sm:$0xff]
        %v3946 = vld [vmem:[%s3944 + $0x8] sm:$0xff]
        %v3947 = vld [vmem:[%s3944 + $0x10] sm:$0xff]
        %v3948 = vld [vmem:[%s3944 + $0x18] sm:$0xff]
        %v3950 = vsel %vm1115, %v3926, 0
        %v3953 = vsel %vm1115, %v3927, 0
        %v3956 = vsel %vm1115, %v3928, 0
        %v3959 = vsel %vm1115, %v3929, 0
        %v3962 = vsel %vm1115, %v3930, 0
        %v3965 = vsel %vm1115, %v3931, 0
        %v3968 = vsel %vm1115, %v3932, 0
        %v3971 = vsel %vm1115, %v3933, 0
        %v3974 = vsel %vm1115, %v3934, 0
        %v3977 = vsel %vm1115, %v3935, 0
        %v3980 = vsel %vm1115, %v3936, 0
        %v3983 = vsel %vm1115, %v3937, 0
        %v3986 = vsel %vm1115, %v3938, 0
        %v3989 = vsel %vm1115, %v3939, 0
        %v3992 = vsel %vm1115, %v3940, 0
        %v3995 = vsel %vm1115, %v3941, 0
        %v3998 = vsel %vm1115, %v3942, 0
        %v4001 = vsel %vm1115, %v3943, 0
        %4003 = vmatpush.msra.mxu0 0.0
        %4004 = vmatpush.msra.mxu0 0.0
        %4005 = vmatpush.msra.mxu0 0.0
        %4006 = vmatpush.msra.mxu0 0.0
        %4007 = vmatpush.msra.mxu0 0.0
        %4008 = vmatpush.msra.mxu0 0.0
        %4009 = vmatpush.msra.mxu0 0.0
        %4010 = vmatpush.msra.mxu0 0.0
        %4011 = vmatpush.msra.mxu0 0.0
        %4012 = vmatpush.msra.mxu0 0.0
        %4013 = vmatpush.msra.mxu0 0.0
        %4014 = vmatpush.msra.mxu0 0.0
        %4015 = vmatpush.msra.mxu0 %v3948
        %4016 = vmatpush.msra.mxu0 %v3947
        %4017 = vmatpush.msra.mxu0 %v3946
        %4018 = vmatpush.msra.mxu0 %v3945
        %4019 = vmatmul.f32.gmra.mxu0 %v3950
        %v4020 = vpop.f32.mrf.mxu0
        %v4021 = vadd.f32 0.0, %v4020
        %4022 = vmatmul.f32.gmra.mxu0 %v3953
        %v4023 = vpop.f32.mrf.mxu0
        %v4024 = vadd.f32 0.0, %v4023
        %4025 = vmatmul.f32.gmra.mxu0 %v3956
        %v4026 = vpop.f32.mrf.mxu0
        %v4027 = vadd.f32 0.0, %v4026
        %4028 = vmatmul.f32.gmra.mxu0 %v3959
        %v4029 = vpop.f32.mrf.mxu0
        %v4030 = vadd.f32 0.0, %v4029
        %4031 = vmatmul.f32.gmra.mxu0 %v3962
        %v4032 = vpop.f32.mrf.mxu0
        %v4033 = vadd.f32 0.0, %v4032
        %4034 = vmatmul.f32.gmra.mxu0 %v3965
        %v4035 = vpop.f32.mrf.mxu0
        %v4036 = vadd.f32 0.0, %v4035
        %4037 = vmatmul.f32.gmra.mxu0 %v3968
        %v4038 = vpop.f32.mrf.mxu0
        %v4039 = vadd.f32 0.0, %v4038
        %4040 = vmatmul.f32.gmra.mxu0 %v3971
        %v4041 = vpop.f32.mrf.mxu0
        %v4042 = vadd.f32 0.0, %v4041
        %4043 = vmatmul.f32.gmra.mxu0 %v3974
        %v4044 = vpop.f32.mrf.mxu0
        %v4045 = vadd.f32 0.0, %v4044
        %4046 = vmatmul.f32.gmra.mxu0 %v3977
        %v4047 = vpop.f32.mrf.mxu0
        %v4048 = vadd.f32 0.0, %v4047
        %4049 = vmatmul.f32.gmra.mxu0 %v3980
        %v4050 = vpop.f32.mrf.mxu0
        %v4051 = vadd.f32 0.0, %v4050
        %4052 = vmatmul.f32.gmra.mxu0 %v3983
        %v4053 = vpop.f32.mrf.mxu0
        %v4054 = vadd.f32 0.0, %v4053
        %4055 = vmatmul.f32.gmra.mxu0 %v3986
        %v4056 = vpop.f32.mrf.mxu0
        %v4057 = vadd.f32 0.0, %v4056
        %4058 = vmatmul.f32.gmra.mxu0 %v3989
        %v4059 = vpop.f32.mrf.mxu0
        %v4060 = vadd.f32 0.0, %v4059
        %4061 = vmatmul.f32.gmra.mxu0 %v3992
        %v4062 = vpop.f32.mrf.mxu0
        %v4063 = vadd.f32 0.0, %v4062
        %4064 = vmatmul.f32.gmra.mxu0 %v3995
        %v4065 = vpop.f32.mrf.mxu0
        %v4066 = vadd.f32 0.0, %v4065
        %4067 = vmatmul.f32.gmra.mxu0 %v3998
        %v4068 = vpop.f32.mrf.mxu0
        %v4069 = vadd.f32 0.0, %v4068
        %4070 = vmatmul.f32.gmra.mxu0 %v4001
        %v4071 = vpop.f32.mrf.mxu0
        %v4072 = vadd.f32 0.0, %v4071
        %4073 = vdwg.mxu0
        %v4074 = vadd.f32 %v3908, %v4021
        %v4075 = vadd.f32 %v3909, %v4024
        %v4076 = vadd.f32 %v3910, %v4027
        %v4077 = vadd.f32 %v3911, %v4030
        %v4078 = vadd.f32 %v3912, %v4033
        %v4079 = vadd.f32 %v3913, %v4036
        %v4080 = vadd.f32 %v3914, %v4039
        %v4081 = vadd.f32 %v3915, %v4042
        %v4082 = vadd.f32 %v3916, %v4045
        %v4083 = vadd.f32 %v3917, %v4048
        %v4084 = vadd.f32 %v3918, %v4051
        %v4085 = vadd.f32 %v3919, %v4054
        %v4086 = vadd.f32 %v3920, %v4057
        %v4087 = vadd.f32 %v3921, %v4060
        %v4088 = vadd.f32 %v3922, %v4063
        %v4089 = vadd.f32 %v3923, %v4066
        %v4090 = vadd.f32 %v3924, %v4069
        %v4091 = vadd.f32 %v3925, %v4072
        %v4092 = vld [vmem:[#allocation2 + $0x27] sm:$0xff]
        %v4093 = vld [vmem:[#allocation2 + $0x2f] sm:$0xff]
        %v4094 = vld [vmem:[#allocation2 + $0x37] sm:$0xff]
        %v4095 = vld [vmem:[#allocation2 + $0x3f] sm:$0xff]
        %v4096 = vld [vmem:[#allocation2 + $0x47] sm:$0xff]
        %v4097 = vld [vmem:[#allocation2 + $0x4f] sm:$0xff]
        %v4098 = vld [vmem:[#allocation2 + $0x57] sm:$0xff]
        %v4099 = vld [vmem:[#allocation2 + $0x5f] sm:$0xff]
        %v4100 = vld [vmem:[#allocation2 + $0x67] sm:$0xff]
        %v4101 = vld [vmem:[#allocation2 + $0x6f] sm:$0xff]
        %v4102 = vld [vmem:[#allocation2 + $0x77] sm:$0xff]
        %v4103 = vld [vmem:[#allocation2 + $0x7f] sm:$0xff]
        %v4104 = vld [vmem:[#allocation2 + $0x87] sm:$0xff]
        %v4105 = vld [vmem:[#allocation2 + $0x8f] sm:$0xff]
        %v4106 = vld [vmem:[#allocation2 + $0x97] sm:$0xff]
        %v4107 = vld [vmem:[#allocation2 + $0x9f] sm:$0xff]
        %v4108 = vld [vmem:[#allocation2 + $0xa7] sm:$0xff]
        %v4109 = vld [vmem:[#allocation2 + $0xaf] sm:$0xff]
        %s4110 = scalar_lea.vmem %s5, 576
        %v4111 = vld [vmem:[%s4110] sm:$0xff]
        %v4112 = vld [vmem:[%s4110 + $0x8] sm:$0xff]
        %v4113 = vld [vmem:[%s4110 + $0x10] sm:$0xff]
        %v4114 = vld [vmem:[%s4110 + $0x18] sm:$0xff]
        %v4116 = vsel %vm1115, %v4092, 0
        %v4119 = vsel %vm1115, %v4093, 0
        %v4122 = vsel %vm1115, %v4094, 0
        %v4125 = vsel %vm1115, %v4095, 0
        %v4128 = vsel %vm1115, %v4096, 0
        %v4131 = vsel %vm1115, %v4097, 0
        %v4134 = vsel %vm1115, %v4098, 0
        %v4137 = vsel %vm1115, %v4099, 0
        %v4140 = vsel %vm1115, %v4100, 0
        %v4143 = vsel %vm1115, %v4101, 0
        %v4146 = vsel %vm1115, %v4102, 0
        %v4149 = vsel %vm1115, %v4103, 0
        %v4152 = vsel %vm1115, %v4104, 0
        %v4155 = vsel %vm1115, %v4105, 0
        %v4158 = vsel %vm1115, %v4106, 0
        %v4161 = vsel %vm1115, %v4107, 0
        %v4164 = vsel %vm1115, %v4108, 0
        %v4167 = vsel %vm1115, %v4109, 0
        %4169 = vmatpush.msra.mxu0 0.0
        %4170 = vmatpush.msra.mxu0 0.0
        %4171 = vmatpush.msra.mxu0 0.0
        %4172 = vmatpush.msra.mxu0 0.0
        %4173 = vmatpush.msra.mxu0 0.0
        %4174 = vmatpush.msra.mxu0 0.0
        %4175 = vmatpush.msra.mxu0 0.0
        %4176 = vmatpush.msra.mxu0 0.0
        %4177 = vmatpush.msra.mxu0 0.0
        %4178 = vmatpush.msra.mxu0 0.0
        %4179 = vmatpush.msra.mxu0 0.0
        %4180 = vmatpush.msra.mxu0 0.0
        %4181 = vmatpush.msra.mxu0 %v4114
        %4182 = vmatpush.msra.mxu0 %v4113
        %4183 = vmatpush.msra.mxu0 %v4112
        %4184 = vmatpush.msra.mxu0 %v4111
        %4185 = vmatmul.f32.gmra.mxu0 %v4116
        %v4186 = vpop.f32.mrf.mxu0
        %v4187 = vadd.f32 0.0, %v4186
        %4188 = vmatmul.f32.gmra.mxu0 %v4119
        %v4189 = vpop.f32.mrf.mxu0
        %v4190 = vadd.f32 0.0, %v4189
        %4191 = vmatmul.f32.gmra.mxu0 %v4122
        %v4192 = vpop.f32.mrf.mxu0
        %v4193 = vadd.f32 0.0, %v4192
        %4194 = vmatmul.f32.gmra.mxu0 %v4125
        %v4195 = vpop.f32.mrf.mxu0
        %v4196 = vadd.f32 0.0, %v4195
        %4197 = vmatmul.f32.gmra.mxu0 %v4128
        %v4198 = vpop.f32.mrf.mxu0
        %v4199 = vadd.f32 0.0, %v4198
        %4200 = vmatmul.f32.gmra.mxu0 %v4131
        %v4201 = vpop.f32.mrf.mxu0
        %v4202 = vadd.f32 0.0, %v4201
        %4203 = vmatmul.f32.gmra.mxu0 %v4134
        %v4204 = vpop.f32.mrf.mxu0
        %v4205 = vadd.f32 0.0, %v4204
        %4206 = vmatmul.f32.gmra.mxu0 %v4137
        %v4207 = vpop.f32.mrf.mxu0
        %v4208 = vadd.f32 0.0, %v4207
        %4209 = vmatmul.f32.gmra.mxu0 %v4140
        %v4210 = vpop.f32.mrf.mxu0
        %v4211 = vadd.f32 0.0, %v4210
        %4212 = vmatmul.f32.gmra.mxu0 %v4143
        %v4213 = vpop.f32.mrf.mxu0
        %v4214 = vadd.f32 0.0, %v4213
        %4215 = vmatmul.f32.gmra.mxu0 %v4146
        %v4216 = vpop.f32.mrf.mxu0
        %v4217 = vadd.f32 0.0, %v4216
        %4218 = vmatmul.f32.gmra.mxu0 %v4149
        %v4219 = vpop.f32.mrf.mxu0
        %v4220 = vadd.f32 0.0, %v4219
        %4221 = vmatmul.f32.gmra.mxu0 %v4152
        %v4222 = vpop.f32.mrf.mxu0
        %v4223 = vadd.f32 0.0, %v4222
        %4224 = vmatmul.f32.gmra.mxu0 %v4155
        %v4225 = vpop.f32.mrf.mxu0
        %v4226 = vadd.f32 0.0, %v4225
        %4227 = vmatmul.f32.gmra.mxu0 %v4158
        %v4228 = vpop.f32.mrf.mxu0
        %v4229 = vadd.f32 0.0, %v4228
        %4230 = vmatmul.f32.gmra.mxu0 %v4161
        %v4231 = vpop.f32.mrf.mxu0
        %v4232 = vadd.f32 0.0, %v4231
        %4233 = vmatmul.f32.gmra.mxu0 %v4164
        %v4234 = vpop.f32.mrf.mxu0
        %v4235 = vadd.f32 0.0, %v4234
        %4236 = vmatmul.f32.gmra.mxu0 %v4167
        %v4237 = vpop.f32.mrf.mxu0
        %v4238 = vadd.f32 0.0, %v4237
        %4239 = vdwg.mxu0
        %v4240 = vadd.f32 %v4074, %v4187
        %v4241 = vadd.f32 %v4075, %v4190
        %v4242 = vadd.f32 %v4076, %v4193
        %v4243 = vadd.f32 %v4077, %v4196
        %v4244 = vadd.f32 %v4078, %v4199
        %v4245 = vadd.f32 %v4079, %v4202
        %v4246 = vadd.f32 %v4080, %v4205
        %v4247 = vadd.f32 %v4081, %v4208
        %v4248 = vadd.f32 %v4082, %v4211
        %v4249 = vadd.f32 %v4083, %v4214
        %v4250 = vadd.f32 %v4084, %v4217
        %v4251 = vadd.f32 %v4085, %v4220
        %v4252 = vadd.f32 %v4086, %v4223
        %v4253 = vadd.f32 %v4087, %v4226
        %v4254 = vadd.f32 %v4088, %v4229
        %v4255 = vadd.f32 %v4089, %v4232
        %v4256 = vadd.f32 %v4090, %v4235
        %v4257 = vadd.f32 %v4091, %v4238
        %v4258 = vld [vmem:[#allocation2 + $0x28] sm:$0xff]
        %v4259 = vld [vmem:[#allocation2 + $0x30] sm:$0xff]
        %v4260 = vld [vmem:[#allocation2 + $0x38] sm:$0xff]
        %v4261 = vld [vmem:[#allocation2 + $0x40] sm:$0xff]
        %v4262 = vld [vmem:[#allocation2 + $0x48] sm:$0xff]
        %v4263 = vld [vmem:[#allocation2 + $0x50] sm:$0xff]
        %v4264 = vld [vmem:[#allocation2 + $0x58] sm:$0xff]
        %v4265 = vld [vmem:[#allocation2 + $0x60] sm:$0xff]
        %v4266 = vld [vmem:[#allocation2 + $0x68] sm:$0xff]
        %v4267 = vld [vmem:[#allocation2 + $0x70] sm:$0xff]
        %v4268 = vld [vmem:[#allocation2 + $0x78] sm:$0xff]
        %v4269 = vld [vmem:[#allocation2 + $0x80] sm:$0xff]
        %v4270 = vld [vmem:[#allocation2 + $0x88] sm:$0xff]
        %v4271 = vld [vmem:[#allocation2 + $0x90] sm:$0xff]
        %v4272 = vld [vmem:[#allocation2 + $0x98] sm:$0xff]
        %v4273 = vld [vmem:[#allocation2 + $0xa0] sm:$0xff]
        %v4274 = vld [vmem:[#allocation2 + $0xa8] sm:$0xff]
        %v4275 = vld [vmem:[#allocation2 + $0xb0] sm:$0xff]
        %s4276 = scalar_lea.vmem %s5, 608
        %v4277 = vld [vmem:[%s4276] sm:$0xff]
        %v4278 = vld [vmem:[%s4276 + $0x8] sm:$0xff]
        %v4279 = vld [vmem:[%s4276 + $0x10] sm:$0xff]
        %v4280 = vld [vmem:[%s4276 + $0x18] sm:$0xff]
        %v4282 = vsel %vm1115, %v4258, 0
        %v4285 = vsel %vm1115, %v4259, 0
        %v4288 = vsel %vm1115, %v4260, 0
        %v4291 = vsel %vm1115, %v4261, 0
        %v4294 = vsel %vm1115, %v4262, 0
        %v4297 = vsel %vm1115, %v4263, 0
        %v4300 = vsel %vm1115, %v4264, 0
        %v4303 = vsel %vm1115, %v4265, 0
        %v4306 = vsel %vm1115, %v4266, 0
        %v4309 = vsel %vm1115, %v4267, 0
        %v4312 = vsel %vm1115, %v4268, 0
        %v4315 = vsel %vm1115, %v4269, 0
        %v4318 = vsel %vm1115, %v4270, 0
        %v4321 = vsel %vm1115, %v4271, 0
        %v4324 = vsel %vm1115, %v4272, 0
        %v4327 = vsel %vm1115, %v4273, 0
        %v4330 = vsel %vm1115, %v4274, 0
        %v4333 = vsel %vm1115, %v4275, 0
        %4335 = vmatpush.msra.mxu0 0.0
        %4336 = vmatpush.msra.mxu0 0.0
        %4337 = vmatpush.msra.mxu0 0.0
        %4338 = vmatpush.msra.mxu0 0.0
        %4339 = vmatpush.msra.mxu0 0.0
        %4340 = vmatpush.msra.mxu0 0.0
        %4341 = vmatpush.msra.mxu0 0.0
        %4342 = vmatpush.msra.mxu0 0.0
        %4343 = vmatpush.msra.mxu0 0.0
        %4344 = vmatpush.msra.mxu0 0.0
        %4345 = vmatpush.msra.mxu0 0.0
        %4346 = vmatpush.msra.mxu0 0.0
        %4347 = vmatpush.msra.mxu0 %v4280
        %4348 = vmatpush.msra.mxu0 %v4279
        %4349 = vmatpush.msra.mxu0 %v4278
        %4350 = vmatpush.msra.mxu0 %v4277
        %4351 = vmatmul.f32.gmra.mxu0 %v4282
        %v4352 = vpop.f32.mrf.mxu0
        %v4353 = vadd.f32 0.0, %v4352
        %4354 = vmatmul.f32.gmra.mxu0 %v4285
        %v4355 = vpop.f32.mrf.mxu0
        %v4356 = vadd.f32 0.0, %v4355
        %4357 = vmatmul.f32.gmra.mxu0 %v4288
        %v4358 = vpop.f32.mrf.mxu0
        %v4359 = vadd.f32 0.0, %v4358
        %4360 = vmatmul.f32.gmra.mxu0 %v4291
        %v4361 = vpop.f32.mrf.mxu0
        %v4362 = vadd.f32 0.0, %v4361
        %4363 = vmatmul.f32.gmra.mxu0 %v4294
        %v4364 = vpop.f32.mrf.mxu0
        %v4365 = vadd.f32 0.0, %v4364
        %4366 = vmatmul.f32.gmra.mxu0 %v4297
        %v4367 = vpop.f32.mrf.mxu0
        %v4368 = vadd.f32 0.0, %v4367
        %4369 = vmatmul.f32.gmra.mxu0 %v4300
        %v4370 = vpop.f32.mrf.mxu0
        %v4371 = vadd.f32 0.0, %v4370
        %4372 = vmatmul.f32.gmra.mxu0 %v4303
        %v4373 = vpop.f32.mrf.mxu0
        %v4374 = vadd.f32 0.0, %v4373
        %4375 = vmatmul.f32.gmra.mxu0 %v4306
        %v4376 = vpop.f32.mrf.mxu0
        %v4377 = vadd.f32 0.0, %v4376
        %4378 = vmatmul.f32.gmra.mxu0 %v4309
        %v4379 = vpop.f32.mrf.mxu0
        %v4380 = vadd.f32 0.0, %v4379
        %4381 = vmatmul.f32.gmra.mxu0 %v4312
        %v4382 = vpop.f32.mrf.mxu0
        %v4383 = vadd.f32 0.0, %v4382
        %4384 = vmatmul.f32.gmra.mxu0 %v4315
        %v4385 = vpop.f32.mrf.mxu0
        %v4386 = vadd.f32 0.0, %v4385
        %4387 = vmatmul.f32.gmra.mxu0 %v4318
        %v4388 = vpop.f32.mrf.mxu0
        %v4389 = vadd.f32 0.0, %v4388
        %4390 = vmatmul.f32.gmra.mxu0 %v4321
        %v4391 = vpop.f32.mrf.mxu0
        %v4392 = vadd.f32 0.0, %v4391
        %4393 = vmatmul.f32.gmra.mxu0 %v4324
        %v4394 = vpop.f32.mrf.mxu0
        %v4395 = vadd.f32 0.0, %v4394
        %4396 = vmatmul.f32.gmra.mxu0 %v4327
        %v4397 = vpop.f32.mrf.mxu0
        %v4398 = vadd.f32 0.0, %v4397
        %4399 = vmatmul.f32.gmra.mxu0 %v4330
        %v4400 = vpop.f32.mrf.mxu0
        %v4401 = vadd.f32 0.0, %v4400
        %4402 = vmatmul.f32.gmra.mxu0 %v4333
        %v4403 = vpop.f32.mrf.mxu0
        %v4404 = vadd.f32 0.0, %v4403
        %4405 = vdwg.mxu0
        %v4406 = vadd.f32 %v4240, %v4353
        %v4407 = vadd.f32 %v4241, %v4356
        %v4408 = vadd.f32 %v4242, %v4359
        %v4409 = vadd.f32 %v4243, %v4362
        %v4410 = vadd.f32 %v4244, %v4365
        %v4411 = vadd.f32 %v4245, %v4368
        %v4412 = vadd.f32 %v4246, %v4371
        %v4413 = vadd.f32 %v4247, %v4374
        %v4414 = vadd.f32 %v4248, %v4377
        %v4415 = vadd.f32 %v4249, %v4380
        %v4416 = vadd.f32 %v4250, %v4383
        %v4417 = vadd.f32 %v4251, %v4386
        %v4418 = vadd.f32 %v4252, %v4389
        %v4419 = vadd.f32 %v4253, %v4392
        %v4420 = vadd.f32 %v4254, %v4395
        %v4421 = vadd.f32 %v4255, %v4398
        %v4422 = vadd.f32 %v4256, %v4401
        %v4423 = vadd.f32 %v4257, %v4404
        %v4424 = vld [vmem:[#allocation2 + $0x30] sm:$0xff]
        %v4425 = vld [vmem:[#allocation2 + $0x38] sm:$0xff]
        %v4426 = vld [vmem:[#allocation2 + $0x40] sm:$0xff]
        %v4427 = vld [vmem:[#allocation2 + $0x48] sm:$0xff]
        %v4428 = vld [vmem:[#allocation2 + $0x50] sm:$0xff]
        %v4429 = vld [vmem:[#allocation2 + $0x58] sm:$0xff]
        %v4430 = vld [vmem:[#allocation2 + $0x60] sm:$0xff]
        %v4431 = vld [vmem:[#allocation2 + $0x68] sm:$0xff]
        %v4432 = vld [vmem:[#allocation2 + $0x70] sm:$0xff]
        %v4433 = vld [vmem:[#allocation2 + $0x78] sm:$0xff]
        %v4434 = vld [vmem:[#allocation2 + $0x80] sm:$0xff]
        %v4435 = vld [vmem:[#allocation2 + $0x88] sm:$0xff]
        %v4436 = vld [vmem:[#allocation2 + $0x90] sm:$0xff]
        %v4437 = vld [vmem:[#allocation2 + $0x98] sm:$0xff]
        %v4438 = vld [vmem:[#allocation2 + $0xa0] sm:$0xff]
        %v4439 = vld [vmem:[#allocation2 + $0xa8] sm:$0xff]
        %v4440 = vld [vmem:[#allocation2 + $0xb0] sm:$0xff]
        %v4441 = vld [vmem:[#allocation2 + $0xb8] sm:$0xff]
        %s4442 = scalar_lea.vmem %s5, 640
        %v4443 = vld [vmem:[%s4442] sm:$0xff]
        %v4444 = vld [vmem:[%s4442 + $0x8] sm:$0xff]
        %v4445 = vld [vmem:[%s4442 + $0x10] sm:$0xff]
        %v4446 = vld [vmem:[%s4442 + $0x18] sm:$0xff]
        %v4448 = vsel %vm1115, %v4424, 0
        %v4451 = vsel %vm1115, %v4425, 0
        %v4454 = vsel %vm1115, %v4426, 0
        %v4457 = vsel %vm1115, %v4427, 0
        %v4460 = vsel %vm1115, %v4428, 0
        %v4463 = vsel %vm1115, %v4429, 0
        %v4466 = vsel %vm1115, %v4430, 0
        %v4469 = vsel %vm1115, %v4431, 0
        %v4472 = vsel %vm1115, %v4432, 0
        %v4475 = vsel %vm1115, %v4433, 0
        %v4478 = vsel %vm1115, %v4434, 0
        %v4481 = vsel %vm1115, %v4435, 0
        %v4484 = vsel %vm1115, %v4436, 0
        %v4487 = vsel %vm1115, %v4437, 0
        %v4490 = vsel %vm1115, %v4438, 0
        %v4493 = vsel %vm1115, %v4439, 0
        %v4496 = vsel %vm1115, %v4440, 0
        %v4499 = vsel %vm1115, %v4441, 0
        %4501 = vmatpush.msra.mxu0 0.0
        %4502 = vmatpush.msra.mxu0 0.0
        %4503 = vmatpush.msra.mxu0 0.0
        %4504 = vmatpush.msra.mxu0 0.0
        %4505 = vmatpush.msra.mxu0 0.0
        %4506 = vmatpush.msra.mxu0 0.0
        %4507 = vmatpush.msra.mxu0 0.0
        %4508 = vmatpush.msra.mxu0 0.0
        %4509 = vmatpush.msra.mxu0 0.0
        %4510 = vmatpush.msra.mxu0 0.0
        %4511 = vmatpush.msra.mxu0 0.0
        %4512 = vmatpush.msra.mxu0 0.0
        %4513 = vmatpush.msra.mxu0 %v4446
        %4514 = vmatpush.msra.mxu0 %v4445
        %4515 = vmatpush.msra.mxu0 %v4444
        %4516 = vmatpush.msra.mxu0 %v4443
        %4517 = vmatmul.f32.gmra.mxu0 %v4448
        %v4518 = vpop.f32.mrf.mxu0
        %v4519 = vadd.f32 0.0, %v4518
        %4520 = vmatmul.f32.gmra.mxu0 %v4451
        %v4521 = vpop.f32.mrf.mxu0
        %v4522 = vadd.f32 0.0, %v4521
        %4523 = vmatmul.f32.gmra.mxu0 %v4454
        %v4524 = vpop.f32.mrf.mxu0
        %v4525 = vadd.f32 0.0, %v4524
        %4526 = vmatmul.f32.gmra.mxu0 %v4457
        %v4527 = vpop.f32.mrf.mxu0
        %v4528 = vadd.f32 0.0, %v4527
        %4529 = vmatmul.f32.gmra.mxu0 %v4460
        %v4530 = vpop.f32.mrf.mxu0
        %v4531 = vadd.f32 0.0, %v4530
        %4532 = vmatmul.f32.gmra.mxu0 %v4463
        %v4533 = vpop.f32.mrf.mxu0
        %v4534 = vadd.f32 0.0, %v4533
        %4535 = vmatmul.f32.gmra.mxu0 %v4466
        %v4536 = vpop.f32.mrf.mxu0
        %v4537 = vadd.f32 0.0, %v4536
        %4538 = vmatmul.f32.gmra.mxu0 %v4469
        %v4539 = vpop.f32.mrf.mxu0
        %v4540 = vadd.f32 0.0, %v4539
        %4541 = vmatmul.f32.gmra.mxu0 %v4472
        %v4542 = vpop.f32.mrf.mxu0
        %v4543 = vadd.f32 0.0, %v4542
        %4544 = vmatmul.f32.gmra.mxu0 %v4475
        %v4545 = vpop.f32.mrf.mxu0
        %v4546 = vadd.f32 0.0, %v4545
        %4547 = vmatmul.f32.gmra.mxu0 %v4478
        %v4548 = vpop.f32.mrf.mxu0
        %v4549 = vadd.f32 0.0, %v4548
        %4550 = vmatmul.f32.gmra.mxu0 %v4481
        %v4551 = vpop.f32.mrf.mxu0
        %v4552 = vadd.f32 0.0, %v4551
        %4553 = vmatmul.f32.gmra.mxu0 %v4484
        %v4554 = vpop.f32.mrf.mxu0
        %v4555 = vadd.f32 0.0, %v4554
        %4556 = vmatmul.f32.gmra.mxu0 %v4487
        %v4557 = vpop.f32.mrf.mxu0
        %v4558 = vadd.f32 0.0, %v4557
        %4559 = vmatmul.f32.gmra.mxu0 %v4490
        %v4560 = vpop.f32.mrf.mxu0
        %v4561 = vadd.f32 0.0, %v4560
        %4562 = vmatmul.f32.gmra.mxu0 %v4493
        %v4563 = vpop.f32.mrf.mxu0
        %v4564 = vadd.f32 0.0, %v4563
        %4565 = vmatmul.f32.gmra.mxu0 %v4496
        %v4566 = vpop.f32.mrf.mxu0
        %v4567 = vadd.f32 0.0, %v4566
        %4568 = vmatmul.f32.gmra.mxu0 %v4499
        %v4569 = vpop.f32.mrf.mxu0
        %v4570 = vadd.f32 0.0, %v4569
        %4571 = vdwg.mxu0
        %v4572 = vadd.f32 %v4406, %v4519
        %v4573 = vadd.f32 %v4407, %v4522
        %v4574 = vadd.f32 %v4408, %v4525
        %v4575 = vadd.f32 %v4409, %v4528
        %v4576 = vadd.f32 %v4410, %v4531
        %v4577 = vadd.f32 %v4411, %v4534
        %v4578 = vadd.f32 %v4412, %v4537
        %v4579 = vadd.f32 %v4413, %v4540
        %v4580 = vadd.f32 %v4414, %v4543
        %v4581 = vadd.f32 %v4415, %v4546
        %v4582 = vadd.f32 %v4416, %v4549
        %v4583 = vadd.f32 %v4417, %v4552
        %v4584 = vadd.f32 %v4418, %v4555
        %v4585 = vadd.f32 %v4419, %v4558
        %v4586 = vadd.f32 %v4420, %v4561
        %v4587 = vadd.f32 %v4421, %v4564
        %v4588 = vadd.f32 %v4422, %v4567
        %v4589 = vadd.f32 %v4423, %v4570
        %v4590 = vld [vmem:[#allocation2 + $0x31] sm:$0xff]
        %v4591 = vld [vmem:[#allocation2 + $0x39] sm:$0xff]
        %v4592 = vld [vmem:[#allocation2 + $0x41] sm:$0xff]
        %v4593 = vld [vmem:[#allocation2 + $0x49] sm:$0xff]
        %v4594 = vld [vmem:[#allocation2 + $0x51] sm:$0xff]
        %v4595 = vld [vmem:[#allocation2 + $0x59] sm:$0xff]
        %v4596 = vld [vmem:[#allocation2 + $0x61] sm:$0xff]
        %v4597 = vld [vmem:[#allocation2 + $0x69] sm:$0xff]
        %v4598 = vld [vmem:[#allocation2 + $0x71] sm:$0xff]
        %v4599 = vld [vmem:[#allocation2 + $0x79] sm:$0xff]
        %v4600 = vld [vmem:[#allocation2 + $0x81] sm:$0xff]
        %v4601 = vld [vmem:[#allocation2 + $0x89] sm:$0xff]
        %v4602 = vld [vmem:[#allocation2 + $0x91] sm:$0xff]
        %v4603 = vld [vmem:[#allocation2 + $0x99] sm:$0xff]
        %v4604 = vld [vmem:[#allocation2 + $0xa1] sm:$0xff]
        %v4605 = vld [vmem:[#allocation2 + $0xa9] sm:$0xff]
        %v4606 = vld [vmem:[#allocation2 + $0xb1] sm:$0xff]
        %v4607 = vld [vmem:[#allocation2 + $0xb9] sm:$0xff]
        %s4608 = scalar_lea.vmem %s5, 672
        %v4609 = vld [vmem:[%s4608] sm:$0xff]
        %v4610 = vld [vmem:[%s4608 + $0x8] sm:$0xff]
        %v4611 = vld [vmem:[%s4608 + $0x10] sm:$0xff]
        %v4612 = vld [vmem:[%s4608 + $0x18] sm:$0xff]
        %v4614 = vsel %vm1115, %v4590, 0
        %v4617 = vsel %vm1115, %v4591, 0
        %v4620 = vsel %vm1115, %v4592, 0
        %v4623 = vsel %vm1115, %v4593, 0
        %v4626 = vsel %vm1115, %v4594, 0
        %v4629 = vsel %vm1115, %v4595, 0
        %v4632 = vsel %vm1115, %v4596, 0
        %v4635 = vsel %vm1115, %v4597, 0
        %v4638 = vsel %vm1115, %v4598, 0
        %v4641 = vsel %vm1115, %v4599, 0
        %v4644 = vsel %vm1115, %v4600, 0
        %v4647 = vsel %vm1115, %v4601, 0
        %v4650 = vsel %vm1115, %v4602, 0
        %v4653 = vsel %vm1115, %v4603, 0
        %v4656 = vsel %vm1115, %v4604, 0
        %v4659 = vsel %vm1115, %v4605, 0
        %v4662 = vsel %vm1115, %v4606, 0
        %v4665 = vsel %vm1115, %v4607, 0
        %4667 = vmatpush.msra.mxu0 0.0
        %4668 = vmatpush.msra.mxu0 0.0
        %4669 = vmatpush.msra.mxu0 0.0
        %4670 = vmatpush.msra.mxu0 0.0
        %4671 = vmatpush.msra.mxu0 0.0
        %4672 = vmatpush.msra.mxu0 0.0
        %4673 = vmatpush.msra.mxu0 0.0
        %4674 = vmatpush.msra.mxu0 0.0
        %4675 = vmatpush.msra.mxu0 0.0
        %4676 = vmatpush.msra.mxu0 0.0
        %4677 = vmatpush.msra.mxu0 0.0
        %4678 = vmatpush.msra.mxu0 0.0
        %4679 = vmatpush.msra.mxu0 %v4612
        %4680 = vmatpush.msra.mxu0 %v4611
        %4681 = vmatpush.msra.mxu0 %v4610
        %4682 = vmatpush.msra.mxu0 %v4609
        %4683 = vmatmul.f32.gmra.mxu0 %v4614
        %v4684 = vpop.f32.mrf.mxu0
        %v4685 = vadd.f32 0.0, %v4684
        %4686 = vmatmul.f32.gmra.mxu0 %v4617
        %v4687 = vpop.f32.mrf.mxu0
        %v4688 = vadd.f32 0.0, %v4687
        %4689 = vmatmul.f32.gmra.mxu0 %v4620
        %v4690 = vpop.f32.mrf.mxu0
        %v4691 = vadd.f32 0.0, %v4690
        %4692 = vmatmul.f32.gmra.mxu0 %v4623
        %v4693 = vpop.f32.mrf.mxu0
        %v4694 = vadd.f32 0.0, %v4693
        %4695 = vmatmul.f32.gmra.mxu0 %v4626
        %v4696 = vpop.f32.mrf.mxu0
        %v4697 = vadd.f32 0.0, %v4696
        %4698 = vmatmul.f32.gmra.mxu0 %v4629
        %v4699 = vpop.f32.mrf.mxu0
        %v4700 = vadd.f32 0.0, %v4699
        %4701 = vmatmul.f32.gmra.mxu0 %v4632
        %v4702 = vpop.f32.mrf.mxu0
        %v4703 = vadd.f32 0.0, %v4702
        %4704 = vmatmul.f32.gmra.mxu0 %v4635
        %v4705 = vpop.f32.mrf.mxu0
        %v4706 = vadd.f32 0.0, %v4705
        %4707 = vmatmul.f32.gmra.mxu0 %v4638
        %v4708 = vpop.f32.mrf.mxu0
        %v4709 = vadd.f32 0.0, %v4708
        %4710 = vmatmul.f32.gmra.mxu0 %v4641
        %v4711 = vpop.f32.mrf.mxu0
        %v4712 = vadd.f32 0.0, %v4711
        %4713 = vmatmul.f32.gmra.mxu0 %v4644
        %v4714 = vpop.f32.mrf.mxu0
        %v4715 = vadd.f32 0.0, %v4714
        %4716 = vmatmul.f32.gmra.mxu0 %v4647
        %v4717 = vpop.f32.mrf.mxu0
        %v4718 = vadd.f32 0.0, %v4717
        %4719 = vmatmul.f32.gmra.mxu0 %v4650
        %v4720 = vpop.f32.mrf.mxu0
        %v4721 = vadd.f32 0.0, %v4720
        %4722 = vmatmul.f32.gmra.mxu0 %v4653
        %v4723 = vpop.f32.mrf.mxu0
        %v4724 = vadd.f32 0.0, %v4723
        %4725 = vmatmul.f32.gmra.mxu0 %v4656
        %v4726 = vpop.f32.mrf.mxu0
        %v4727 = vadd.f32 0.0, %v4726
        %4728 = vmatmul.f32.gmra.mxu0 %v4659
        %v4729 = vpop.f32.mrf.mxu0
        %v4730 = vadd.f32 0.0, %v4729
        %4731 = vmatmul.f32.gmra.mxu0 %v4662
        %v4732 = vpop.f32.mrf.mxu0
        %v4733 = vadd.f32 0.0, %v4732
        %4734 = vmatmul.f32.gmra.mxu0 %v4665
        %v4735 = vpop.f32.mrf.mxu0
        %v4736 = vadd.f32 0.0, %v4735
        %4737 = vdwg.mxu0
        %v4738 = vadd.f32 %v4572, %v4685
        %v4739 = vadd.f32 %v4573, %v4688
        %v4740 = vadd.f32 %v4574, %v4691
        %v4741 = vadd.f32 %v4575, %v4694
        %v4742 = vadd.f32 %v4576, %v4697
        %v4743 = vadd.f32 %v4577, %v4700
        %v4744 = vadd.f32 %v4578, %v4703
        %v4745 = vadd.f32 %v4579, %v4706
        %v4746 = vadd.f32 %v4580, %v4709
        %v4747 = vadd.f32 %v4581, %v4712
        %v4748 = vadd.f32 %v4582, %v4715
        %v4749 = vadd.f32 %v4583, %v4718
        %v4750 = vadd.f32 %v4584, %v4721
        %v4751 = vadd.f32 %v4585, %v4724
        %v4752 = vadd.f32 %v4586, %v4727
        %v4753 = vadd.f32 %v4587, %v4730
        %v4754 = vadd.f32 %v4588, %v4733
        %v4755 = vadd.f32 %v4589, %v4736
        %v4756 = vld [vmem:[#allocation2 + $0x32] sm:$0xff]
        %v4757 = vld [vmem:[#allocation2 + $0x3a] sm:$0xff]
        %v4758 = vld [vmem:[#allocation2 + $0x42] sm:$0xff]
        %v4759 = vld [vmem:[#allocation2 + $0x4a] sm:$0xff]
        %v4760 = vld [vmem:[#allocation2 + $0x52] sm:$0xff]
        %v4761 = vld [vmem:[#allocation2 + $0x5a] sm:$0xff]
        %v4762 = vld [vmem:[#allocation2 + $0x62] sm:$0xff]
        %v4763 = vld [vmem:[#allocation2 + $0x6a] sm:$0xff]
        %v4764 = vld [vmem:[#allocation2 + $0x72] sm:$0xff]
        %v4765 = vld [vmem:[#allocation2 + $0x7a] sm:$0xff]
        %v4766 = vld [vmem:[#allocation2 + $0x82] sm:$0xff]
        %v4767 = vld [vmem:[#allocation2 + $0x8a] sm:$0xff]
        %v4768 = vld [vmem:[#allocation2 + $0x92] sm:$0xff]
        %v4769 = vld [vmem:[#allocation2 + $0x9a] sm:$0xff]
        %v4770 = vld [vmem:[#allocation2 + $0xa2] sm:$0xff]
        %v4771 = vld [vmem:[#allocation2 + $0xaa] sm:$0xff]
        %v4772 = vld [vmem:[#allocation2 + $0xb2] sm:$0xff]
        %v4773 = vld [vmem:[#allocation2 + $0xba] sm:$0xff]
        %s4774 = scalar_lea.vmem %s5, 704
        %v4775 = vld [vmem:[%s4774] sm:$0xff]
        %v4776 = vld [vmem:[%s4774 + $0x8] sm:$0xff]
        %v4777 = vld [vmem:[%s4774 + $0x10] sm:$0xff]
        %v4778 = vld [vmem:[%s4774 + $0x18] sm:$0xff]
        %v4780 = vsel %vm1115, %v4756, 0
        %v4783 = vsel %vm1115, %v4757, 0
        %v4786 = vsel %vm1115, %v4758, 0
        %v4789 = vsel %vm1115, %v4759, 0
        %v4792 = vsel %vm1115, %v4760, 0
        %v4795 = vsel %vm1115, %v4761, 0
        %v4798 = vsel %vm1115, %v4762, 0
        %v4801 = vsel %vm1115, %v4763, 0
        %v4804 = vsel %vm1115, %v4764, 0
        %v4807 = vsel %vm1115, %v4765, 0
        %v4810 = vsel %vm1115, %v4766, 0
        %v4813 = vsel %vm1115, %v4767, 0
        %v4816 = vsel %vm1115, %v4768, 0
        %v4819 = vsel %vm1115, %v4769, 0
        %v4822 = vsel %vm1115, %v4770, 0
        %v4825 = vsel %vm1115, %v4771, 0
        %v4828 = vsel %vm1115, %v4772, 0
        %v4831 = vsel %vm1115, %v4773, 0
        %4833 = vmatpush.msra.mxu0 0.0
        %4834 = vmatpush.msra.mxu0 0.0
        %4835 = vmatpush.msra.mxu0 0.0
        %4836 = vmatpush.msra.mxu0 0.0
        %4837 = vmatpush.msra.mxu0 0.0
        %4838 = vmatpush.msra.mxu0 0.0
        %4839 = vmatpush.msra.mxu0 0.0
        %4840 = vmatpush.msra.mxu0 0.0
        %4841 = vmatpush.msra.mxu0 0.0
        %4842 = vmatpush.msra.mxu0 0.0
        %4843 = vmatpush.msra.mxu0 0.0
        %4844 = vmatpush.msra.mxu0 0.0
        %4845 = vmatpush.msra.mxu0 %v4778
        %4846 = vmatpush.msra.mxu0 %v4777
        %4847 = vmatpush.msra.mxu0 %v4776
        %4848 = vmatpush.msra.mxu0 %v4775
        %4849 = vmatmul.f32.gmra.mxu0 %v4780
        %v4850 = vpop.f32.mrf.mxu0
        %v4851 = vadd.f32 0.0, %v4850
        %4852 = vmatmul.f32.gmra.mxu0 %v4783
        %v4853 = vpop.f32.mrf.mxu0
        %v4854 = vadd.f32 0.0, %v4853
        %4855 = vmatmul.f32.gmra.mxu0 %v4786
        %v4856 = vpop.f32.mrf.mxu0
        %v4857 = vadd.f32 0.0, %v4856
        %4858 = vmatmul.f32.gmra.mxu0 %v4789
        %v4859 = vpop.f32.mrf.mxu0
        %v4860 = vadd.f32 0.0, %v4859
        %4861 = vmatmul.f32.gmra.mxu0 %v4792
        %v4862 = vpop.f32.mrf.mxu0
        %v4863 = vadd.f32 0.0, %v4862
        %4864 = vmatmul.f32.gmra.mxu0 %v4795
        %v4865 = vpop.f32.mrf.mxu0
        %v4866 = vadd.f32 0.0, %v4865
        %4867 = vmatmul.f32.gmra.mxu0 %v4798
        %v4868 = vpop.f32.mrf.mxu0
        %v4869 = vadd.f32 0.0, %v4868
        %4870 = vmatmul.f32.gmra.mxu0 %v4801
        %v4871 = vpop.f32.mrf.mxu0
        %v4872 = vadd.f32 0.0, %v4871
        %4873 = vmatmul.f32.gmra.mxu0 %v4804
        %v4874 = vpop.f32.mrf.mxu0
        %v4875 = vadd.f32 0.0, %v4874
        %4876 = vmatmul.f32.gmra.mxu0 %v4807
        %v4877 = vpop.f32.mrf.mxu0
        %v4878 = vadd.f32 0.0, %v4877
        %4879 = vmatmul.f32.gmra.mxu0 %v4810
        %v4880 = vpop.f32.mrf.mxu0
        %v4881 = vadd.f32 0.0, %v4880
        %4882 = vmatmul.f32.gmra.mxu0 %v4813
        %v4883 = vpop.f32.mrf.mxu0
        %v4884 = vadd.f32 0.0, %v4883
        %4885 = vmatmul.f32.gmra.mxu0 %v4816
        %v4886 = vpop.f32.mrf.mxu0
        %v4887 = vadd.f32 0.0, %v4886
        %4888 = vmatmul.f32.gmra.mxu0 %v4819
        %v4889 = vpop.f32.mrf.mxu0
        %v4890 = vadd.f32 0.0, %v4889
        %4891 = vmatmul.f32.gmra.mxu0 %v4822
        %v4892 = vpop.f32.mrf.mxu0
        %v4893 = vadd.f32 0.0, %v4892
        %4894 = vmatmul.f32.gmra.mxu0 %v4825
        %v4895 = vpop.f32.mrf.mxu0
        %v4896 = vadd.f32 0.0, %v4895
        %4897 = vmatmul.f32.gmra.mxu0 %v4828
        %v4898 = vpop.f32.mrf.mxu0
        %v4899 = vadd.f32 0.0, %v4898
        %4900 = vmatmul.f32.gmra.mxu0 %v4831
        %v4901 = vpop.f32.mrf.mxu0
        %v4902 = vadd.f32 0.0, %v4901
        %4903 = vdwg.mxu0
        %v4904 = vadd.f32 %v4738, %v4851
        %v4905 = vadd.f32 %v4739, %v4854
        %v4906 = vadd.f32 %v4740, %v4857
        %v4907 = vadd.f32 %v4741, %v4860
        %v4908 = vadd.f32 %v4742, %v4863
        %v4909 = vadd.f32 %v4743, %v4866
        %v4910 = vadd.f32 %v4744, %v4869
        %v4911 = vadd.f32 %v4745, %v4872
        %v4912 = vadd.f32 %v4746, %v4875
        %v4913 = vadd.f32 %v4747, %v4878
        %v4914 = vadd.f32 %v4748, %v4881
        %v4915 = vadd.f32 %v4749, %v4884
        %v4916 = vadd.f32 %v4750, %v4887
        %v4917 = vadd.f32 %v4751, %v4890
        %v4918 = vadd.f32 %v4752, %v4893
        %v4919 = vadd.f32 %v4753, %v4896
        %v4920 = vadd.f32 %v4754, %v4899
        %v4921 = vadd.f32 %v4755, %v4902
        %v4922 = vld [vmem:[#allocation2 + $0x33] sm:$0xff]
        %v4923 = vld [vmem:[#allocation2 + $0x3b] sm:$0xff]
        %v4924 = vld [vmem:[#allocation2 + $0x43] sm:$0xff]
        %v4925 = vld [vmem:[#allocation2 + $0x4b] sm:$0xff]
        %v4926 = vld [vmem:[#allocation2 + $0x53] sm:$0xff]
        %v4927 = vld [vmem:[#allocation2 + $0x5b] sm:$0xff]
        %v4928 = vld [vmem:[#allocation2 + $0x63] sm:$0xff]
        %v4929 = vld [vmem:[#allocation2 + $0x6b] sm:$0xff]
        %v4930 = vld [vmem:[#allocation2 + $0x73] sm:$0xff]
        %v4931 = vld [vmem:[#allocation2 + $0x7b] sm:$0xff]
        %v4932 = vld [vmem:[#allocation2 + $0x83] sm:$0xff]
        %v4933 = vld [vmem:[#allocation2 + $0x8b] sm:$0xff]
        %v4934 = vld [vmem:[#allocation2 + $0x93] sm:$0xff]
        %v4935 = vld [vmem:[#allocation2 + $0x9b] sm:$0xff]
        %v4936 = vld [vmem:[#allocation2 + $0xa3] sm:$0xff]
        %v4937 = vld [vmem:[#allocation2 + $0xab] sm:$0xff]
        %v4938 = vld [vmem:[#allocation2 + $0xb3] sm:$0xff]
        %v4939 = vld [vmem:[#allocation2 + $0xbb] sm:$0xff]
        %s4940 = scalar_lea.vmem %s5, 736
        %v4941 = vld [vmem:[%s4940] sm:$0xff]
        %v4942 = vld [vmem:[%s4940 + $0x8] sm:$0xff]
        %v4943 = vld [vmem:[%s4940 + $0x10] sm:$0xff]
        %v4944 = vld [vmem:[%s4940 + $0x18] sm:$0xff]
        %v4946 = vsel %vm1115, %v4922, 0
        %v4949 = vsel %vm1115, %v4923, 0
        %v4952 = vsel %vm1115, %v4924, 0
        %v4955 = vsel %vm1115, %v4925, 0
        %v4958 = vsel %vm1115, %v4926, 0
        %v4961 = vsel %vm1115, %v4927, 0
        %v4964 = vsel %vm1115, %v4928, 0
        %v4967 = vsel %vm1115, %v4929, 0
        %v4970 = vsel %vm1115, %v4930, 0
        %v4973 = vsel %vm1115, %v4931, 0
        %v4976 = vsel %vm1115, %v4932, 0
        %v4979 = vsel %vm1115, %v4933, 0
        %v4982 = vsel %vm1115, %v4934, 0
        %v4985 = vsel %vm1115, %v4935, 0
        %v4988 = vsel %vm1115, %v4936, 0
        %v4991 = vsel %vm1115, %v4937, 0
        %v4994 = vsel %vm1115, %v4938, 0
        %v4997 = vsel %vm1115, %v4939, 0
        %4999 = vmatpush.msra.mxu0 0.0
        %5000 = vmatpush.msra.mxu0 0.0
        %5001 = vmatpush.msra.mxu0 0.0
        %5002 = vmatpush.msra.mxu0 0.0
        %5003 = vmatpush.msra.mxu0 0.0
        %5004 = vmatpush.msra.mxu0 0.0
        %5005 = vmatpush.msra.mxu0 0.0
        %5006 = vmatpush.msra.mxu0 0.0
        %5007 = vmatpush.msra.mxu0 0.0
        %5008 = vmatpush.msra.mxu0 0.0
        %5009 = vmatpush.msra.mxu0 0.0
        %5010 = vmatpush.msra.mxu0 0.0
        %5011 = vmatpush.msra.mxu0 %v4944
        %5012 = vmatpush.msra.mxu0 %v4943
        %5013 = vmatpush.msra.mxu0 %v4942
        %5014 = vmatpush.msra.mxu0 %v4941
        %5015 = vmatmul.f32.gmra.mxu0 %v4946
        %v5016 = vpop.f32.mrf.mxu0
        %v5017 = vadd.f32 0.0, %v5016
        %5018 = vmatmul.f32.gmra.mxu0 %v4949
        %v5019 = vpop.f32.mrf.mxu0
        %v5020 = vadd.f32 0.0, %v5019
        %5021 = vmatmul.f32.gmra.mxu0 %v4952
        %v5022 = vpop.f32.mrf.mxu0
        %v5023 = vadd.f32 0.0, %v5022
        %5024 = vmatmul.f32.gmra.mxu0 %v4955
        %v5025 = vpop.f32.mrf.mxu0
        %v5026 = vadd.f32 0.0, %v5025
        %5027 = vmatmul.f32.gmra.mxu0 %v4958
        %v5028 = vpop.f32.mrf.mxu0
        %v5029 = vadd.f32 0.0, %v5028
        %5030 = vmatmul.f32.gmra.mxu0 %v4961
        %v5031 = vpop.f32.mrf.mxu0
        %v5032 = vadd.f32 0.0, %v5031
        %5033 = vmatmul.f32.gmra.mxu0 %v4964
        %v5034 = vpop.f32.mrf.mxu0
        %v5035 = vadd.f32 0.0, %v5034
        %5036 = vmatmul.f32.gmra.mxu0 %v4967
        %v5037 = vpop.f32.mrf.mxu0
        %v5038 = vadd.f32 0.0, %v5037
        %5039 = vmatmul.f32.gmra.mxu0 %v4970
        %v5040 = vpop.f32.mrf.mxu0
        %v5041 = vadd.f32 0.0, %v5040
        %5042 = vmatmul.f32.gmra.mxu0 %v4973
        %v5043 = vpop.f32.mrf.mxu0
        %v5044 = vadd.f32 0.0, %v5043
        %5045 = vmatmul.f32.gmra.mxu0 %v4976
        %v5046 = vpop.f32.mrf.mxu0
        %v5047 = vadd.f32 0.0, %v5046
        %5048 = vmatmul.f32.gmra.mxu0 %v4979
        %v5049 = vpop.f32.mrf.mxu0
        %v5050 = vadd.f32 0.0, %v5049
        %5051 = vmatmul.f32.gmra.mxu0 %v4982
        %v5052 = vpop.f32.mrf.mxu0
        %v5053 = vadd.f32 0.0, %v5052
        %5054 = vmatmul.f32.gmra.mxu0 %v4985
        %v5055 = vpop.f32.mrf.mxu0
        %v5056 = vadd.f32 0.0, %v5055
        %5057 = vmatmul.f32.gmra.mxu0 %v4988
        %v5058 = vpop.f32.mrf.mxu0
        %v5059 = vadd.f32 0.0, %v5058
        %5060 = vmatmul.f32.gmra.mxu0 %v4991
        %v5061 = vpop.f32.mrf.mxu0
        %v5062 = vadd.f32 0.0, %v5061
        %5063 = vmatmul.f32.gmra.mxu0 %v4994
        %v5064 = vpop.f32.mrf.mxu0
        %v5065 = vadd.f32 0.0, %v5064
        %5066 = vmatmul.f32.gmra.mxu0 %v4997
        %v5067 = vpop.f32.mrf.mxu0
        %v5068 = vadd.f32 0.0, %v5067
        %5069 = vdwg.mxu0
        %v5070 = vadd.f32 %v4904, %v5017
        %v5071 = vadd.f32 %v4905, %v5020
        %v5072 = vadd.f32 %v4906, %v5023
        %v5073 = vadd.f32 %v4907, %v5026
        %v5074 = vadd.f32 %v4908, %v5029
        %v5075 = vadd.f32 %v4909, %v5032
        %v5076 = vadd.f32 %v4910, %v5035
        %v5077 = vadd.f32 %v4911, %v5038
        %v5078 = vadd.f32 %v4912, %v5041
        %v5079 = vadd.f32 %v4913, %v5044
        %v5080 = vadd.f32 %v4914, %v5047
        %v5081 = vadd.f32 %v4915, %v5050
        %v5082 = vadd.f32 %v4916, %v5053
        %v5083 = vadd.f32 %v4917, %v5056
        %v5084 = vadd.f32 %v4918, %v5059
        %v5085 = vadd.f32 %v4919, %v5062
        %v5086 = vadd.f32 %v4920, %v5065
        %v5087 = vadd.f32 %v4921, %v5068
        %v5088 = vld [vmem:[#allocation2 + $0x34] sm:$0xff]
        %v5089 = vld [vmem:[#allocation2 + $0x3c] sm:$0xff]
        %v5090 = vld [vmem:[#allocation2 + $0x44] sm:$0xff]
        %v5091 = vld [vmem:[#allocation2 + $0x4c] sm:$0xff]
        %v5092 = vld [vmem:[#allocation2 + $0x54] sm:$0xff]
        %v5093 = vld [vmem:[#allocation2 + $0x5c] sm:$0xff]
        %v5094 = vld [vmem:[#allocation2 + $0x64] sm:$0xff]
        %v5095 = vld [vmem:[#allocation2 + $0x6c] sm:$0xff]
        %v5096 = vld [vmem:[#allocation2 + $0x74] sm:$0xff]
        %v5097 = vld [vmem:[#allocation2 + $0x7c] sm:$0xff]
        %v5098 = vld [vmem:[#allocation2 + $0x84] sm:$0xff]
        %v5099 = vld [vmem:[#allocation2 + $0x8c] sm:$0xff]
        %v5100 = vld [vmem:[#allocation2 + $0x94] sm:$0xff]
        %v5101 = vld [vmem:[#allocation2 + $0x9c] sm:$0xff]
        %v5102 = vld [vmem:[#allocation2 + $0xa4] sm:$0xff]
        %v5103 = vld [vmem:[#allocation2 + $0xac] sm:$0xff]
        %v5104 = vld [vmem:[#allocation2 + $0xb4] sm:$0xff]
        %v5105 = vld [vmem:[#allocation2 + $0xbc] sm:$0xff]
        %s5106 = scalar_lea.vmem %s5, 768
        %v5107 = vld [vmem:[%s5106] sm:$0xff]
        %v5108 = vld [vmem:[%s5106 + $0x8] sm:$0xff]
        %v5109 = vld [vmem:[%s5106 + $0x10] sm:$0xff]
        %v5110 = vld [vmem:[%s5106 + $0x18] sm:$0xff]
        %v5112 = vsel %vm1115, %v5088, 0
        %v5115 = vsel %vm1115, %v5089, 0
        %v5118 = vsel %vm1115, %v5090, 0
        %v5121 = vsel %vm1115, %v5091, 0
        %v5124 = vsel %vm1115, %v5092, 0
        %v5127 = vsel %vm1115, %v5093, 0
        %v5130 = vsel %vm1115, %v5094, 0
        %v5133 = vsel %vm1115, %v5095, 0
        %v5136 = vsel %vm1115, %v5096, 0
        %v5139 = vsel %vm1115, %v5097, 0
        %v5142 = vsel %vm1115, %v5098, 0
        %v5145 = vsel %vm1115, %v5099, 0
        %v5148 = vsel %vm1115, %v5100, 0
        %v5151 = vsel %vm1115, %v5101, 0
        %v5154 = vsel %vm1115, %v5102, 0
        %v5157 = vsel %vm1115, %v5103, 0
        %v5160 = vsel %vm1115, %v5104, 0
        %v5163 = vsel %vm1115, %v5105, 0
        %5165 = vmatpush.msra.mxu0 0.0
        %5166 = vmatpush.msra.mxu0 0.0
        %5167 = vmatpush.msra.mxu0 0.0
        %5168 = vmatpush.msra.mxu0 0.0
        %5169 = vmatpush.msra.mxu0 0.0
        %5170 = vmatpush.msra.mxu0 0.0
        %5171 = vmatpush.msra.mxu0 0.0
        %5172 = vmatpush.msra.mxu0 0.0
        %5173 = vmatpush.msra.mxu0 0.0
        %5174 = vmatpush.msra.mxu0 0.0
        %5175 = vmatpush.msra.mxu0 0.0
        %5176 = vmatpush.msra.mxu0 0.0
        %5177 = vmatpush.msra.mxu0 %v5110
        %5178 = vmatpush.msra.mxu0 %v5109
        %5179 = vmatpush.msra.mxu0 %v5108
        %5180 = vmatpush.msra.mxu0 %v5107
        %5181 = vmatmul.f32.gmra.mxu0 %v5112
        %v5182 = vpop.f32.mrf.mxu0
        %v5183 = vadd.f32 0.0, %v5182
        %5184 = vmatmul.f32.gmra.mxu0 %v5115
        %v5185 = vpop.f32.mrf.mxu0
        %v5186 = vadd.f32 0.0, %v5185
        %5187 = vmatmul.f32.gmra.mxu0 %v5118
        %v5188 = vpop.f32.mrf.mxu0
        %v5189 = vadd.f32 0.0, %v5188
        %5190 = vmatmul.f32.gmra.mxu0 %v5121
        %v5191 = vpop.f32.mrf.mxu0
        %v5192 = vadd.f32 0.0, %v5191
        %5193 = vmatmul.f32.gmra.mxu0 %v5124
        %v5194 = vpop.f32.mrf.mxu0
        %v5195 = vadd.f32 0.0, %v5194
        %5196 = vmatmul.f32.gmra.mxu0 %v5127
        %v5197 = vpop.f32.mrf.mxu0
        %v5198 = vadd.f32 0.0, %v5197
        %5199 = vmatmul.f32.gmra.mxu0 %v5130
        %v5200 = vpop.f32.mrf.mxu0
        %v5201 = vadd.f32 0.0, %v5200
        %5202 = vmatmul.f32.gmra.mxu0 %v5133
        %v5203 = vpop.f32.mrf.mxu0
        %v5204 = vadd.f32 0.0, %v5203
        %5205 = vmatmul.f32.gmra.mxu0 %v5136
        %v5206 = vpop.f32.mrf.mxu0
        %v5207 = vadd.f32 0.0, %v5206
        %5208 = vmatmul.f32.gmra.mxu0 %v5139
        %v5209 = vpop.f32.mrf.mxu0
        %v5210 = vadd.f32 0.0, %v5209
        %5211 = vmatmul.f32.gmra.mxu0 %v5142
        %v5212 = vpop.f32.mrf.mxu0
        %v5213 = vadd.f32 0.0, %v5212
        %5214 = vmatmul.f32.gmra.mxu0 %v5145
        %v5215 = vpop.f32.mrf.mxu0
        %v5216 = vadd.f32 0.0, %v5215
        %5217 = vmatmul.f32.gmra.mxu0 %v5148
        %v5218 = vpop.f32.mrf.mxu0
        %v5219 = vadd.f32 0.0, %v5218
        %5220 = vmatmul.f32.gmra.mxu0 %v5151
        %v5221 = vpop.f32.mrf.mxu0
        %v5222 = vadd.f32 0.0, %v5221
        %5223 = vmatmul.f32.gmra.mxu0 %v5154
        %v5224 = vpop.f32.mrf.mxu0
        %v5225 = vadd.f32 0.0, %v5224
        %5226 = vmatmul.f32.gmra.mxu0 %v5157
        %v5227 = vpop.f32.mrf.mxu0
        %v5228 = vadd.f32 0.0, %v5227
        %5229 = vmatmul.f32.gmra.mxu0 %v5160
        %v5230 = vpop.f32.mrf.mxu0
        %v5231 = vadd.f32 0.0, %v5230
        %5232 = vmatmul.f32.gmra.mxu0 %v5163
        %v5233 = vpop.f32.mrf.mxu0
        %v5234 = vadd.f32 0.0, %v5233
        %5235 = vdwg.mxu0
        %v5236 = vadd.f32 %v5070, %v5183
        %v5237 = vadd.f32 %v5071, %v5186
        %v5238 = vadd.f32 %v5072, %v5189
        %v5239 = vadd.f32 %v5073, %v5192
        %v5240 = vadd.f32 %v5074, %v5195
        %v5241 = vadd.f32 %v5075, %v5198
        %v5242 = vadd.f32 %v5076, %v5201
        %v5243 = vadd.f32 %v5077, %v5204
        %v5244 = vadd.f32 %v5078, %v5207
        %v5245 = vadd.f32 %v5079, %v5210
        %v5246 = vadd.f32 %v5080, %v5213
        %v5247 = vadd.f32 %v5081, %v5216
        %v5248 = vadd.f32 %v5082, %v5219
        %v5249 = vadd.f32 %v5083, %v5222
        %v5250 = vadd.f32 %v5084, %v5225
        %v5251 = vadd.f32 %v5085, %v5228
        %v5252 = vadd.f32 %v5086, %v5231
        %v5253 = vadd.f32 %v5087, %v5234
        %v5254 = vld [vmem:[%s6] sm:$0x1]
        %v5256 = vperm.slane %v5254, 0
        %v5258 = vadd.f32 %v5236, %v5256
        %v5259 = vadd.f32 %v5237, %v5256
        %v5260 = vadd.f32 %v5238, %v5256
        %v5261 = vadd.f32 %v5239, %v5256
        %v5262 = vadd.f32 %v5240, %v5256
        %v5263 = vadd.f32 %v5241, %v5256
        %v5264 = vadd.f32 %v5242, %v5256
        %v5265 = vadd.f32 %v5243, %v5256
        %v5266 = vadd.f32 %v5244, %v5256
        %v5267 = vadd.f32 %v5245, %v5256
        %v5268 = vadd.f32 %v5246, %v5256
        %v5269 = vadd.f32 %v5247, %v5256
        %v5270 = vadd.f32 %v5248, %v5256
        %v5271 = vadd.f32 %v5249, %v5256
        %v5272 = vadd.f32 %v5250, %v5256
        %v5273 = vadd.f32 %v5251, %v5256
        %v5274 = vadd.f32 %v5252, %v5256
        %v5275 = vadd.f32 %v5253, %v5256
        %v5276 = vmax.f32 %v5258, 0.0
        %v5277 = vmax.f32 %v5259, 0.0
        %v5278 = vmax.f32 %v5260, 0.0
        %v5279 = vmax.f32 %v5261, 0.0
        %v5280 = vmax.f32 %v5262, 0.0
        %v5281 = vmax.f32 %v5263, 0.0
        %v5282 = vmax.f32 %v5264, 0.0
        %v5283 = vmax.f32 %v5265, 0.0
        %v5284 = vmax.f32 %v5266, 0.0
        %v5285 = vmax.f32 %v5267, 0.0
        %v5286 = vmax.f32 %v5268, 0.0
        %v5287 = vmax.f32 %v5269, 0.0
        %v5288 = vmax.f32 %v5270, 0.0
        %v5289 = vmax.f32 %v5271, 0.0
        %v5290 = vmax.f32 %v5272, 0.0
        %v5291 = vmax.f32 %v5273, 0.0
        %v5292 = vmax.f32 %v5274, 0.0
        %v5293 = vmax.f32 %v5275, 0.0
        %vm5294 = vcmask 523264
        %5295 = vst.msk [vmem:[#allocation3] sm:$0xff] %vm5294, %v5276
        %5296 = vst.msk [vmem:[#allocation3 + $0x8] sm:$0xff] %vm5294, %v5277
        %5297 = vst.msk [vmem:[#allocation3 + $0x10] sm:$0xff] %vm5294, %v5278
        %5298 = vst.msk [vmem:[#allocation3 + $0x18] sm:$0xff] %vm5294, %v5279
        %5299 = vst.msk [vmem:[#allocation3 + $0x20] sm:$0xff] %vm5294, %v5280
        %5300 = vst.msk [vmem:[#allocation3 + $0x28] sm:$0xff] %vm5294, %v5281
        %5301 = vst.msk [vmem:[#allocation3 + $0x30] sm:$0xff] %vm5294, %v5282
        %5302 = vst.msk [vmem:[#allocation3 + $0x38] sm:$0xff] %vm5294, %v5283
        %5303 = vst.msk [vmem:[#allocation3 + $0x40] sm:$0xff] %vm5294, %v5284
        %5304 = vst.msk [vmem:[#allocation3 + $0x48] sm:$0xff] %vm5294, %v5285
        %5305 = vst.msk [vmem:[#allocation3 + $0x50] sm:$0xff] %vm5294, %v5286
        %5306 = vst.msk [vmem:[#allocation3 + $0x58] sm:$0xff] %vm5294, %v5287
        %5307 = vst.msk [vmem:[#allocation3 + $0x60] sm:$0xff] %vm5294, %v5288
        %5308 = vst.msk [vmem:[#allocation3 + $0x68] sm:$0xff] %vm5294, %v5289
        %5309 = vst.msk [vmem:[#allocation3 + $0x70] sm:$0xff] %vm5294, %v5290
        %5310 = vst.msk [vmem:[#allocation3 + $0x78] sm:$0xff] %vm5294, %v5291
        %5311 = vst.msk [vmem:[#allocation3 + $0x80] sm:$0xff] %vm5294, %v5292
        %5312 = vst.msk [vmem:[#allocation3 + $0x88] sm:$0xff] %vm5294, %v5293
        %5313 = vst.msk [vmem:[#allocation3 + $0x90] sm:$0xff] %vm5294, 0.0
        %5314 = vst.msk [vmem:[#allocation3 + $0x98] sm:$0xff] %vm5294, 0.0
        %v5315 = vld [vmem:[#allocation3] sm:$0xff]
        %v5316 = vld [vmem:[#allocation3 + $0x8] sm:$0xff]
        %v5317 = vld [vmem:[#allocation3 + $0x10] sm:$0xff]
        %v5318 = vld [vmem:[#allocation3 + $0x18] sm:$0xff]
        %v5319 = vld [vmem:[#allocation3 + $0x20] sm:$0xff]
        %v5320 = vld [vmem:[#allocation3 + $0x28] sm:$0xff]
        %v5321 = vld [vmem:[#allocation3 + $0x30] sm:$0xff]
        %v5322 = vld [vmem:[#allocation3 + $0x38] sm:$0xff]
        %v5323 = vld [vmem:[#allocation3 + $0x40] sm:$0xff]
        %v5324 = vld [vmem:[#allocation3 + $0x48] sm:$0xff]
        %v5325 = vld [vmem:[#allocation3 + $0x50] sm:$0xff]
        %v5326 = vld [vmem:[#allocation3 + $0x58] sm:$0xff]
        %v5327 = vld [vmem:[#allocation3 + $0x60] sm:$0xff]
        %v5328 = vld [vmem:[#allocation3 + $0x68] sm:$0xff]
        %v5329 = vld [vmem:[#allocation3 + $0x70] sm:$0xff]
        %v5330 = vld [vmem:[#allocation3 + $0x78] sm:$0xff]
        %v5331 = vld [vmem:[#allocation3 + $0x80] sm:$0xff]
        %v5332 = vld [vmem:[#allocation3 + $0x88] sm:$0xff]
        %v5333 = vld [vmem:[#allocation3 + $0x1] sm:$0xff]
        %v5334 = vld [vmem:[#allocation3 + $0x9] sm:$0xff]
        %v5335 = vld [vmem:[#allocation3 + $0x11] sm:$0xff]
        %v5336 = vld [vmem:[#allocation3 + $0x19] sm:$0xff]
        %v5337 = vld [vmem:[#allocation3 + $0x21] sm:$0xff]
        %v5338 = vld [vmem:[#allocation3 + $0x29] sm:$0xff]
        %v5339 = vld [vmem:[#allocation3 + $0x31] sm:$0xff]
        %v5340 = vld [vmem:[#allocation3 + $0x39] sm:$0xff]
        %v5341 = vld [vmem:[#allocation3 + $0x41] sm:$0xff]
        %v5342 = vld [vmem:[#allocation3 + $0x49] sm:$0xff]
        %v5343 = vld [vmem:[#allocation3 + $0x51] sm:$0xff]
        %v5344 = vld [vmem:[#allocation3 + $0x59] sm:$0xff]
        %v5345 = vld [vmem:[#allocation3 + $0x61] sm:$0xff]
        %v5346 = vld [vmem:[#allocation3 + $0x69] sm:$0xff]
        %v5347 = vld [vmem:[#allocation3 + $0x71] sm:$0xff]
        %v5348 = vld [vmem:[#allocation3 + $0x79] sm:$0xff]
        %v5349 = vld [vmem:[#allocation3 + $0x81] sm:$0xff]
        %v5350 = vld [vmem:[#allocation3 + $0x89] sm:$0xff]
        %v5351 = vmax.f32 %v5315, %v5333
        %v5352 = vmax.f32 %v5316, %v5334
        %v5353 = vmax.f32 %v5317, %v5335
        %v5354 = vmax.f32 %v5318, %v5336
        %v5355 = vmax.f32 %v5319, %v5337
        %v5356 = vmax.f32 %v5320, %v5338
        %v5357 = vmax.f32 %v5321, %v5339
        %v5358 = vmax.f32 %v5322, %v5340
        %v5359 = vmax.f32 %v5323, %v5341
        %v5360 = vmax.f32 %v5324, %v5342
        %v5361 = vmax.f32 %v5325, %v5343
        %v5362 = vmax.f32 %v5326, %v5344
        %v5363 = vmax.f32 %v5327, %v5345
        %v5364 = vmax.f32 %v5328, %v5346
        %v5365 = vmax.f32 %v5329, %v5347
        %v5366 = vmax.f32 %v5330, %v5348
        %v5367 = vmax.f32 %v5331, %v5349
        %v5368 = vmax.f32 %v5332, %v5350
        %v5369 = vld [vmem:[#allocation3 + $0xc] sm:$0xff]
        %v5370 = vld [vmem:[#allocation3 + $0x14] sm:$0xff]
        %v5371 = vld [vmem:[#allocation3 + $0x1c] sm:$0xff]
        %v5372 = vld [vmem:[#allocation3 + $0x24] sm:$0xff]
        %v5373 = vld [vmem:[#allocation3 + $0x2c] sm:$0xff]
        %v5374 = vld [vmem:[#allocation3 + $0x34] sm:$0xff]
        %v5375 = vld [vmem:[#allocation3 + $0x3c] sm:$0xff]
        %v5376 = vld [vmem:[#allocation3 + $0x44] sm:$0xff]
        %v5377 = vld [vmem:[#allocation3 + $0x4c] sm:$0xff]
        %v5378 = vld [vmem:[#allocation3 + $0x54] sm:$0xff]
        %v5379 = vld [vmem:[#allocation3 + $0x5c] sm:$0xff]
        %v5380 = vld [vmem:[#allocation3 + $0x64] sm:$0xff]
        %v5381 = vld [vmem:[#allocation3 + $0x6c] sm:$0xff]
        %v5382 = vld [vmem:[#allocation3 + $0x74] sm:$0xff]
        %v5383 = vld [vmem:[#allocation3 + $0x7c] sm:$0xff]
        %v5384 = vld [vmem:[#allocation3 + $0x84] sm:$0xff]
        %v5385 = vld [vmem:[#allocation3 + $0x8c] sm:$0xff]
        %v5386 = vld [vmem:[#allocation3 + $0x94] sm:$0xff]
        %v5387 = vld [vmem:[#allocation3 + $0xd] sm:$0xff]
        %v5388 = vld [vmem:[#allocation3 + $0x15] sm:$0xff]
        %v5389 = vld [vmem:[#allocation3 + $0x1d] sm:$0xff]
        %v5390 = vld [vmem:[#allocation3 + $0x25] sm:$0xff]
        %v5391 = vld [vmem:[#allocation3 + $0x2d] sm:$0xff]
        %v5392 = vld [vmem:[#allocation3 + $0x35] sm:$0xff]
        %v5393 = vld [vmem:[#allocation3 + $0x3d] sm:$0xff]
        %v5394 = vld [vmem:[#allocation3 + $0x45] sm:$0xff]
        %v5395 = vld [vmem:[#allocation3 + $0x4d] sm:$0xff]
        %v5396 = vld [vmem:[#allocation3 + $0x55] sm:$0xff]
        %v5397 = vld [vmem:[#allocation3 + $0x5d] sm:$0xff]
        %v5398 = vld [vmem:[#allocation3 + $0x65] sm:$0xff]
        %v5399 = vld [vmem:[#allocation3 + $0x6d] sm:$0xff]
        %v5400 = vld [vmem:[#allocation3 + $0x75] sm:$0xff]
        %v5401 = vld [vmem:[#allocation3 + $0x7d] sm:$0xff]
        %v5402 = vld [vmem:[#allocation3 + $0x85] sm:$0xff]
        %v5403 = vld [vmem:[#allocation3 + $0x8d] sm:$0xff]
        %v5404 = vld [vmem:[#allocation3 + $0x95] sm:$0xff]
        %v5405 = vmax.f32 %v5369, %v5387
        %v5406 = vmax.f32 %v5370, %v5388
        %v5407 = vmax.f32 %v5371, %v5389
        %v5408 = vmax.f32 %v5372, %v5390
        %v5409 = vmax.f32 %v5373, %v5391
        %v5410 = vmax.f32 %v5374, %v5392
        %v5411 = vmax.f32 %v5375, %v5393
        %v5412 = vmax.f32 %v5376, %v5394
        %v5413 = vmax.f32 %v5377, %v5395
        %v5414 = vmax.f32 %v5378, %v5396
        %v5415 = vmax.f32 %v5379, %v5397
        %v5416 = vmax.f32 %v5380, %v5398
        %v5417 = vmax.f32 %v5381, %v5399
        %v5418 = vmax.f32 %v5382, %v5400
        %v5419 = vmax.f32 %v5383, %v5401
        %v5420 = vmax.f32 %v5384, %v5402
        %v5421 = vmax.f32 %v5385, %v5403
        %v5422 = vmax.f32 %v5386, %v5404
        %v5423 = vmax.f32 %v5351, %v5405
        %v5424 = vmax.f32 %v5352, %v5406
        %v5425 = vmax.f32 %v5353, %v5407
        %v5426 = vmax.f32 %v5354, %v5408
        %v5427 = vmax.f32 %v5355, %v5409
        %v5428 = vmax.f32 %v5356, %v5410
        %v5429 = vmax.f32 %v5357, %v5411
        %v5430 = vmax.f32 %v5358, %v5412
        %v5431 = vmax.f32 %v5359, %v5413
        %v5432 = vmax.f32 %v5360, %v5414
        %v5433 = vmax.f32 %v5361, %v5415
        %v5434 = vmax.f32 %v5362, %v5416
        %v5435 = vmax.f32 %v5363, %v5417
        %v5436 = vmax.f32 %v5364, %v5418
        %v5437 = vmax.f32 %v5365, %v5419
        %v5438 = vmax.f32 %v5366, %v5420
        %v5439 = vmax.f32 %v5367, %v5421
        %v5440 = vmax.f32 %v5368, %v5422
        %v5441 = vld [vmem:[%s9] sm:$0xff]
        %v5442 = vld [vmem:[%s9 + $0x8] sm:$0xff]
        %v5443 = vld [vmem:[%s9 + $0x10] sm:$0xff]
        %v5444 = vld [vmem:[%s9 + $0x18] sm:$0xff]
        %vm5445 = vcmask 130048
        %v5447 = vsel %vm5445, %v5442, 0
        %v5450 = vsel %vm5445, %v5444, 0
        %5452 = vmatpush.msra.mxu0 %v5438
        %5453 = vmatpush.msra.mxu0 %v5437
        %5454 = vmatpush.msra.mxu0 %v5436
        %5455 = vmatpush.msra.mxu0 %v5435
        %5456 = vmatpush.msra.mxu0 %v5434
        %5457 = vmatpush.msra.mxu0 %v5433
        %5458 = vmatpush.msra.mxu0 %v5432
        %5459 = vmatpush.msra.mxu0 %v5431
        %5460 = vmatpush.msra.mxu0 %v5430
        %5461 = vmatpush.msra.mxu0 %v5429
        %5462 = vmatpush.msra.mxu0 %v5428
        %5463 = vmatpush.msra.mxu0 %v5427
        %5464 = vmatpush.msra.mxu0 %v5426
        %5465 = vmatpush.msra.mxu0 %v5425
        %5466 = vmatpush.msra.mxu0 %v5424
        %5467 = vmatpush.msra.mxu0 %v5423
        %5468 = vmatmul.f32.gmra.mxu0 %v5441
        %v5469 = vpop.f32.mrf.mxu0
        %v5470 = vadd.f32 0.0, %v5469
        %5471 = vmatmul.f32.gmra.mxu0 %v5443
        %v5472 = vpop.f32.mrf.mxu0
        %v5473 = vadd.f32 0.0, %v5472
        %5474 = vdwg.mxu0
        %5475 = vmatpush.msra.mxu0 0.0
        %5476 = vmatpush.msra.mxu0 0.0
        %5477 = vmatpush.msra.mxu0 0.0
        %5478 = vmatpush.msra.mxu0 0.0
        %5479 = vmatpush.msra.mxu0 0.0
        %5480 = vmatpush.msra.mxu0 0.0
        %5481 = vmatpush.msra.mxu0 0.0
        %5482 = vmatpush.msra.mxu0 0.0
        %5483 = vmatpush.msra.mxu0 0.0
        %5484 = vmatpush.msra.mxu0 0.0
        %5485 = vmatpush.msra.mxu0 0.0
        %5486 = vmatpush.msra.mxu0 0.0
        %5487 = vmatpush.msra.mxu0 0.0
        %5488 = vmatpush.msra.mxu0 0.0
        %5489 = vmatpush.msra.mxu0 %v5440
        %5490 = vmatpush.msra.mxu0 %v5439
        %5491 = vmatmul.f32.gmra.mxu0 %v5447
        %v5492 = vpop.f32.mrf.mxu0
        %v5493 = vadd.f32 %v5470, %v5492
        %5494 = vmatmul.f32.gmra.mxu0 %v5450
        %v5495 = vpop.f32.mrf.mxu0
        %v5496 = vadd.f32 %v5473, %v5495
        %5497 = vdwg.mxu0
        %v5498 = vld [vmem:[%s7] sm:$0x1]
        %v5500 = vperm.slane %v5498, 0
        %v5502 = vmul.f32 %v5493, %v5500
        %v5503 = vmul.f32 %v5496, %v5500
        %v5504 = vld [vmem:[%s8] sm:$0x1]
        %v5506 = vperm.slane %v5504, 0
        %v5508 = vadd.f32 %v5502, %v5506
        %v5509 = vadd.f32 %v5503, %v5506
        %5510 = vst.msk [vmem:[#allocation4] sm:$0xff] %vm5294, %v5508
        %5511 = vst.msk [vmem:[#allocation4 + $0x8] sm:$0xff] %vm5294, %v5509
        %v5512 = vld [vmem:[%s11] sm:$0x1]
        %v5513 = vld [vmem:[#allocation4] sm:$0x1]
        %v5514 = vld [vmem:[%s10] sm:$0xff]
        %v5515 = vld [vmem:[%s10 + $0x8] sm:$0xff]
        %v5516 = vld [vmem:[%s10 + $0x10] sm:$0xff]
        %v5517 = vld [vmem:[%s10 + $0x18] sm:$0xff]
        %v5518 = vld [vmem:[%s10 + $0x20] sm:$0xff]
        %v5519 = vld [vmem:[%s10 + $0x28] sm:$0xff]
        %v5520 = vld [vmem:[%s10 + $0x30] sm:$0xff]
        %v5521 = vld [vmem:[%s10 + $0x38] sm:$0xff]
        %v5523 = vsel %vm5294, %v5513, 0
        %5525 = vmatpush.msra.mxu0 0.0
        %5526 = vmatpush.msra.mxu0 0.0
        %5527 = vmatpush.msra.mxu0 0.0
        %5528 = vmatpush.msra.mxu0 0.0
        %5529 = vmatpush.msra.mxu0 0.0
        %5530 = vmatpush.msra.mxu0 0.0
        %5531 = vmatpush.msra.mxu0 0.0
        %5532 = vmatpush.msra.mxu0 0.0
        %5533 = vmatpush.msra.mxu0 %v5521
        %5534 = vmatpush.msra.mxu0 %v5520
        %5535 = vmatpush.msra.mxu0 %v5519
        %5536 = vmatpush.msra.mxu0 %v5518
        %5537 = vmatpush.msra.mxu0 %v5517
        %5538 = vmatpush.msra.mxu0 %v5516
        %5539 = vmatpush.msra.mxu0 %v5515
        %5540 = vmatpush.msra.mxu0 %v5514
        %5541 = vmatmul.f32.gmra.mxu0 %v5523
        %v5542 = vpop.f32.mrf.mxu0
        %v5543 = vadd.f32 0.0, %v5542
        %5544 = vdwg.mxu0
        %v5545 = vadd.f32 %v5512, %v5543
        %v5546 = vld [vmem:[#allocation4 + $0x1] sm:$0x1]
        %s5547 = scalar_lea.vmem %s10, 64
        %v5548 = vld [vmem:[%s5547] sm:$0xff]
        %v5549 = vld [vmem:[%s5547 + $0x8] sm:$0xff]
        %v5550 = vld [vmem:[%s5547 + $0x10] sm:$0xff]
        %v5551 = vld [vmem:[%s5547 + $0x18] sm:$0xff]
        %v5552 = vld [vmem:[%s5547 + $0x20] sm:$0xff]
        %v5553 = vld [vmem:[%s5547 + $0x28] sm:$0xff]
        %v5554 = vld [vmem:[%s5547 + $0x30] sm:$0xff]
        %v5555 = vld [vmem:[%s5547 + $0x38] sm:$0xff]
        %v5557 = vsel %vm5294, %v5546, 0
        %5559 = vmatpush.msra.mxu0 0.0
        %5560 = vmatpush.msra.mxu0 0.0
        %5561 = vmatpush.msra.mxu0 0.0
        %5562 = vmatpush.msra.mxu0 0.0
        %5563 = vmatpush.msra.mxu0 0.0
        %5564 = vmatpush.msra.mxu0 0.0
        %5565 = vmatpush.msra.mxu0 0.0
        %5566 = vmatpush.msra.mxu0 0.0
        %5567 = vmatpush.msra.mxu0 %v5555
        %5568 = vmatpush.msra.mxu0 %v5554
        %5569 = vmatpush.msra.mxu0 %v5553
        %5570 = vmatpush.msra.mxu0 %v5552
        %5571 = vmatpush.msra.mxu0 %v5551
        %5572 = vmatpush.msra.mxu0 %v5550
        %5573 = vmatpush.msra.mxu0 %v5549
        %5574 = vmatpush.msra.mxu0 %v5548
        %5575 = vmatmul.f32.gmra.mxu0 %v5557
        %v5576 = vpop.f32.mrf.mxu0
        %v5577 = vadd.f32 0.0, %v5576
        %5578 = vdwg.mxu0
        %v5579 = vadd.f32 %v5545, %v5577
        %v5580 = vld [vmem:[#allocation4 + $0x2] sm:$0x1]
        %s5581 = scalar_lea.vmem %s10, 128
        %v5582 = vld [vmem:[%s5581] sm:$0xff]
        %v5583 = vld [vmem:[%s5581 + $0x8] sm:$0xff]
        %v5584 = vld [vmem:[%s5581 + $0x10] sm:$0xff]
        %v5585 = vld [vmem:[%s5581 + $0x18] sm:$0xff]
        %v5586 = vld [vmem:[%s5581 + $0x20] sm:$0xff]
        %v5587 = vld [vmem:[%s5581 + $0x28] sm:$0xff]
        %v5588 = vld [vmem:[%s5581 + $0x30] sm:$0xff]
        %v5589 = vld [vmem:[%s5581 + $0x38] sm:$0xff]
        %v5591 = vsel %vm5294, %v5580, 0
        %5593 = vmatpush.msra.mxu0 0.0
        %5594 = vmatpush.msra.mxu0 0.0
        %5595 = vmatpush.msra.mxu0 0.0
        %5596 = vmatpush.msra.mxu0 0.0
        %5597 = vmatpush.msra.mxu0 0.0
        %5598 = vmatpush.msra.mxu0 0.0
        %5599 = vmatpush.msra.mxu0 0.0
        %5600 = vmatpush.msra.mxu0 0.0
        %5601 = vmatpush.msra.mxu0 %v5589
        %5602 = vmatpush.msra.mxu0 %v5588
        %5603 = vmatpush.msra.mxu0 %v5587
        %5604 = vmatpush.msra.mxu0 %v5586
        %5605 = vmatpush.msra.mxu0 %v5585
        %5606 = vmatpush.msra.mxu0 %v5584
        %5607 = vmatpush.msra.mxu0 %v5583
        %5608 = vmatpush.msra.mxu0 %v5582
        %5609 = vmatmul.f32.gmra.mxu0 %v5591
        %v5610 = vpop.f32.mrf.mxu0
        %v5611 = vadd.f32 0.0, %v5610
        %5612 = vdwg.mxu0
        %v5613 = vadd.f32 %v5579, %v5611
        %v5614 = vld [vmem:[#allocation4 + $0x3] sm:$0x1]
        %s5615 = scalar_lea.vmem %s10, 192
        %v5616 = vld [vmem:[%s5615] sm:$0xff]
        %v5617 = vld [vmem:[%s5615 + $0x8] sm:$0xff]
        %v5618 = vld [vmem:[%s5615 + $0x10] sm:$0xff]
        %v5619 = vld [vmem:[%s5615 + $0x18] sm:$0xff]
        %v5620 = vld [vmem:[%s5615 + $0x20] sm:$0xff]
        %v5621 = vld [vmem:[%s5615 + $0x28] sm:$0xff]
        %v5622 = vld [vmem:[%s5615 + $0x30] sm:$0xff]
        %v5623 = vld [vmem:[%s5615 + $0x38] sm:$0xff]
        %v5625 = vsel %vm5294, %v5614, 0
        %5627 = vmatpush.msra.mxu0 0.0
        %5628 = vmatpush.msra.mxu0 0.0
        %5629 = vmatpush.msra.mxu0 0.0
        %5630 = vmatpush.msra.mxu0 0.0
        %5631 = vmatpush.msra.mxu0 0.0
        %5632 = vmatpush.msra.mxu0 0.0
        %5633 = vmatpush.msra.mxu0 0.0
        %5634 = vmatpush.msra.mxu0 0.0
        %5635 = vmatpush.msra.mxu0 %v5623
        %5636 = vmatpush.msra.mxu0 %v5622
        %5637 = vmatpush.msra.mxu0 %v5621
        %5638 = vmatpush.msra.mxu0 %v5620
        %5639 = vmatpush.msra.mxu0 %v5619
        %5640 = vmatpush.msra.mxu0 %v5618
        %5641 = vmatpush.msra.mxu0 %v5617
        %5642 = vmatpush.msra.mxu0 %v5616
        %5643 = vmatmul.f32.gmra.mxu0 %v5625
        %v5644 = vpop.f32.mrf.mxu0
        %v5645 = vadd.f32 0.0, %v5644
        %5646 = vdwg.mxu0
        %v5647 = vadd.f32 %v5613, %v5645
        %v5648 = vld [vmem:[#allocation4 + $0x4] sm:$0x1]
        %s5649 = scalar_lea.vmem %s10, 256
        %v5650 = vld [vmem:[%s5649] sm:$0xff]
        %v5651 = vld [vmem:[%s5649 + $0x8] sm:$0xff]
        %v5652 = vld [vmem:[%s5649 + $0x10] sm:$0xff]
        %v5653 = vld [vmem:[%s5649 + $0x18] sm:$0xff]
        %v5654 = vld [vmem:[%s5649 + $0x20] sm:$0xff]
        %v5655 = vld [vmem:[%s5649 + $0x28] sm:$0xff]
        %v5656 = vld [vmem:[%s5649 + $0x30] sm:$0xff]
        %v5657 = vld [vmem:[%s5649 + $0x38] sm:$0xff]
        %v5659 = vsel %vm5294, %v5648, 0
        %5661 = vmatpush.msra.mxu0 0.0
        %5662 = vmatpush.msra.mxu0 0.0
        %5663 = vmatpush.msra.mxu0 0.0
        %5664 = vmatpush.msra.mxu0 0.0
        %5665 = vmatpush.msra.mxu0 0.0
        %5666 = vmatpush.msra.mxu0 0.0
        %5667 = vmatpush.msra.mxu0 0.0
        %5668 = vmatpush.msra.mxu0 0.0
        %5669 = vmatpush.msra.mxu0 %v5657
        %5670 = vmatpush.msra.mxu0 %v5656
        %5671 = vmatpush.msra.mxu0 %v5655
        %5672 = vmatpush.msra.mxu0 %v5654
        %5673 = vmatpush.msra.mxu0 %v5653
        %5674 = vmatpush.msra.mxu0 %v5652
        %5675 = vmatpush.msra.mxu0 %v5651
        %5676 = vmatpush.msra.mxu0 %v5650
        %5677 = vmatmul.f32.gmra.mxu0 %v5659
        %v5678 = vpop.f32.mrf.mxu0
        %v5679 = vadd.f32 0.0, %v5678
        %5680 = vdwg.mxu0
        %v5681 = vadd.f32 %v5647, %v5679
        %v5682 = vld [vmem:[#allocation4 + $0x5] sm:$0x1]
        %s5683 = scalar_lea.vmem %s10, 320
        %v5684 = vld [vmem:[%s5683] sm:$0xff]
        %v5685 = vld [vmem:[%s5683 + $0x8] sm:$0xff]
        %v5686 = vld [vmem:[%s5683 + $0x10] sm:$0xff]
        %v5687 = vld [vmem:[%s5683 + $0x18] sm:$0xff]
        %v5688 = vld [vmem:[%s5683 + $0x20] sm:$0xff]
        %v5689 = vld [vmem:[%s5683 + $0x28] sm:$0xff]
        %v5690 = vld [vmem:[%s5683 + $0x30] sm:$0xff]
        %v5691 = vld [vmem:[%s5683 + $0x38] sm:$0xff]
        %v5693 = vsel %vm5294, %v5682, 0
        %5695 = vmatpush.msra.mxu0 0.0
        %5696 = vmatpush.msra.mxu0 0.0
        %5697 = vmatpush.msra.mxu0 0.0
        %5698 = vmatpush.msra.mxu0 0.0
        %5699 = vmatpush.msra.mxu0 0.0
        %5700 = vmatpush.msra.mxu0 0.0
        %5701 = vmatpush.msra.mxu0 0.0
        %5702 = vmatpush.msra.mxu0 0.0
        %5703 = vmatpush.msra.mxu0 %v5691
        %5704 = vmatpush.msra.mxu0 %v5690
        %5705 = vmatpush.msra.mxu0 %v5689
        %5706 = vmatpush.msra.mxu0 %v5688
        %5707 = vmatpush.msra.mxu0 %v5687
        %5708 = vmatpush.msra.mxu0 %v5686
        %5709 = vmatpush.msra.mxu0 %v5685
        %5710 = vmatpush.msra.mxu0 %v5684
        %5711 = vmatmul.f32.gmra.mxu0 %v5693
        %v5712 = vpop.f32.mrf.mxu0
        %v5713 = vadd.f32 0.0, %v5712
        %5714 = vdwg.mxu0
        %v5715 = vadd.f32 %v5681, %v5713
        %v5716 = vld [vmem:[#allocation4 + $0x6] sm:$0x1]
        %s5717 = scalar_lea.vmem %s10, 384
        %v5718 = vld [vmem:[%s5717] sm:$0xff]
        %v5719 = vld [vmem:[%s5717 + $0x8] sm:$0xff]
        %v5720 = vld [vmem:[%s5717 + $0x10] sm:$0xff]
        %v5721 = vld [vmem:[%s5717 + $0x18] sm:$0xff]
        %v5722 = vld [vmem:[%s5717 + $0x20] sm:$0xff]
        %v5723 = vld [vmem:[%s5717 + $0x28] sm:$0xff]
        %v5724 = vld [vmem:[%s5717 + $0x30] sm:$0xff]
        %v5725 = vld [vmem:[%s5717 + $0x38] sm:$0xff]
        %v5727 = vsel %vm5294, %v5716, 0
        %5729 = vmatpush.msra.mxu0 0.0
        %5730 = vmatpush.msra.mxu0 0.0
        %5731 = vmatpush.msra.mxu0 0.0
        %5732 = vmatpush.msra.mxu0 0.0
        %5733 = vmatpush.msra.mxu0 0.0
        %5734 = vmatpush.msra.mxu0 0.0
        %5735 = vmatpush.msra.mxu0 0.0
        %5736 = vmatpush.msra.mxu0 0.0
        %5737 = vmatpush.msra.mxu0 %v5725
        %5738 = vmatpush.msra.mxu0 %v5724
        %5739 = vmatpush.msra.mxu0 %v5723
        %5740 = vmatpush.msra.mxu0 %v5722
        %5741 = vmatpush.msra.mxu0 %v5721
        %5742 = vmatpush.msra.mxu0 %v5720
        %5743 = vmatpush.msra.mxu0 %v5719
        %5744 = vmatpush.msra.mxu0 %v5718
        %5745 = vmatmul.f32.gmra.mxu0 %v5727
        %v5746 = vpop.f32.mrf.mxu0
        %v5747 = vadd.f32 0.0, %v5746
        %5748 = vdwg.mxu0
        %v5749 = vadd.f32 %v5715, %v5747
        %v5750 = vld [vmem:[#allocation4 + $0x7] sm:$0x1]
        %s5751 = scalar_lea.vmem %s10, 448
        %v5752 = vld [vmem:[%s5751] sm:$0xff]
        %v5753 = vld [vmem:[%s5751 + $0x8] sm:$0xff]
        %v5754 = vld [vmem:[%s5751 + $0x10] sm:$0xff]
        %v5755 = vld [vmem:[%s5751 + $0x18] sm:$0xff]
        %v5756 = vld [vmem:[%s5751 + $0x20] sm:$0xff]
        %v5757 = vld [vmem:[%s5751 + $0x28] sm:$0xff]
        %v5758 = vld [vmem:[%s5751 + $0x30] sm:$0xff]
        %v5759 = vld [vmem:[%s5751 + $0x38] sm:$0xff]
        %v5761 = vsel %vm5294, %v5750, 0
        %5763 = vmatpush.msra.mxu0 0.0
        %5764 = vmatpush.msra.mxu0 0.0
        %5765 = vmatpush.msra.mxu0 0.0
        %5766 = vmatpush.msra.mxu0 0.0
        %5767 = vmatpush.msra.mxu0 0.0
        %5768 = vmatpush.msra.mxu0 0.0
        %5769 = vmatpush.msra.mxu0 0.0
        %5770 = vmatpush.msra.mxu0 0.0
        %5771 = vmatpush.msra.mxu0 %v5759
        %5772 = vmatpush.msra.mxu0 %v5758
        %5773 = vmatpush.msra.mxu0 %v5757
        %5774 = vmatpush.msra.mxu0 %v5756
        %5775 = vmatpush.msra.mxu0 %v5755
        %5776 = vmatpush.msra.mxu0 %v5754
        %5777 = vmatpush.msra.mxu0 %v5753
        %5778 = vmatpush.msra.mxu0 %v5752
        %5779 = vmatmul.f32.gmra.mxu0 %v5761
        %v5780 = vpop.f32.mrf.mxu0
        %v5781 = vadd.f32 0.0, %v5780
        %5782 = vdwg.mxu0
        %v5783 = vadd.f32 %v5749, %v5781
        %v5784 = vld [vmem:[#allocation4 + $0x8] sm:$0x1]
        %s5785 = scalar_lea.vmem %s10, 512
        %v5786 = vld [vmem:[%s5785] sm:$0xff]
        %v5787 = vld [vmem:[%s5785 + $0x8] sm:$0xff]
        %v5788 = vld [vmem:[%s5785 + $0x10] sm:$0xff]
        %v5789 = vld [vmem:[%s5785 + $0x18] sm:$0xff]
        %v5790 = vld [vmem:[%s5785 + $0x20] sm:$0xff]
        %v5791 = vld [vmem:[%s5785 + $0x28] sm:$0xff]
        %v5792 = vld [vmem:[%s5785 + $0x30] sm:$0xff]
        %v5793 = vld [vmem:[%s5785 + $0x38] sm:$0xff]
        %v5795 = vsel %vm5294, %v5784, 0
        %5797 = vmatpush.msra.mxu0 0.0
        %5798 = vmatpush.msra.mxu0 0.0
        %5799 = vmatpush.msra.mxu0 0.0
        %5800 = vmatpush.msra.mxu0 0.0
        %5801 = vmatpush.msra.mxu0 0.0
        %5802 = vmatpush.msra.mxu0 0.0
        %5803 = vmatpush.msra.mxu0 0.0
        %5804 = vmatpush.msra.mxu0 0.0
        %5805 = vmatpush.msra.mxu0 %v5793
        %5806 = vmatpush.msra.mxu0 %v5792
        %5807 = vmatpush.msra.mxu0 %v5791
        %5808 = vmatpush.msra.mxu0 %v5790
        %5809 = vmatpush.msra.mxu0 %v5789
        %5810 = vmatpush.msra.mxu0 %v5788
        %5811 = vmatpush.msra.mxu0 %v5787
        %5812 = vmatpush.msra.mxu0 %v5786
        %5813 = vmatmul.f32.gmra.mxu0 %v5795
        %v5814 = vpop.f32.mrf.mxu0
        %v5815 = vadd.f32 0.0, %v5814
        %5816 = vdwg.mxu0
        %v5817 = vadd.f32 %v5783, %v5815
        %v5818 = vld [vmem:[#allocation4 + $0x9] sm:$0x1]
        %s5819 = scalar_lea.vmem %s10, 576
        %v5820 = vld [vmem:[%s5819] sm:$0xff]
        %v5821 = vld [vmem:[%s5819 + $0x8] sm:$0xff]
        %v5822 = vld [vmem:[%s5819 + $0x10] sm:$0xff]
        %v5823 = vld [vmem:[%s5819 + $0x18] sm:$0xff]
        %v5824 = vld [vmem:[%s5819 + $0x20] sm:$0xff]
        %v5825 = vld [vmem:[%s5819 + $0x28] sm:$0xff]
        %v5826 = vld [vmem:[%s5819 + $0x30] sm:$0xff]
        %v5827 = vld [vmem:[%s5819 + $0x38] sm:$0xff]
        %v5829 = vsel %vm5294, %v5818, 0
        %5831 = vmatpush.msra.mxu0 0.0
        %5832 = vmatpush.msra.mxu0 0.0
        %5833 = vmatpush.msra.mxu0 0.0
        %5834 = vmatpush.msra.mxu0 0.0
        %5835 = vmatpush.msra.mxu0 0.0
        %5836 = vmatpush.msra.mxu0 0.0
        %5837 = vmatpush.msra.mxu0 0.0
        %5838 = vmatpush.msra.mxu0 0.0
        %5839 = vmatpush.msra.mxu0 %v5827
        %5840 = vmatpush.msra.mxu0 %v5826
        %5841 = vmatpush.msra.mxu0 %v5825
        %5842 = vmatpush.msra.mxu0 %v5824
        %5843 = vmatpush.msra.mxu0 %v5823
        %5844 = vmatpush.msra.mxu0 %v5822
        %5845 = vmatpush.msra.mxu0 %v5821
        %5846 = vmatpush.msra.mxu0 %v5820
        %5847 = vmatmul.f32.gmra.mxu0 %v5829
        %v5848 = vpop.f32.mrf.mxu0
        %v5849 = vadd.f32 0.0, %v5848
        %5850 = vdwg.mxu0
        %v5851 = vadd.f32 %v5817, %v5849
        %v5852 = vld [vmem:[#allocation4 + $0xa] sm:$0x1]
        %s5853 = scalar_lea.vmem %s10, 640
        %v5854 = vld [vmem:[%s5853] sm:$0xff]
        %v5855 = vld [vmem:[%s5853 + $0x8] sm:$0xff]
        %v5856 = vld [vmem:[%s5853 + $0x10] sm:$0xff]
        %v5857 = vld [vmem:[%s5853 + $0x18] sm:$0xff]
        %v5858 = vld [vmem:[%s5853 + $0x20] sm:$0xff]
        %v5859 = vld [vmem:[%s5853 + $0x28] sm:$0xff]
        %v5860 = vld [vmem:[%s5853 + $0x30] sm:$0xff]
        %v5861 = vld [vmem:[%s5853 + $0x38] sm:$0xff]
        %v5863 = vsel %vm5294, %v5852, 0
        %5865 = vmatpush.msra.mxu0 0.0
        %5866 = vmatpush.msra.mxu0 0.0
        %5867 = vmatpush.msra.mxu0 0.0
        %5868 = vmatpush.msra.mxu0 0.0
        %5869 = vmatpush.msra.mxu0 0.0
        %5870 = vmatpush.msra.mxu0 0.0
        %5871 = vmatpush.msra.mxu0 0.0
        %5872 = vmatpush.msra.mxu0 0.0
        %5873 = vmatpush.msra.mxu0 %v5861
        %5874 = vmatpush.msra.mxu0 %v5860
        %5875 = vmatpush.msra.mxu0 %v5859
        %5876 = vmatpush.msra.mxu0 %v5858
        %5877 = vmatpush.msra.mxu0 %v5857
        %5878 = vmatpush.msra.mxu0 %v5856
        %5879 = vmatpush.msra.mxu0 %v5855
        %5880 = vmatpush.msra.mxu0 %v5854
        %5881 = vmatmul.f32.gmra.mxu0 %v5863
        %v5882 = vpop.f32.mrf.mxu0
        %v5883 = vadd.f32 0.0, %v5882
        %5884 = vdwg.mxu0
        %v5885 = vadd.f32 %v5851, %v5883
        %v5886 = vld [vmem:[#allocation4 + $0xb] sm:$0x1]
        %s5887 = scalar_lea.vmem %s10, 704
        %v5888 = vld [vmem:[%s5887] sm:$0xff]
        %v5889 = vld [vmem:[%s5887 + $0x8] sm:$0xff]
        %v5890 = vld [vmem:[%s5887 + $0x10] sm:$0xff]
        %v5891 = vld [vmem:[%s5887 + $0x18] sm:$0xff]
        %v5892 = vld [vmem:[%s5887 + $0x20] sm:$0xff]
        %v5893 = vld [vmem:[%s5887 + $0x28] sm:$0xff]
        %v5894 = vld [vmem:[%s5887 + $0x30] sm:$0xff]
        %v5895 = vld [vmem:[%s5887 + $0x38] sm:$0xff]
        %v5897 = vsel %vm5294, %v5886, 0
        %5899 = vmatpush.msra.mxu0 0.0
        %5900 = vmatpush.msra.mxu0 0.0
        %5901 = vmatpush.msra.mxu0 0.0
        %5902 = vmatpush.msra.mxu0 0.0
        %5903 = vmatpush.msra.mxu0 0.0
        %5904 = vmatpush.msra.mxu0 0.0
        %5905 = vmatpush.msra.mxu0 0.0
        %5906 = vmatpush.msra.mxu0 0.0
        %5907 = vmatpush.msra.mxu0 %v5895
        %5908 = vmatpush.msra.mxu0 %v5894
        %5909 = vmatpush.msra.mxu0 %v5893
        %5910 = vmatpush.msra.mxu0 %v5892
        %5911 = vmatpush.msra.mxu0 %v5891
        %5912 = vmatpush.msra.mxu0 %v5890
        %5913 = vmatpush.msra.mxu0 %v5889
        %5914 = vmatpush.msra.mxu0 %v5888
        %5915 = vmatmul.f32.gmra.mxu0 %v5897
        %v5916 = vpop.f32.mrf.mxu0
        %v5917 = vadd.f32 0.0, %v5916
        %5918 = vdwg.mxu0
        %v5919 = vadd.f32 %v5885, %v5917
        %v5920 = vld [vmem:[#allocation4 + $0xc] sm:$0x1]
        %s5921 = scalar_lea.vmem %s10, 768
        %v5922 = vld [vmem:[%s5921] sm:$0xff]
        %v5923 = vld [vmem:[%s5921 + $0x8] sm:$0xff]
        %v5924 = vld [vmem:[%s5921 + $0x10] sm:$0xff]
        %v5925 = vld [vmem:[%s5921 + $0x18] sm:$0xff]
        %v5926 = vld [vmem:[%s5921 + $0x20] sm:$0xff]
        %v5927 = vld [vmem:[%s5921 + $0x28] sm:$0xff]
        %v5928 = vld [vmem:[%s5921 + $0x30] sm:$0xff]
        %v5929 = vld [vmem:[%s5921 + $0x38] sm:$0xff]
        %v5931 = vsel %vm5294, %v5920, 0
        %5933 = vmatpush.msra.mxu0 0.0
        %5934 = vmatpush.msra.mxu0 0.0
        %5935 = vmatpush.msra.mxu0 0.0
        %5936 = vmatpush.msra.mxu0 0.0
        %5937 = vmatpush.msra.mxu0 0.0
        %5938 = vmatpush.msra.mxu0 0.0
        %5939 = vmatpush.msra.mxu0 0.0
        %5940 = vmatpush.msra.mxu0 0.0
        %5941 = vmatpush.msra.mxu0 %v5929
        %5942 = vmatpush.msra.mxu0 %v5928
        %5943 = vmatpush.msra.mxu0 %v5927
        %5944 = vmatpush.msra.mxu0 %v5926
        %5945 = vmatpush.msra.mxu0 %v5925
        %5946 = vmatpush.msra.mxu0 %v5924
        %5947 = vmatpush.msra.mxu0 %v5923
        %5948 = vmatpush.msra.mxu0 %v5922
        %5949 = vmatmul.f32.gmra.mxu0 %v5931
        %v5950 = vpop.f32.mrf.mxu0
        %v5951 = vadd.f32 0.0, %v5950
        %5952 = vdwg.mxu0
        %v5953 = vadd.f32 %v5919, %v5951
        %v5954 = vld [vmem:[#allocation4 + $0xd] sm:$0x1]
        %s5955 = scalar_lea.vmem %s10, 832
        %v5956 = vld [vmem:[%s5955] sm:$0xff]
        %v5957 = vld [vmem:[%s5955 + $0x8] sm:$0xff]
        %v5958 = vld [vmem:[%s5955 + $0x10] sm:$0xff]
        %v5959 = vld [vmem:[%s5955 + $0x18] sm:$0xff]
        %v5960 = vld [vmem:[%s5955 + $0x20] sm:$0xff]
        %v5961 = vld [vmem:[%s5955 + $0x28] sm:$0xff]
        %v5962 = vld [vmem:[%s5955 + $0x30] sm:$0xff]
        %v5963 = vld [vmem:[%s5955 + $0x38] sm:$0xff]
        %v5965 = vsel %vm5294, %v5954, 0
        %5967 = vmatpush.msra.mxu0 0.0
        %5968 = vmatpush.msra.mxu0 0.0
        %5969 = vmatpush.msra.mxu0 0.0
        %5970 = vmatpush.msra.mxu0 0.0
        %5971 = vmatpush.msra.mxu0 0.0
        %5972 = vmatpush.msra.mxu0 0.0
        %5973 = vmatpush.msra.mxu0 0.0
        %5974 = vmatpush.msra.mxu0 0.0
        %5975 = vmatpush.msra.mxu0 %v5963
        %5976 = vmatpush.msra.mxu0 %v5962
        %5977 = vmatpush.msra.mxu0 %v5961
        %5978 = vmatpush.msra.mxu0 %v5960
        %5979 = vmatpush.msra.mxu0 %v5959
        %5980 = vmatpush.msra.mxu0 %v5958
        %5981 = vmatpush.msra.mxu0 %v5957
        %5982 = vmatpush.msra.mxu0 %v5956
        %5983 = vmatmul.f32.gmra.mxu0 %v5965
        %v5984 = vpop.f32.mrf.mxu0
        %v5985 = vadd.f32 0.0, %v5984
        %5986 = vdwg.mxu0
        %v5987 = vadd.f32 %v5953, %v5985
        %v5988 = vld [vmem:[#allocation4 + $0xe] sm:$0x1]
        %s5989 = scalar_lea.vmem %s10, 896
        %v5990 = vld [vmem:[%s5989] sm:$0xff]
        %v5991 = vld [vmem:[%s5989 + $0x8] sm:$0xff]
        %v5992 = vld [vmem:[%s5989 + $0x10] sm:$0xff]
        %v5993 = vld [vmem:[%s5989 + $0x18] sm:$0xff]
        %v5994 = vld [vmem:[%s5989 + $0x20] sm:$0xff]
        %v5995 = vld [vmem:[%s5989 + $0x28] sm:$0xff]
        %v5996 = vld [vmem:[%s5989 + $0x30] sm:$0xff]
        %v5997 = vld [vmem:[%s5989 + $0x38] sm:$0xff]
        %v5999 = vsel %vm5294, %v5988, 0
        %6001 = vmatpush.msra.mxu0 0.0
        %6002 = vmatpush.msra.mxu0 0.0
        %6003 = vmatpush.msra.mxu0 0.0
        %6004 = vmatpush.msra.mxu0 0.0
        %6005 = vmatpush.msra.mxu0 0.0
        %6006 = vmatpush.msra.mxu0 0.0
        %6007 = vmatpush.msra.mxu0 0.0
        %6008 = vmatpush.msra.mxu0 0.0
        %6009 = vmatpush.msra.mxu0 %v5997
        %6010 = vmatpush.msra.mxu0 %v5996
        %6011 = vmatpush.msra.mxu0 %v5995
        %6012 = vmatpush.msra.mxu0 %v5994
        %6013 = vmatpush.msra.mxu0 %v5993
        %6014 = vmatpush.msra.mxu0 %v5992
        %6015 = vmatpush.msra.mxu0 %v5991
        %6016 = vmatpush.msra.mxu0 %v5990
        %6017 = vmatmul.f32.gmra.mxu0 %v5999
        %v6018 = vpop.f32.mrf.mxu0
        %v6019 = vadd.f32 0.0, %v6018
        %6020 = vdwg.mxu0
        %v6021 = vadd.f32 %v5987, %v6019
        %v6022 = vld [vmem:[#allocation4 + $0xf] sm:$0x1]
        %s6023 = scalar_lea.vmem %s10, 960
        %v6024 = vld [vmem:[%s6023] sm:$0xff]
        %v6025 = vld [vmem:[%s6023 + $0x8] sm:$0xff]
        %v6026 = vld [vmem:[%s6023 + $0x10] sm:$0xff]
        %v6027 = vld [vmem:[%s6023 + $0x18] sm:$0xff]
        %v6028 = vld [vmem:[%s6023 + $0x20] sm:$0xff]
        %v6029 = vld [vmem:[%s6023 + $0x28] sm:$0xff]
        %v6030 = vld [vmem:[%s6023 + $0x30] sm:$0xff]
        %v6031 = vld [vmem:[%s6023 + $0x38] sm:$0xff]
        %v6033 = vsel %vm5294, %v6022, 0
        %6035 = vmatpush.msra.mxu0 0.0
        %6036 = vmatpush.msra.mxu0 0.0
        %6037 = vmatpush.msra.mxu0 0.0
        %6038 = vmatpush.msra.mxu0 0.0
        %6039 = vmatpush.msra.mxu0 0.0
        %6040 = vmatpush.msra.mxu0 0.0
        %6041 = vmatpush.msra.mxu0 0.0
        %6042 = vmatpush.msra.mxu0 0.0
        %6043 = vmatpush.msra.mxu0 %v6031
        %6044 = vmatpush.msra.mxu0 %v6030
        %6045 = vmatpush.msra.mxu0 %v6029
        %6046 = vmatpush.msra.mxu0 %v6028
        %6047 = vmatpush.msra.mxu0 %v6027
        %6048 = vmatpush.msra.mxu0 %v6026
        %6049 = vmatpush.msra.mxu0 %v6025
        %6050 = vmatpush.msra.mxu0 %v6024
        %6051 = vmatmul.f32.gmra.mxu0 %v6033
        %v6052 = vpop.f32.mrf.mxu0
        %v6053 = vadd.f32 0.0, %v6052
        %6054 = vdwg.mxu0
        %v6055 = vadd.f32 %v6021, %v6053
        %vm6056 = vcmask 516096
        %6057 = vst.msk [vmem:[%s405] sm:$0x1] %vm6056, %v6055
        %s6058 = sand.u32 %s291, 1
        %s6059 = scalar_lea.sflag [#allocation6], %s6058
        %s6060 = sand.u32 %s291, 1
        %s6061 = scalar_lea.vmem [#allocation5], %s6060
        // Predicated region
        $region69: #{image_model_forward.1} parent=67 // pred_check
          %p6062 = pneg %p301
        $region70: #{image_model_forward.1} parent=67 // pred_check_branch
          %6064 = sbr.rel (%p6062) target = $region72
        $region71: #{image_model_forward.1} parent=67 // pred_region
          %6066 = vsyncadd %s6059, 0
          %s6067 = scalar_lea.hbm %s12, %s26
          %s6069 = sshll.u32 %s6061, 4
          %s6070 = int_to_ptr.vmem [resolvable:$true] %s6069
          %s6071 = sshll.u32 %s6067, 4
          %s6072 = int_to_ptr.hbm [resolvable:$true] %s6071
          %6074 = dma.vmem_to_hbm [thread:$0]  %s6070, 16, %s6072, %s6059
        $region72: #{image_model_forward.1} parent=67 // pred_fallthru
          _
      $region68: #{image_model_forward.1} parent=5 // pred_fallthru
        _
      %p6075 = scmp.le.s32.totalorder 2, %s21
      // Predicated region
      $region73: #{image_model_forward.1} parent=5 // pred_check
        %p6076 = pneg %p6075
      $region74: #{image_model_forward.1} parent=5 // pred_check_branch
        %6078 = sbr.rel (%p6076) target = $region76
      $region75: #{image_model_forward.1} parent=5 // pred_region
        %s6079 = ssub.s32 %s21, 2
        // Predicated region
        $region77: #{image_model_forward.1} parent=75 // pred_check
          %p6080 = pneg %p307
        $region78: #{image_model_forward.1} parent=75 // pred_check_branch
          %6082 = sbr.rel (%p6080) target = $region80
        $region79: #{image_model_forward.1} parent=75 // pred_region
          %s6083 = sand.u32 %s292, 1
          %s6084 = scalar_lea.sflag [#allocation6], %s6083
          %s6085 = sand.u32 %s292, 1
          %s6086 = scalar_lea.vmem [#allocation5], %s6085
          %6088 = dma.done %s6084, 16
        $region80: #{image_model_forward.1} parent=75 // pred_fallthru
          _
      $region76: #{image_model_forward.1} parent=5 // pred_fallthru
        _
    $region6: #{image_model_forward.1} parent=1 // loop_footer
      %s25 = sadd.s32 1, %s21
    $region7: #{image_model_forward.1} parent=1 // loop_footer_branch
      %20 = sbr.rel target = $region3
    $region8: #{image_model_forward.1} parent=1 // loop_exit
      _
    %6089 = vsyncpa [#allocation6], 1
    %s6090 = scalar_lea.sflag [#allocation6], 1
    %6091 = vsyncpa %s6090, 1

</llo_original>
